<compile_context>
chip_gen: v5e
topology: v5e:2x2
jax: 0.10.0
libtpu: 0.0.40
codegen_flags: <defaults>
</compile_context>

<pallas_src>
import jax
import jax.numpy as jnp
from jax.experimental import pallas as pl
from jax.experimental.pallas import tpu as pltpu

C_FEAT = 2208   # densenet161 feature channels (fixed by the nn.Linear fan-in)
POOL_HW = 7     # 224x224 input -> 7x7 feature map
LANE = 128      # TPU lane width
SUBLANE = 8     # TPU sublane width


def _kres152_head_kernel(f_ref, w_ref, b_ref, o_ref):
    # f_ref: (tile_n, C, HW)  NCHW feature tile (f32 or bf16), spatial on lanes
    # w_ref: (C, O_pad)       VMEM-resident f32 weight
    # b_ref: (1, O_pad)       VMEM-resident f32 bias
    # o_ref: (tile_n, O_pad)
    inv_hw = 1.0 / float(f_ref.shape[-1])
    f = jnp.maximum(f_ref[...].astype(jnp.float32), 0.0)   # F.relu, f32
    pooled = jnp.sum(f, axis=-1) * inv_hw                  # avg_pool2d(7): lane reduce
    o_ref[...] = (
        jnp.dot(pooled, w_ref[...], preferred_element_type=jnp.float32)
        + b_ref[...]
    ).astype(o_ref.dtype)                                   # nn.Linear(2208, 5*K)


def kres152_head(features_nchw, weight, bias, *, tile_n=8):
    """features_nchw: (N, 2208, 7, 7) f32/bf16; weight: (2208, O) f32; bias: (O,) f32."""
    n, c, h, w = features_nchw.shape
    assert c == C_FEAT and h == POOL_HW and w == POOL_HW
    hw = h * w
    out_dim = weight.shape[1]
    o_pad = pl.cdiv(out_dim, LANE) * LANE

    # No wrapper relayout: NCHW -> (N, C, H*W) merges trailing dims (free reshape).
    f = features_nchw.reshape(n, c, hw)

    # Batch tiling: never wider than the batch (tiny batches => single block,
    # no pad pass); if tiling, keep the output sublane dim 8-aligned.
    tile_n = int(max(1, min(tile_n, n)))
    if tile_n < n and tile_n % SUBLANE != 0:
        tile_n = max(SUBLANE, (tile_n // SUBLANE) * SUBLANE)
    n_pad = pl.cdiv(n, tile_n) * tile_n
    if n_pad != n:
        # TODO(synk): for production batches pick tile_n | n so this extra
        # feature copy pass disappears entirely.
        f = jnp.pad(f, ((0, n_pad - n), (0, 0), (0, 0)))

    # Weight/bias stay f32; pad output channels to 128 lanes (unmasked stores,
    # clean MXU N).  Sliced back to out_dim below.
    w_p = jnp.pad(weight.astype(jnp.float32), ((0, 0), (0, o_pad - out_dim)))
    b_p = jnp.pad(bias.astype(jnp.float32), (0, o_pad - out_dim)).reshape(1, o_pad)

    grid = (n_pad // tile_n,)

    # VMEM budget: double-buffered feature tile (49 lanes pad to 128 in VMEM),
    # resident weight/bias, output block, plus margin for the f32 relu/upcast
    # intermediates.  Clamped so defaults stay safe on v7x (64 MiB physical);
    # on v7x keep tile_n <= 16 for f32 features (32 is fine with bf16).
    f_item = jnp.dtype(f.dtype).itemsize
    hw_lanes = pl.cdiv(hw, LANE) * LANE
    f_block = tile_n * c * hw_lanes * f_item
    f_block_f32 = tile_n * c * hw_lanes * 4
    wb_bytes = (c * o_pad + SUBLANE * o_pad) * 4
    out_block = max(tile_n, SUBLANE) * o_pad * 4
    vmem_need = 2 * (f_block + wb_bytes + out_block) + 3 * f_block_f32
    vmem_limit = int(min(max(vmem_need + (4 << 20), 32 << 20), 96 << 20))

    # Advisory cost estimate (now equal to the true head traffic — no wrapper passes).
    flops = 2 * n_pad * c * o_pad + 2 * n_pad * c * hw
    bytes_accessed = n_pad * c * hw * f_item + 4 * (c * o_pad + o_pad + n_pad * o_pad)

    out = pl.pallas_call(
        _kres152_head_kernel,
        out_shape=jax.ShapeDtypeStruct((n_pad, o_pad), jnp.float32),
        grid=grid,
        in_specs=[
            pl.BlockSpec((tile_n, c, hw), lambda i: (i, 0, 0)),   # feature tile
            pl.BlockSpec((c, o_pad), lambda i: (0, 0)),           # resident weight
            pl.BlockSpec((1, o_pad), lambda i: (0, 0)),           # resident bias
        ],
        out_specs=pl.BlockSpec((tile_n, o_pad), lambda i: (i, 0)),
        compiler_params=pltpu.CompilerParams(
            dimension_semantics=("parallel",),
            vmem_limit_bytes=vmem_limit,
        ),
        cost_estimate=pl.CostEstimate(flops=flops, transcendentals=0,
                                      bytes_accessed=bytes_accessed),
    )(f, w_p, b_p)

    return out[:n, :out_dim]


if __name__ == "__main__":
    num_keypoints = 16
    out_dim = 5 * num_keypoints          # 80

    key = jax.random.PRNGKey(0)
    kf, kw, kb = jax.random.split(key, 3)

    # TODO(synk): torchvision densenet161(pretrained=True).features is a pretrained
    # backbone and is not reimplemented; this synthetic feature map stands in for
    # its (N, 2208, 7, 7) output that kres152.forward feeds to the head.
    features_f32 = jax.random.normal(kf, (2, C_FEAT, POOL_HW, POOL_HW), dtype=jnp.float32)
    # Simulate a bf16-emitting backbone: the head reads bf16 features straight
    # from HBM (halving the dominant DMA) and upcasts to f32 inside the kernel.
    features = features_f32.astype(jnp.bfloat16)

    # nn.Linear(2208, 5*K) default init: U(-1/sqrt(fan_in), 1/sqrt(fan_in)).
    bound = float(1.0 / (C_FEAT ** 0.5))
    weight = jax.random.uniform(kw, (C_FEAT, out_dim), minval=-bound, maxval=bound,
                                dtype=jnp.float32)
    bias = jax.random.uniform(kb, (out_dim,), minval=-bound, maxval=bound,
                              dtype=jnp.float32)

    out = jax.block_until_ready(kres152_head(features, weight, bias))
    assert out.shape == (2, out_dim)

    # Tight check: f32 reference on the exact bf16 features the kernel read.
    f_seen = features.astype(jnp.float32).reshape(2, C_FEAT, -1)
    ref_seen = jnp.maximum(f_seen, 0.0).mean(axis=-1) @ weight + bias
    assert jnp.allclose(out, ref_seen, atol=1e-3, rtol=1e-3)

    # Loose check against the original all-f32 module math (bf16 input quantization).
    ref_f32 = jnp.maximum(features_f32, 0.0).mean(axis=(2, 3)) @ weight + bias
    assert jnp.allclose(out, ref_f32, atol=2e-2, rtol=2e-2)

    print("KERNEL_OK")
</pallas_src>

<mosaic_0001>
module attributes {stable_mosaic.version = 11 : i64} {
  func.func @_kres152_head_kernel(%arg0: i32, %arg1: memref<2x2208x49xbf16, #tpu.memory_space<vmem>>, %arg2: memref<2208x128xf32, #tpu.memory_space<vmem>>, %arg3: memref<1x128xf32, #tpu.memory_space<vmem>>, %arg4: memref<2x128xf32, #tpu.memory_space<vmem>>) attributes {dimension_semantics = [#tpu.dimension_semantics<parallel>], iteration_bounds = array<i64: 1>, scalar_prefetch = 0 : i64, scratch_operands = 0 : i64, tpu.core_type = #tpu.core_type<tc>, window_params = [{transform_indices = @transform_0, window_bounds = array<i64: 2, 2208, 49>}, {pipeline_mode = #tpu.pipeline_mode<synchronous>, transform_indices = @transform_1, window_bounds = array<i64: 2208, 128>}, {pipeline_mode = #tpu.pipeline_mode<synchronous>, transform_indices = @transform_2, window_bounds = array<i64: 1, 128>}, {transform_indices = @transform_3, window_bounds = array<i64: 2, 128>}]} {
    %c0 = arith.constant 0 : index
    %c0_0 = arith.constant 0 : index
    %c0_1 = arith.constant 0 : index
    %0 = vector.load %arg1[%c0, %c0_0, %c0_1] : memref<2x2208x49xbf16, #tpu.memory_space<vmem>>, vector<2x2208x49xbf16>
    %1 = arith.extf %0 : vector<2x2208x49xbf16> to vector<2x2208x49xf32>
    %cst = arith.constant 0.000000e+00 : f32
    %2 = vector.broadcast %cst : f32 to vector<2x2208x49xf32>
    %3 = arith.maximumf %1, %2 : vector<2x2208x49xf32>
    %cst_2 = arith.constant dense<0.000000e+00> : vector<2x2208xf32>
    %4 = vector.multi_reduction <add>, %3, %cst_2 [2] : vector<2x2208x49xf32> to vector<2x2208xf32>
    %cst_3 = arith.constant 0.0204081628 : f32
    %5 = vector.broadcast %cst_3 : f32 to vector<2x2208xf32>
    %6 = arith.mulf %4, %5 : vector<2x2208xf32>
    %c0_4 = arith.constant 0 : index
    %c0_5 = arith.constant 0 : index
    %7 = vector.load %arg2[%c0_4, %c0_5] : memref<2208x128xf32, #tpu.memory_space<vmem>>, vector<2208x128xf32>
    %cst_6 = arith.constant dense<0.000000e+00> : vector<2x128xf32>
    %8 = tpu.matmul %6, %7, %cst_6 {dimension_numbers = #tpu.dot_dimension_numbers<[1], [0], [0], [1], [0, 0, 1, 1], [], []>} : vector<2x2208xf32>, vector<2208x128xf32>, vector<2x128xf32> -> vector<2x128xf32>
    %c0_7 = arith.constant 0 : index
    %c0_8 = arith.constant 0 : index
    %9 = vector.load %arg3[%c0_7, %c0_8] : memref<1x128xf32, #tpu.memory_space<vmem>>, vector<1x128xf32>
    %10 = vector.broadcast %9 : vector<1x128xf32> to vector<2x128xf32>
    %11 = arith.addf %8, %10 : vector<2x128xf32>
    %c0_9 = arith.constant 0 : index
    %c0_10 = arith.constant 0 : index
    %12 = vector.load %arg4[%c0_9, %c0_10] : memref<2x128xf32, #tpu.memory_space<vmem>>, vector<2x128xf32>
    tpu.vector_store %arg4[%c0_9, %c0_10], %11 {strides = array<i32>} : memref<2x128xf32, #tpu.memory_space<vmem>>, vector<2x128xf32>,
    return
  }
  func.func @transform_0(%arg0: i32) -> (i32, i32, i32) {
    %c0_i32 = arith.constant 0 : i32
    %c0_i32_0 = arith.constant 0 : i32
    %c0_i32_1 = arith.constant 0 : i32
    return %arg0, %c0_i32, %c0_i32_0 : i32, i32, i32
  }
  func.func @transform_1(%arg0: i32) -> (i32, i32) {
    %c0_i32 = arith.constant 0 : i32
    %c0_i32_0 = arith.constant 0 : i32
    %c0_i32_1 = arith.constant 0 : i32
    return %c0_i32, %c0_i32_0 : i32, i32
  }
  func.func @transform_2(%arg0: i32) -> (i32, i32) {
    %c0_i32 = arith.constant 0 : i32
    %c0_i32_0 = arith.constant 0 : i32
    %c0_i32_1 = arith.constant 0 : i32
    return %c0_i32, %c0_i32_0 : i32, i32
  }
  func.func @transform_3(%arg0: i32) -> (i32, i32) {
    %c0_i32 = arith.constant 0 : i32
    %c0_i32_0 = arith.constant 0 : i32
    return %arg0, %c0_i32 : i32, i32
  }
}

</mosaic_0001>

<llo_original>
// kernel: tpu_custom_call.1
$region0: #{tpu_custom_call.1}
  #allocation0 [shape = 'u32[]', space=smem, size = 0x4, offset = 0x4, fixed_abs, tag = 'smem constant byte address 0x4 - core index']
  #allocation1 [shape = 'u32[72,128]{1,0:T(1,128)}', space=vmem, size = 0x9000, scoped, tag = 'internal scratch']
  %s0 = inlined_call_operand.vmem [shape: bf16[2,2208,49], index: 0, kind: input, shape index: {}]
  %s1 = inlined_call_operand.vmem [shape: f32[2208,128], index: 1, kind: input, shape index: {}]
  %s2 = inlined_call_operand.vmem [shape: f32[1,128], index: 2, kind: input, shape index: {}]
  %s3 = inlined_call_operand.hbm [shape: f32[2,128], index: 3, kind: output, shape index: {}]
  %s4 = sld [smem:[#allocation0]]
  $region22: #{tpu_custom_call.1} parent=0
    _
  %s6 = ssub.s32 1, %s4
  %s7 = scalar_select 0, %s6, %s4
  $region1: #{tpu_custom_call.1} parent=0
    #allocation2 [shape = 'u8[1024]{0}', space=vmem, size = 0x400, scoped, tag = 'output window, operand 0, single buffered']
    #allocation3 [shape = 's32[1]{0}', space=sflag, size = 0x4, scoped, tag = 'scoped memory for tpu_custom_call.1']
    %8 = vsyncpa [#allocation3], 0
    // Predicated region
    $region2: #{tpu_custom_call.1} parent=1 // pred_check
      _
    $region3: #{tpu_custom_call.1} parent=1 // pred_check_branch
      %10 = sbr.rel (0) target = $region5
    $region4: #{tpu_custom_call.1} parent=1 // pred_region
      _
    $region5: #{tpu_custom_call.1} parent=1 // pred_fallthru
      _
    // Predicated region
    $region6: #{tpu_custom_call.1} parent=1 // pred_check
      _
    $region7: #{tpu_custom_call.1} parent=1 // pred_check_branch
      %12 = sbr.rel (0) target = $region9
    $region8: #{tpu_custom_call.1} parent=1 // pred_region
      _
    $region9: #{tpu_custom_call.1} parent=1 // pred_fallthru
      _
    // Predicated region
    $region10: #{tpu_custom_call.1} parent=1 // pred_check
      _
    $region11: #{tpu_custom_call.1} parent=1 // pred_check_branch
      %14 = sbr.rel (0) target = $region13
    $region12: #{tpu_custom_call.1} parent=1 // pred_region
      _
    $region13: #{tpu_custom_call.1} parent=1 // pred_fallthru
      _
    %v15 = vld [vmem:[%s0] sm:$0xf]
    %v16 = vld [vmem:[%s0 + $0x4] sm:$0xf]
    %v17 = vld [vmem:[%s0 + $0x8] sm:$0xf]
    %v18 = vld [vmem:[%s0 + $0xc] sm:$0xf]
    %v19 = vld [vmem:[%s0 + $0x10] sm:$0xf]
    %v20 = vld [vmem:[%s0 + $0x14] sm:$0xf]
    %v21 = vld [vmem:[%s0 + $0x18] sm:$0xf]
    %v22 = vld [vmem:[%s0 + $0x1c] sm:$0xf]
    %v23 = vld [vmem:[%s0 + $0x20] sm:$0xf]
    %v24 = vld [vmem:[%s0 + $0x24] sm:$0xf]
    %v25 = vld [vmem:[%s0 + $0x28] sm:$0xf]
    %v26 = vld [vmem:[%s0 + $0x2c] sm:$0xf]
    %v27 = vld [vmem:[%s0 + $0x30] sm:$0xf]
    %v28 = vld [vmem:[%s0 + $0x34] sm:$0xf]
    %v29 = vld [vmem:[%s0 + $0x38] sm:$0xf]
    %v30 = vld [vmem:[%s0 + $0x3c] sm:$0xf]
    %v31 = vld [vmem:[%s0 + $0x40] sm:$0xf]
    %v32 = vld [vmem:[%s0 + $0x44] sm:$0xf]
    %v33 = vld [vmem:[%s0 + $0x48] sm:$0xf]
    %v34 = vld [vmem:[%s0 + $0x4c] sm:$0xf]
    %v35 = vld [vmem:[%s0 + $0x50] sm:$0xf]
    %v36 = vld [vmem:[%s0 + $0x54] sm:$0xf]
    %v37 = vld [vmem:[%s0 + $0x58] sm:$0xf]
    %v38 = vld [vmem:[%s0 + $0x5c] sm:$0xf]
    %v39 = vld [vmem:[%s0 + $0x60] sm:$0xf]
    %v40 = vld [vmem:[%s0 + $0x64] sm:$0xf]
    %v41 = vld [vmem:[%s0 + $0x68] sm:$0xf]
    %v42 = vld [vmem:[%s0 + $0x6c] sm:$0xf]
    %v43 = vld [vmem:[%s0 + $0x70] sm:$0xf]
    %v44 = vld [vmem:[%s0 + $0x74] sm:$0xf]
    %v45 = vld [vmem:[%s0 + $0x78] sm:$0xf]
    %v46 = vld [vmem:[%s0 + $0x7c] sm:$0xf]
    %v47 = vld [vmem:[%s0 + $0x80] sm:$0xf]
    %v48 = vld [vmem:[%s0 + $0x84] sm:$0xf]
    %v49 = vld [vmem:[%s0 + $0x88] sm:$0xf]
    %v50 = vld [vmem:[%s0 + $0x8c] sm:$0xf]
    %v51 = vld [vmem:[%s0 + $0x90] sm:$0xf]
    %v52 = vld [vmem:[%s0 + $0x94] sm:$0xf]
    %v53 = vld [vmem:[%s0 + $0x98] sm:$0xf]
    %v54 = vld [vmem:[%s0 + $0x9c] sm:$0xf]
    %v55 = vld [vmem:[%s0 + $0xa0] sm:$0xf]
    %v56 = vld [vmem:[%s0 + $0xa4] sm:$0xf]
    %v57 = vld [vmem:[%s0 + $0xa8] sm:$0xf]
    %v58 = vld [vmem:[%s0 + $0xac] sm:$0xf]
    %v59 = vld [vmem:[%s0 + $0xb0] sm:$0xf]
    %v60 = vld [vmem:[%s0 + $0xb4] sm:$0xf]
    %v61 = vld [vmem:[%s0 + $0xb8] sm:$0xf]
    %v62 = vld [vmem:[%s0 + $0xbc] sm:$0xf]
    %v63 = vld [vmem:[%s0 + $0xc0] sm:$0xf]
    %v64 = vld [vmem:[%s0 + $0xc4] sm:$0xf]
    %v65 = vld [vmem:[%s0 + $0xc8] sm:$0xf]
    %v66 = vld [vmem:[%s0 + $0xcc] sm:$0xf]
    %v67 = vld [vmem:[%s0 + $0xd0] sm:$0xf]
    %v68 = vld [vmem:[%s0 + $0xd4] sm:$0xf]
    %v69 = vld [vmem:[%s0 + $0xd8] sm:$0xf]
    %v70 = vld [vmem:[%s0 + $0xdc] sm:$0xf]
    %v71 = vld [vmem:[%s0 + $0xe0] sm:$0xf]
    %v72 = vld [vmem:[%s0 + $0xe4] sm:$0xf]
    %v73 = vld [vmem:[%s0 + $0xe8] sm:$0xf]
    %v74 = vld [vmem:[%s0 + $0xec] sm:$0xf]
    %v75 = vld [vmem:[%s0 + $0xf0] sm:$0xf]
    %v76 = vld [vmem:[%s0 + $0xf4] sm:$0xf]
    %v77 = vld [vmem:[%s0 + $0xf8] sm:$0xf]
    %v78 = vld [vmem:[%s0 + $0xfc] sm:$0xf]
    %v79 = vld [vmem:[%s0 + $0x100] sm:$0xf]
    %v80 = vld [vmem:[%s0 + $0x104] sm:$0xf]
    %v81 = vld [vmem:[%s0 + $0x108] sm:$0xf]
    %v82 = vld [vmem:[%s0 + $0x10c] sm:$0xf]
    %v83 = vld [vmem:[%s0 + $0x110] sm:$0xf]
    %v84 = vld [vmem:[%s0 + $0x114] sm:$0xf]
    %v85 = vld [vmem:[%s0 + $0x118] sm:$0xf]
    %v86 = vld [vmem:[%s0 + $0x11c] sm:$0xf]
    %v87 = vld [vmem:[%s0 + $0x120] sm:$0xf]
    %v88 = vld [vmem:[%s0 + $0x124] sm:$0xf]
    %v89 = vld [vmem:[%s0 + $0x128] sm:$0xf]
    %v90 = vld [vmem:[%s0 + $0x12c] sm:$0xf]
    %v91 = vld [vmem:[%s0 + $0x130] sm:$0xf]
    %v92 = vld [vmem:[%s0 + $0x134] sm:$0xf]
    %v93 = vld [vmem:[%s0 + $0x138] sm:$0xf]
    %v94 = vld [vmem:[%s0 + $0x13c] sm:$0xf]
    %v95 = vld [vmem:[%s0 + $0x140] sm:$0xf]
    %v96 = vld [vmem:[%s0 + $0x144] sm:$0xf]
    %v97 = vld [vmem:[%s0 + $0x148] sm:$0xf]
    %v98 = vld [vmem:[%s0 + $0x14c] sm:$0xf]
    %v99 = vld [vmem:[%s0 + $0x150] sm:$0xf]
    %v100 = vld [vmem:[%s0 + $0x154] sm:$0xf]
    %v101 = vld [vmem:[%s0 + $0x158] sm:$0xf]
    %v102 = vld [vmem:[%s0 + $0x15c] sm:$0xf]
    %v103 = vld [vmem:[%s0 + $0x160] sm:$0xf]
    %v104 = vld [vmem:[%s0 + $0x164] sm:$0xf]
    %v105 = vld [vmem:[%s0 + $0x168] sm:$0xf]
    %v106 = vld [vmem:[%s0 + $0x16c] sm:$0xf]
    %v107 = vld [vmem:[%s0 + $0x170] sm:$0xf]
    %v108 = vld [vmem:[%s0 + $0x174] sm:$0xf]
    %v109 = vld [vmem:[%s0 + $0x178] sm:$0xf]
    %v110 = vld [vmem:[%s0 + $0x17c] sm:$0xf]
    %v111 = vld [vmem:[%s0 + $0x180] sm:$0xf]
    %v112 = vld [vmem:[%s0 + $0x184] sm:$0xf]
    %v113 = vld [vmem:[%s0 + $0x188] sm:$0xf]
    %v114 = vld [vmem:[%s0 + $0x18c] sm:$0xf]
    %v115 = vld [vmem:[%s0 + $0x190] sm:$0xf]
    %v116 = vld [vmem:[%s0 + $0x194] sm:$0xf]
    %v117 = vld [vmem:[%s0 + $0x198] sm:$0xf]
    %v118 = vld [vmem:[%s0 + $0x19c] sm:$0xf]
    %v119 = vld [vmem:[%s0 + $0x1a0] sm:$0xf]
    %v120 = vld [vmem:[%s0 + $0x1a4] sm:$0xf]
    %v121 = vld [vmem:[%s0 + $0x1a8] sm:$0xf]
    %v122 = vld [vmem:[%s0 + $0x1ac] sm:$0xf]
    %v123 = vld [vmem:[%s0 + $0x1b0] sm:$0xf]
    %v124 = vld [vmem:[%s0 + $0x1b4] sm:$0xf]
    %v125 = vld [vmem:[%s0 + $0x1b8] sm:$0xf]
    %v126 = vld [vmem:[%s0 + $0x1bc] sm:$0xf]
    %v127 = vld [vmem:[%s0 + $0x1c0] sm:$0xf]
    %v128 = vld [vmem:[%s0 + $0x1c4] sm:$0xf]
    %v129 = vld [vmem:[%s0 + $0x1c8] sm:$0xf]
    %v130 = vld [vmem:[%s0 + $0x1cc] sm:$0xf]
    %v131 = vld [vmem:[%s0 + $0x1d0] sm:$0xf]
    %v132 = vld [vmem:[%s0 + $0x1d4] sm:$0xf]
    %v133 = vld [vmem:[%s0 + $0x1d8] sm:$0xf]
    %v134 = vld [vmem:[%s0 + $0x1dc] sm:$0xf]
    %v135 = vld [vmem:[%s0 + $0x1e0] sm:$0xf]
    %v136 = vld [vmem:[%s0 + $0x1e4] sm:$0xf]
    %v137 = vld [vmem:[%s0 + $0x1e8] sm:$0xf]
    %v138 = vld [vmem:[%s0 + $0x1ec] sm:$0xf]
    %v139 = vld [vmem:[%s0 + $0x1f0] sm:$0xf]
    %v140 = vld [vmem:[%s0 + $0x1f4] sm:$0xf]
    %v141 = vld [vmem:[%s0 + $0x1f8] sm:$0xf]
    %v142 = vld [vmem:[%s0 + $0x1fc] sm:$0xf]
    %v143 = vld [vmem:[%s0 + $0x200] sm:$0xf]
    %v144 = vld [vmem:[%s0 + $0x204] sm:$0xf]
    %v145 = vld [vmem:[%s0 + $0x208] sm:$0xf]
    %v146 = vld [vmem:[%s0 + $0x20c] sm:$0xf]
    %v147 = vld [vmem:[%s0 + $0x210] sm:$0xf]
    %v148 = vld [vmem:[%s0 + $0x214] sm:$0xf]
    %v149 = vld [vmem:[%s0 + $0x218] sm:$0xf]
    %v150 = vld [vmem:[%s0 + $0x21c] sm:$0xf]
    %v151 = vld [vmem:[%s0 + $0x220] sm:$0xf]
    %v152 = vld [vmem:[%s0 + $0x224] sm:$0xf]
    %v153 = vld [vmem:[%s0 + $0x228] sm:$0xf]
    %v154 = vld [vmem:[%s0 + $0x22c] sm:$0xf]
    %v155 = vld [vmem:[%s0 + $0x230] sm:$0xf]
    %v156 = vld [vmem:[%s0 + $0x234] sm:$0xf]
    %v157 = vld [vmem:[%s0 + $0x238] sm:$0xf]
    %v158 = vld [vmem:[%s0 + $0x23c] sm:$0xf]
    %v159 = vld [vmem:[%s0 + $0x240] sm:$0xf]
    %v160 = vld [vmem:[%s0 + $0x244] sm:$0xf]
    %v161 = vld [vmem:[%s0 + $0x248] sm:$0xf]
    %v162 = vld [vmem:[%s0 + $0x24c] sm:$0xf]
    %v163 = vld [vmem:[%s0 + $0x250] sm:$0xf]
    %v164 = vld [vmem:[%s0 + $0x254] sm:$0xf]
    %v165 = vld [vmem:[%s0 + $0x258] sm:$0xf]
    %v166 = vld [vmem:[%s0 + $0x25c] sm:$0xf]
    %v167 = vld [vmem:[%s0 + $0x260] sm:$0xf]
    %v168 = vld [vmem:[%s0 + $0x264] sm:$0xf]
    %v169 = vld [vmem:[%s0 + $0x268] sm:$0xf]
    %v170 = vld [vmem:[%s0 + $0x26c] sm:$0xf]
    %v171 = vld [vmem:[%s0 + $0x270] sm:$0xf]
    %v172 = vld [vmem:[%s0 + $0x274] sm:$0xf]
    %v173 = vld [vmem:[%s0 + $0x278] sm:$0xf]
    %v174 = vld [vmem:[%s0 + $0x27c] sm:$0xf]
    %v175 = vld [vmem:[%s0 + $0x280] sm:$0xf]
    %v176 = vld [vmem:[%s0 + $0x284] sm:$0xf]
    %v177 = vld [vmem:[%s0 + $0x288] sm:$0xf]
    %v178 = vld [vmem:[%s0 + $0x28c] sm:$0xf]
    %v179 = vld [vmem:[%s0 + $0x290] sm:$0xf]
    %v180 = vld [vmem:[%s0 + $0x294] sm:$0xf]
    %v181 = vld [vmem:[%s0 + $0x298] sm:$0xf]
    %v182 = vld [vmem:[%s0 + $0x29c] sm:$0xf]
    %v183 = vld [vmem:[%s0 + $0x2a0] sm:$0xf]
    %v184 = vld [vmem:[%s0 + $0x2a4] sm:$0xf]
    %v185 = vld [vmem:[%s0 + $0x2a8] sm:$0xf]
    %v186 = vld [vmem:[%s0 + $0x2ac] sm:$0xf]
    %v187 = vld [vmem:[%s0 + $0x2b0] sm:$0xf]
    %v188 = vld [vmem:[%s0 + $0x2b4] sm:$0xf]
    %v189 = vld [vmem:[%s0 + $0x2b8] sm:$0xf]
    %v190 = vld [vmem:[%s0 + $0x2bc] sm:$0xf]
    %v191 = vld [vmem:[%s0 + $0x2c0] sm:$0xf]
    %v192 = vld [vmem:[%s0 + $0x2c4] sm:$0xf]
    %v193 = vld [vmem:[%s0 + $0x2c8] sm:$0xf]
    %v194 = vld [vmem:[%s0 + $0x2cc] sm:$0xf]
    %v195 = vld [vmem:[%s0 + $0x2d0] sm:$0xf]
    %v196 = vld [vmem:[%s0 + $0x2d4] sm:$0xf]
    %v197 = vld [vmem:[%s0 + $0x2d8] sm:$0xf]
    %v198 = vld [vmem:[%s0 + $0x2dc] sm:$0xf]
    %v199 = vld [vmem:[%s0 + $0x2e0] sm:$0xf]
    %v200 = vld [vmem:[%s0 + $0x2e4] sm:$0xf]
    %v201 = vld [vmem:[%s0 + $0x2e8] sm:$0xf]
    %v202 = vld [vmem:[%s0 + $0x2ec] sm:$0xf]
    %v203 = vld [vmem:[%s0 + $0x2f0] sm:$0xf]
    %v204 = vld [vmem:[%s0 + $0x2f4] sm:$0xf]
    %v205 = vld [vmem:[%s0 + $0x2f8] sm:$0xf]
    %v206 = vld [vmem:[%s0 + $0x2fc] sm:$0xf]
    %v207 = vld [vmem:[%s0 + $0x300] sm:$0xf]
    %v208 = vld [vmem:[%s0 + $0x304] sm:$0xf]
    %v209 = vld [vmem:[%s0 + $0x308] sm:$0xf]
    %v210 = vld [vmem:[%s0 + $0x30c] sm:$0xf]
    %v211 = vld [vmem:[%s0 + $0x310] sm:$0xf]
    %v212 = vld [vmem:[%s0 + $0x314] sm:$0xf]
    %v213 = vld [vmem:[%s0 + $0x318] sm:$0xf]
    %v214 = vld [vmem:[%s0 + $0x31c] sm:$0xf]
    %v215 = vld [vmem:[%s0 + $0x320] sm:$0xf]
    %v216 = vld [vmem:[%s0 + $0x324] sm:$0xf]
    %v217 = vld [vmem:[%s0 + $0x328] sm:$0xf]
    %v218 = vld [vmem:[%s0 + $0x32c] sm:$0xf]
    %v219 = vld [vmem:[%s0 + $0x330] sm:$0xf]
    %v220 = vld [vmem:[%s0 + $0x334] sm:$0xf]
    %v221 = vld [vmem:[%s0 + $0x338] sm:$0xf]
    %v222 = vld [vmem:[%s0 + $0x33c] sm:$0xf]
    %v223 = vld [vmem:[%s0 + $0x340] sm:$0xf]
    %v224 = vld [vmem:[%s0 + $0x344] sm:$0xf]
    %v225 = vld [vmem:[%s0 + $0x348] sm:$0xf]
    %v226 = vld [vmem:[%s0 + $0x34c] sm:$0xf]
    %v227 = vld [vmem:[%s0 + $0x350] sm:$0xf]
    %v228 = vld [vmem:[%s0 + $0x354] sm:$0xf]
    %v229 = vld [vmem:[%s0 + $0x358] sm:$0xf]
    %v230 = vld [vmem:[%s0 + $0x35c] sm:$0xf]
    %v231 = vld [vmem:[%s0 + $0x360] sm:$0xf]
    %v232 = vld [vmem:[%s0 + $0x364] sm:$0xf]
    %v233 = vld [vmem:[%s0 + $0x368] sm:$0xf]
    %v234 = vld [vmem:[%s0 + $0x36c] sm:$0xf]
    %v235 = vld [vmem:[%s0 + $0x370] sm:$0xf]
    %v236 = vld [vmem:[%s0 + $0x374] sm:$0xf]
    %v237 = vld [vmem:[%s0 + $0x378] sm:$0xf]
    %v238 = vld [vmem:[%s0 + $0x37c] sm:$0xf]
    %v239 = vld [vmem:[%s0 + $0x380] sm:$0xf]
    %v240 = vld [vmem:[%s0 + $0x384] sm:$0xf]
    %v241 = vld [vmem:[%s0 + $0x388] sm:$0xf]
    %v242 = vld [vmem:[%s0 + $0x38c] sm:$0xf]
    %v243 = vld [vmem:[%s0 + $0x390] sm:$0xf]
    %v244 = vld [vmem:[%s0 + $0x394] sm:$0xf]
    %v245 = vld [vmem:[%s0 + $0x398] sm:$0xf]
    %v246 = vld [vmem:[%s0 + $0x39c] sm:$0xf]
    %v247 = vld [vmem:[%s0 + $0x3a0] sm:$0xf]
    %v248 = vld [vmem:[%s0 + $0x3a4] sm:$0xf]
    %v249 = vld [vmem:[%s0 + $0x3a8] sm:$0xf]
    %v250 = vld [vmem:[%s0 + $0x3ac] sm:$0xf]
    %v251 = vld [vmem:[%s0 + $0x3b0] sm:$0xf]
    %v252 = vld [vmem:[%s0 + $0x3b4] sm:$0xf]
    %v253 = vld [vmem:[%s0 + $0x3b8] sm:$0xf]
    %v254 = vld [vmem:[%s0 + $0x3bc] sm:$0xf]
    %v255 = vld [vmem:[%s0 + $0x3c0] sm:$0xf]
    %v256 = vld [vmem:[%s0 + $0x3c4] sm:$0xf]
    %v257 = vld [vmem:[%s0 + $0x3c8] sm:$0xf]
    %v258 = vld [vmem:[%s0 + $0x3cc] sm:$0xf]
    %v259 = vld [vmem:[%s0 + $0x3d0] sm:$0xf]
    %v260 = vld [vmem:[%s0 + $0x3d4] sm:$0xf]
    %v261 = vld [vmem:[%s0 + $0x3d8] sm:$0xf]
    %v262 = vld [vmem:[%s0 + $0x3dc] sm:$0xf]
    %v263 = vld [vmem:[%s0 + $0x3e0] sm:$0xf]
    %v264 = vld [vmem:[%s0 + $0x3e4] sm:$0xf]
    %v265 = vld [vmem:[%s0 + $0x3e8] sm:$0xf]
    %v266 = vld [vmem:[%s0 + $0x3ec] sm:$0xf]
    %v267 = vld [vmem:[%s0 + $0x3f0] sm:$0xf]
    %v268 = vld [vmem:[%s0 + $0x3f4] sm:$0xf]
    %v269 = vld [vmem:[%s0 + $0x3f8] sm:$0xf]
    %v270 = vld [vmem:[%s0 + $0x3fc] sm:$0xf]
    %v271 = vld [vmem:[%s0 + $0x400] sm:$0xf]
    %v272 = vld [vmem:[%s0 + $0x404] sm:$0xf]
    %v273 = vld [vmem:[%s0 + $0x408] sm:$0xf]
    %v274 = vld [vmem:[%s0 + $0x40c] sm:$0xf]
    %v275 = vld [vmem:[%s0 + $0x410] sm:$0xf]
    %v276 = vld [vmem:[%s0 + $0x414] sm:$0xf]
    %v277 = vld [vmem:[%s0 + $0x418] sm:$0xf]
    %v278 = vld [vmem:[%s0 + $0x41c] sm:$0xf]
    %v279 = vld [vmem:[%s0 + $0x420] sm:$0xf]
    %v280 = vld [vmem:[%s0 + $0x424] sm:$0xf]
    %v281 = vld [vmem:[%s0 + $0x428] sm:$0xf]
    %v282 = vld [vmem:[%s0 + $0x42c] sm:$0xf]
    %v283 = vld [vmem:[%s0 + $0x430] sm:$0xf]
    %v284 = vld [vmem:[%s0 + $0x434] sm:$0xf]
    %v285 = vld [vmem:[%s0 + $0x438] sm:$0xf]
    %v286 = vld [vmem:[%s0 + $0x43c] sm:$0xf]
    %v287 = vld [vmem:[%s0 + $0x440] sm:$0xf]
    %v288 = vld [vmem:[%s0 + $0x444] sm:$0xf]
    %v289 = vld [vmem:[%s0 + $0x448] sm:$0xf]
    %v290 = vld [vmem:[%s0 + $0x44c] sm:$0xf]
    %v291 = vld [vmem:[%s0 + $0x450] sm:$0xf]
    %v292 = vld [vmem:[%s0 + $0x454] sm:$0xf]
    %v293 = vld [vmem:[%s0 + $0x458] sm:$0xf]
    %v294 = vld [vmem:[%s0 + $0x45c] sm:$0xf]
    %v295 = vld [vmem:[%s0 + $0x460] sm:$0xf]
    %v296 = vld [vmem:[%s0 + $0x464] sm:$0xf]
    %v297 = vld [vmem:[%s0 + $0x468] sm:$0xf]
    %v298 = vld [vmem:[%s0 + $0x46c] sm:$0xf]
    %v299 = vld [vmem:[%s0 + $0x470] sm:$0xf]
    %v300 = vld [vmem:[%s0 + $0x474] sm:$0xf]
    %v301 = vld [vmem:[%s0 + $0x478] sm:$0xf]
    %v302 = vld [vmem:[%s0 + $0x47c] sm:$0xf]
    %v303 = vld [vmem:[%s0 + $0x480] sm:$0xf]
    %v304 = vld [vmem:[%s0 + $0x484] sm:$0xf]
    %v305 = vld [vmem:[%s0 + $0x488] sm:$0xf]
    %v306 = vld [vmem:[%s0 + $0x48c] sm:$0xf]
    %v307 = vld [vmem:[%s0 + $0x490] sm:$0xf]
    %v308 = vld [vmem:[%s0 + $0x494] sm:$0xf]
    %v309 = vld [vmem:[%s0 + $0x498] sm:$0xf]
    %v310 = vld [vmem:[%s0 + $0x49c] sm:$0xf]
    %v311 = vld [vmem:[%s0 + $0x4a0] sm:$0xf]
    %v312 = vld [vmem:[%s0 + $0x4a4] sm:$0xf]
    %v313 = vld [vmem:[%s0 + $0x4a8] sm:$0xf]
    %v314 = vld [vmem:[%s0 + $0x4ac] sm:$0xf]
    %v315 = vld [vmem:[%s0 + $0x4b0] sm:$0xf]
    %v316 = vld [vmem:[%s0 + $0x4b4] sm:$0xf]
    %v317 = vld [vmem:[%s0 + $0x4b8] sm:$0xf]
    %v318 = vld [vmem:[%s0 + $0x4bc] sm:$0xf]
    %v319 = vld [vmem:[%s0 + $0x4c0] sm:$0xf]
    %v320 = vld [vmem:[%s0 + $0x4c4] sm:$0xf]
    %v321 = vld [vmem:[%s0 + $0x4c8] sm:$0xf]
    %v322 = vld [vmem:[%s0 + $0x4cc] sm:$0xf]
    %v323 = vld [vmem:[%s0 + $0x4d0] sm:$0xf]
    %v324 = vld [vmem:[%s0 + $0x4d4] sm:$0xf]
    %v325 = vld [vmem:[%s0 + $0x4d8] sm:$0xf]
    %v326 = vld [vmem:[%s0 + $0x4dc] sm:$0xf]
    %v327 = vld [vmem:[%s0 + $0x4e0] sm:$0xf]
    %v328 = vld [vmem:[%s0 + $0x4e4] sm:$0xf]
    %v329 = vld [vmem:[%s0 + $0x4e8] sm:$0xf]
    %v330 = vld [vmem:[%s0 + $0x4ec] sm:$0xf]
    %v331 = vld [vmem:[%s0 + $0x4f0] sm:$0xf]
    %v332 = vld [vmem:[%s0 + $0x4f4] sm:$0xf]
    %v333 = vld [vmem:[%s0 + $0x4f8] sm:$0xf]
    %v334 = vld [vmem:[%s0 + $0x4fc] sm:$0xf]
    %v335 = vld [vmem:[%s0 + $0x500] sm:$0xf]
    %v336 = vld [vmem:[%s0 + $0x504] sm:$0xf]
    %v337 = vld [vmem:[%s0 + $0x508] sm:$0xf]
    %v338 = vld [vmem:[%s0 + $0x50c] sm:$0xf]
    %v339 = vld [vmem:[%s0 + $0x510] sm:$0xf]
    %v340 = vld [vmem:[%s0 + $0x514] sm:$0xf]
    %v341 = vld [vmem:[%s0 + $0x518] sm:$0xf]
    %v342 = vld [vmem:[%s0 + $0x51c] sm:$0xf]
    %v343 = vld [vmem:[%s0 + $0x520] sm:$0xf]
    %v344 = vld [vmem:[%s0 + $0x524] sm:$0xf]
    %v345 = vld [vmem:[%s0 + $0x528] sm:$0xf]
    %v346 = vld [vmem:[%s0 + $0x52c] sm:$0xf]
    %v347 = vld [vmem:[%s0 + $0x530] sm:$0xf]
    %v348 = vld [vmem:[%s0 + $0x534] sm:$0xf]
    %v349 = vld [vmem:[%s0 + $0x538] sm:$0xf]
    %v350 = vld [vmem:[%s0 + $0x53c] sm:$0xf]
    %v351 = vld [vmem:[%s0 + $0x540] sm:$0xf]
    %v352 = vld [vmem:[%s0 + $0x544] sm:$0xf]
    %v353 = vld [vmem:[%s0 + $0x548] sm:$0xf]
    %v354 = vld [vmem:[%s0 + $0x54c] sm:$0xf]
    %v355 = vld [vmem:[%s0 + $0x550] sm:$0xf]
    %v356 = vld [vmem:[%s0 + $0x554] sm:$0xf]
    %v357 = vld [vmem:[%s0 + $0x558] sm:$0xf]
    %v358 = vld [vmem:[%s0 + $0x55c] sm:$0xf]
    %v359 = vld [vmem:[%s0 + $0x560] sm:$0xf]
    %v360 = vld [vmem:[%s0 + $0x564] sm:$0xf]
    %v361 = vld [vmem:[%s0 + $0x568] sm:$0xf]
    %v362 = vld [vmem:[%s0 + $0x56c] sm:$0xf]
    %v363 = vld [vmem:[%s0 + $0x570] sm:$0xf]
    %v364 = vld [vmem:[%s0 + $0x574] sm:$0xf]
    %v365 = vld [vmem:[%s0 + $0x578] sm:$0xf]
    %v366 = vld [vmem:[%s0 + $0x57c] sm:$0xf]
    %v367 = vld [vmem:[%s0 + $0x580] sm:$0xf]
    %v368 = vld [vmem:[%s0 + $0x584] sm:$0xf]
    %v369 = vld [vmem:[%s0 + $0x588] sm:$0xf]
    %v370 = vld [vmem:[%s0 + $0x58c] sm:$0xf]
    %v371 = vld [vmem:[%s0 + $0x590] sm:$0xf]
    %v372 = vld [vmem:[%s0 + $0x594] sm:$0xf]
    %v373 = vld [vmem:[%s0 + $0x598] sm:$0xf]
    %v374 = vld [vmem:[%s0 + $0x59c] sm:$0xf]
    %v375 = vld [vmem:[%s0 + $0x5a0] sm:$0xf]
    %v376 = vld [vmem:[%s0 + $0x5a4] sm:$0xf]
    %v377 = vld [vmem:[%s0 + $0x5a8] sm:$0xf]
    %v378 = vld [vmem:[%s0 + $0x5ac] sm:$0xf]
    %v379 = vld [vmem:[%s0 + $0x5b0] sm:$0xf]
    %v380 = vld [vmem:[%s0 + $0x5b4] sm:$0xf]
    %v381 = vld [vmem:[%s0 + $0x5b8] sm:$0xf]
    %v382 = vld [vmem:[%s0 + $0x5bc] sm:$0xf]
    %v383 = vld [vmem:[%s0 + $0x5c0] sm:$0xf]
    %v384 = vld [vmem:[%s0 + $0x5c4] sm:$0xf]
    %v385 = vld [vmem:[%s0 + $0x5c8] sm:$0xf]
    %v386 = vld [vmem:[%s0 + $0x5cc] sm:$0xf]
    %v387 = vld [vmem:[%s0 + $0x5d0] sm:$0xf]
    %v388 = vld [vmem:[%s0 + $0x5d4] sm:$0xf]
    %v389 = vld [vmem:[%s0 + $0x5d8] sm:$0xf]
    %v390 = vld [vmem:[%s0 + $0x5dc] sm:$0xf]
    %v391 = vld [vmem:[%s0 + $0x5e0] sm:$0xf]
    %v392 = vld [vmem:[%s0 + $0x5e4] sm:$0xf]
    %v393 = vld [vmem:[%s0 + $0x5e8] sm:$0xf]
    %v394 = vld [vmem:[%s0 + $0x5ec] sm:$0xf]
    %v395 = vld [vmem:[%s0 + $0x5f0] sm:$0xf]
    %v396 = vld [vmem:[%s0 + $0x5f4] sm:$0xf]
    %v397 = vld [vmem:[%s0 + $0x5f8] sm:$0xf]
    %v398 = vld [vmem:[%s0 + $0x5fc] sm:$0xf]
    %v399 = vld [vmem:[%s0 + $0x600] sm:$0xf]
    %v400 = vld [vmem:[%s0 + $0x604] sm:$0xf]
    %v401 = vld [vmem:[%s0 + $0x608] sm:$0xf]
    %v402 = vld [vmem:[%s0 + $0x60c] sm:$0xf]
    %v403 = vld [vmem:[%s0 + $0x610] sm:$0xf]
    %v404 = vld [vmem:[%s0 + $0x614] sm:$0xf]
    %v405 = vld [vmem:[%s0 + $0x618] sm:$0xf]
    %v406 = vld [vmem:[%s0 + $0x61c] sm:$0xf]
    %v407 = vld [vmem:[%s0 + $0x620] sm:$0xf]
    %v408 = vld [vmem:[%s0 + $0x624] sm:$0xf]
    %v409 = vld [vmem:[%s0 + $0x628] sm:$0xf]
    %v410 = vld [vmem:[%s0 + $0x62c] sm:$0xf]
    %v411 = vld [vmem:[%s0 + $0x630] sm:$0xf]
    %v412 = vld [vmem:[%s0 + $0x634] sm:$0xf]
    %v413 = vld [vmem:[%s0 + $0x638] sm:$0xf]
    %v414 = vld [vmem:[%s0 + $0x63c] sm:$0xf]
    %v415 = vld [vmem:[%s0 + $0x640] sm:$0xf]
    %v416 = vld [vmem:[%s0 + $0x644] sm:$0xf]
    %v417 = vld [vmem:[%s0 + $0x648] sm:$0xf]
    %v418 = vld [vmem:[%s0 + $0x64c] sm:$0xf]
    %v419 = vld [vmem:[%s0 + $0x650] sm:$0xf]
    %v420 = vld [vmem:[%s0 + $0x654] sm:$0xf]
    %v421 = vld [vmem:[%s0 + $0x658] sm:$0xf]
    %v422 = vld [vmem:[%s0 + $0x65c] sm:$0xf]
    %v423 = vld [vmem:[%s0 + $0x660] sm:$0xf]
    %v424 = vld [vmem:[%s0 + $0x664] sm:$0xf]
    %v425 = vld [vmem:[%s0 + $0x668] sm:$0xf]
    %v426 = vld [vmem:[%s0 + $0x66c] sm:$0xf]
    %v427 = vld [vmem:[%s0 + $0x670] sm:$0xf]
    %v428 = vld [vmem:[%s0 + $0x674] sm:$0xf]
    %v429 = vld [vmem:[%s0 + $0x678] sm:$0xf]
    %v430 = vld [vmem:[%s0 + $0x67c] sm:$0xf]
    %v431 = vld [vmem:[%s0 + $0x680] sm:$0xf]
    %v432 = vld [vmem:[%s0 + $0x684] sm:$0xf]
    %v433 = vld [vmem:[%s0 + $0x688] sm:$0xf]
    %v434 = vld [vmem:[%s0 + $0x68c] sm:$0xf]
    %v435 = vld [vmem:[%s0 + $0x690] sm:$0xf]
    %v436 = vld [vmem:[%s0 + $0x694] sm:$0xf]
    %v437 = vld [vmem:[%s0 + $0x698] sm:$0xf]
    %v438 = vld [vmem:[%s0 + $0x69c] sm:$0xf]
    %v439 = vld [vmem:[%s0 + $0x6a0] sm:$0xf]
    %v440 = vld [vmem:[%s0 + $0x6a4] sm:$0xf]
    %v441 = vld [vmem:[%s0 + $0x6a8] sm:$0xf]
    %v442 = vld [vmem:[%s0 + $0x6ac] sm:$0xf]
    %v443 = vld [vmem:[%s0 + $0x6b0] sm:$0xf]
    %v444 = vld [vmem:[%s0 + $0x6b4] sm:$0xf]
    %v445 = vld [vmem:[%s0 + $0x6b8] sm:$0xf]
    %v446 = vld [vmem:[%s0 + $0x6bc] sm:$0xf]
    %v447 = vld [vmem:[%s0 + $0x6c0] sm:$0xf]
    %v448 = vld [vmem:[%s0 + $0x6c4] sm:$0xf]
    %v449 = vld [vmem:[%s0 + $0x6c8] sm:$0xf]
    %v450 = vld [vmem:[%s0 + $0x6cc] sm:$0xf]
    %v451 = vld [vmem:[%s0 + $0x6d0] sm:$0xf]
    %v452 = vld [vmem:[%s0 + $0x6d4] sm:$0xf]
    %v453 = vld [vmem:[%s0 + $0x6d8] sm:$0xf]
    %v454 = vld [vmem:[%s0 + $0x6dc] sm:$0xf]
    %v455 = vld [vmem:[%s0 + $0x6e0] sm:$0xf]
    %v456 = vld [vmem:[%s0 + $0x6e4] sm:$0xf]
    %v457 = vld [vmem:[%s0 + $0x6e8] sm:$0xf]
    %v458 = vld [vmem:[%s0 + $0x6ec] sm:$0xf]
    %v459 = vld [vmem:[%s0 + $0x6f0] sm:$0xf]
    %v460 = vld [vmem:[%s0 + $0x6f4] sm:$0xf]
    %v461 = vld [vmem:[%s0 + $0x6f8] sm:$0xf]
    %v462 = vld [vmem:[%s0 + $0x6fc] sm:$0xf]
    %v463 = vld [vmem:[%s0 + $0x700] sm:$0xf]
    %v464 = vld [vmem:[%s0 + $0x704] sm:$0xf]
    %v465 = vld [vmem:[%s0 + $0x708] sm:$0xf]
    %v466 = vld [vmem:[%s0 + $0x70c] sm:$0xf]
    %v467 = vld [vmem:[%s0 + $0x710] sm:$0xf]
    %v468 = vld [vmem:[%s0 + $0x714] sm:$0xf]
    %v469 = vld [vmem:[%s0 + $0x718] sm:$0xf]
    %v470 = vld [vmem:[%s0 + $0x71c] sm:$0xf]
    %v471 = vld [vmem:[%s0 + $0x720] sm:$0xf]
    %v472 = vld [vmem:[%s0 + $0x724] sm:$0xf]
    %v473 = vld [vmem:[%s0 + $0x728] sm:$0xf]
    %v474 = vld [vmem:[%s0 + $0x72c] sm:$0xf]
    %v475 = vld [vmem:[%s0 + $0x730] sm:$0xf]
    %v476 = vld [vmem:[%s0 + $0x734] sm:$0xf]
    %v477 = vld [vmem:[%s0 + $0x738] sm:$0xf]
    %v478 = vld [vmem:[%s0 + $0x73c] sm:$0xf]
    %v479 = vld [vmem:[%s0 + $0x740] sm:$0xf]
    %v480 = vld [vmem:[%s0 + $0x744] sm:$0xf]
    %v481 = vld [vmem:[%s0 + $0x748] sm:$0xf]
    %v482 = vld [vmem:[%s0 + $0x74c] sm:$0xf]
    %v483 = vld [vmem:[%s0 + $0x750] sm:$0xf]
    %v484 = vld [vmem:[%s0 + $0x754] sm:$0xf]
    %v485 = vld [vmem:[%s0 + $0x758] sm:$0xf]
    %v486 = vld [vmem:[%s0 + $0x75c] sm:$0xf]
    %v487 = vld [vmem:[%s0 + $0x760] sm:$0xf]
    %v488 = vld [vmem:[%s0 + $0x764] sm:$0xf]
    %v489 = vld [vmem:[%s0 + $0x768] sm:$0xf]
    %v490 = vld [vmem:[%s0 + $0x76c] sm:$0xf]
    %v491 = vld [vmem:[%s0 + $0x770] sm:$0xf]
    %v492 = vld [vmem:[%s0 + $0x774] sm:$0xf]
    %v493 = vld [vmem:[%s0 + $0x778] sm:$0xf]
    %v494 = vld [vmem:[%s0 + $0x77c] sm:$0xf]
    %v495 = vld [vmem:[%s0 + $0x780] sm:$0xf]
    %v496 = vld [vmem:[%s0 + $0x784] sm:$0xf]
    %v497 = vld [vmem:[%s0 + $0x788] sm:$0xf]
    %v498 = vld [vmem:[%s0 + $0x78c] sm:$0xf]
    %v499 = vld [vmem:[%s0 + $0x790] sm:$0xf]
    %v500 = vld [vmem:[%s0 + $0x794] sm:$0xf]
    %v501 = vld [vmem:[%s0 + $0x798] sm:$0xf]
    %v502 = vld [vmem:[%s0 + $0x79c] sm:$0xf]
    %v503 = vld [vmem:[%s0 + $0x7a0] sm:$0xf]
    %v504 = vld [vmem:[%s0 + $0x7a4] sm:$0xf]
    %v505 = vld [vmem:[%s0 + $0x7a8] sm:$0xf]
    %v506 = vld [vmem:[%s0 + $0x7ac] sm:$0xf]
    %v507 = vld [vmem:[%s0 + $0x7b0] sm:$0xf]
    %v508 = vld [vmem:[%s0 + $0x7b4] sm:$0xf]
    %v509 = vld [vmem:[%s0 + $0x7b8] sm:$0xf]
    %v510 = vld [vmem:[%s0 + $0x7bc] sm:$0xf]
    %v511 = vld [vmem:[%s0 + $0x7c0] sm:$0xf]
    %v512 = vld [vmem:[%s0 + $0x7c4] sm:$0xf]
    %v513 = vld [vmem:[%s0 + $0x7c8] sm:$0xf]
    %v514 = vld [vmem:[%s0 + $0x7cc] sm:$0xf]
    %v515 = vld [vmem:[%s0 + $0x7d0] sm:$0xf]
    %v516 = vld [vmem:[%s0 + $0x7d4] sm:$0xf]
    %v517 = vld [vmem:[%s0 + $0x7d8] sm:$0xf]
    %v518 = vld [vmem:[%s0 + $0x7dc] sm:$0xf]
    %v519 = vld [vmem:[%s0 + $0x7e0] sm:$0xf]
    %v520 = vld [vmem:[%s0 + $0x7e4] sm:$0xf]
    %v521 = vld [vmem:[%s0 + $0x7e8] sm:$0xf]
    %v522 = vld [vmem:[%s0 + $0x7ec] sm:$0xf]
    %v523 = vld [vmem:[%s0 + $0x7f0] sm:$0xf]
    %v524 = vld [vmem:[%s0 + $0x7f4] sm:$0xf]
    %v525 = vld [vmem:[%s0 + $0x7f8] sm:$0xf]
    %v526 = vld [vmem:[%s0 + $0x7fc] sm:$0xf]
    %v527 = vld [vmem:[%s0 + $0x800] sm:$0xf]
    %v528 = vld [vmem:[%s0 + $0x804] sm:$0xf]
    %v529 = vld [vmem:[%s0 + $0x808] sm:$0xf]
    %v530 = vld [vmem:[%s0 + $0x80c] sm:$0xf]
    %v531 = vld [vmem:[%s0 + $0x810] sm:$0xf]
    %v532 = vld [vmem:[%s0 + $0x814] sm:$0xf]
    %v533 = vld [vmem:[%s0 + $0x818] sm:$0xf]
    %v534 = vld [vmem:[%s0 + $0x81c] sm:$0xf]
    %v535 = vld [vmem:[%s0 + $0x820] sm:$0xf]
    %v536 = vld [vmem:[%s0 + $0x824] sm:$0xf]
    %v537 = vld [vmem:[%s0 + $0x828] sm:$0xf]
    %v538 = vld [vmem:[%s0 + $0x82c] sm:$0xf]
    %v539 = vld [vmem:[%s0 + $0x830] sm:$0xf]
    %v540 = vld [vmem:[%s0 + $0x834] sm:$0xf]
    %v541 = vld [vmem:[%s0 + $0x838] sm:$0xf]
    %v542 = vld [vmem:[%s0 + $0x83c] sm:$0xf]
    %v543 = vld [vmem:[%s0 + $0x840] sm:$0xf]
    %v544 = vld [vmem:[%s0 + $0x844] sm:$0xf]
    %v545 = vld [vmem:[%s0 + $0x848] sm:$0xf]
    %v546 = vld [vmem:[%s0 + $0x84c] sm:$0xf]
    %v547 = vld [vmem:[%s0 + $0x850] sm:$0xf]
    %v548 = vld [vmem:[%s0 + $0x854] sm:$0xf]
    %v549 = vld [vmem:[%s0 + $0x858] sm:$0xf]
    %v550 = vld [vmem:[%s0 + $0x85c] sm:$0xf]
    %v551 = vld [vmem:[%s0 + $0x860] sm:$0xf]
    %v552 = vld [vmem:[%s0 + $0x864] sm:$0xf]
    %v553 = vld [vmem:[%s0 + $0x868] sm:$0xf]
    %v554 = vld [vmem:[%s0 + $0x86c] sm:$0xf]
    %v555 = vld [vmem:[%s0 + $0x870] sm:$0xf]
    %v556 = vld [vmem:[%s0 + $0x874] sm:$0xf]
    %v557 = vld [vmem:[%s0 + $0x878] sm:$0xf]
    %v558 = vld [vmem:[%s0 + $0x87c] sm:$0xf]
    %v559 = vld [vmem:[%s0 + $0x880] sm:$0xf]
    %v560 = vld [vmem:[%s0 + $0x884] sm:$0xf]
    %v561 = vld [vmem:[%s0 + $0x888] sm:$0xf]
    %v562 = vld [vmem:[%s0 + $0x88c] sm:$0xf]
    %v563 = vld [vmem:[%s0 + $0x890] sm:$0xf]
    %v564 = vld [vmem:[%s0 + $0x894] sm:$0xf]
    %v565 = vld [vmem:[%s0 + $0x898] sm:$0xf]
    %v566 = vld [vmem:[%s0 + $0x89c] sm:$0xf]
    %v567 = vunpack.c.l.bf16 %v15
    %v568 = vunpack.c.l.bf16 %v16
    %v569 = vunpack.c.l.bf16 %v17
    %v570 = vunpack.c.l.bf16 %v18
    %v571 = vunpack.c.l.bf16 %v19
    %v572 = vunpack.c.l.bf16 %v20
    %v573 = vunpack.c.l.bf16 %v21
    %v574 = vunpack.c.l.bf16 %v22
    %v575 = vunpack.c.l.bf16 %v23
    %v576 = vunpack.c.l.bf16 %v24
    %v577 = vunpack.c.l.bf16 %v25
    %v578 = vunpack.c.l.bf16 %v26
    %v579 = vunpack.c.l.bf16 %v27
    %v580 = vunpack.c.l.bf16 %v28
    %v581 = vunpack.c.l.bf16 %v29
    %v582 = vunpack.c.l.bf16 %v30
    %v583 = vunpack.c.l.bf16 %v31
    %v584 = vunpack.c.l.bf16 %v32
    %v585 = vunpack.c.l.bf16 %v33
    %v586 = vunpack.c.l.bf16 %v34
    %v587 = vunpack.c.l.bf16 %v35
    %v588 = vunpack.c.l.bf16 %v36
    %v589 = vunpack.c.l.bf16 %v37
    %v590 = vunpack.c.l.bf16 %v38
    %v591 = vunpack.c.l.bf16 %v39
    %v592 = vunpack.c.l.bf16 %v40
    %v593 = vunpack.c.l.bf16 %v41
    %v594 = vunpack.c.l.bf16 %v42
    %v595 = vunpack.c.l.bf16 %v43
    %v596 = vunpack.c.l.bf16 %v44
    %v597 = vunpack.c.l.bf16 %v45
    %v598 = vunpack.c.l.bf16 %v46
    %v599 = vunpack.c.l.bf16 %v47
    %v600 = vunpack.c.l.bf16 %v48
    %v601 = vunpack.c.l.bf16 %v49
    %v602 = vunpack.c.l.bf16 %v50
    %v603 = vunpack.c.l.bf16 %v51
    %v604 = vunpack.c.l.bf16 %v52
    %v605 = vunpack.c.l.bf16 %v53
    %v606 = vunpack.c.l.bf16 %v54
    %v607 = vunpack.c.l.bf16 %v55
    %v608 = vunpack.c.l.bf16 %v56
    %v609 = vunpack.c.l.bf16 %v57
    %v610 = vunpack.c.l.bf16 %v58
    %v611 = vunpack.c.l.bf16 %v59
    %v612 = vunpack.c.l.bf16 %v60
    %v613 = vunpack.c.l.bf16 %v61
    %v614 = vunpack.c.l.bf16 %v62
    %v615 = vunpack.c.l.bf16 %v63
    %v616 = vunpack.c.l.bf16 %v64
    %v617 = vunpack.c.l.bf16 %v65
    %v618 = vunpack.c.l.bf16 %v66
    %v619 = vunpack.c.l.bf16 %v67
    %v620 = vunpack.c.l.bf16 %v68
    %v621 = vunpack.c.l.bf16 %v69
    %v622 = vunpack.c.l.bf16 %v70
    %v623 = vunpack.c.l.bf16 %v71
    %v624 = vunpack.c.l.bf16 %v72
    %v625 = vunpack.c.l.bf16 %v73
    %v626 = vunpack.c.l.bf16 %v74
    %v627 = vunpack.c.l.bf16 %v75
    %v628 = vunpack.c.l.bf16 %v76
    %v629 = vunpack.c.l.bf16 %v77
    %v630 = vunpack.c.l.bf16 %v78
    %v631 = vunpack.c.l.bf16 %v79
    %v632 = vunpack.c.l.bf16 %v80
    %v633 = vunpack.c.l.bf16 %v81
    %v634 = vunpack.c.l.bf16 %v82
    %v635 = vunpack.c.l.bf16 %v83
    %v636 = vunpack.c.l.bf16 %v84
    %v637 = vunpack.c.l.bf16 %v85
    %v638 = vunpack.c.l.bf16 %v86
    %v639 = vunpack.c.l.bf16 %v87
    %v640 = vunpack.c.l.bf16 %v88
    %v641 = vunpack.c.l.bf16 %v89
    %v642 = vunpack.c.l.bf16 %v90
    %v643 = vunpack.c.l.bf16 %v91
    %v644 = vunpack.c.l.bf16 %v92
    %v645 = vunpack.c.l.bf16 %v93
    %v646 = vunpack.c.l.bf16 %v94
    %v647 = vunpack.c.l.bf16 %v95
    %v648 = vunpack.c.l.bf16 %v96
    %v649 = vunpack.c.l.bf16 %v97
    %v650 = vunpack.c.l.bf16 %v98
    %v651 = vunpack.c.l.bf16 %v99
    %v652 = vunpack.c.l.bf16 %v100
    %v653 = vunpack.c.l.bf16 %v101
    %v654 = vunpack.c.l.bf16 %v102
    %v655 = vunpack.c.l.bf16 %v103
    %v656 = vunpack.c.l.bf16 %v104
    %v657 = vunpack.c.l.bf16 %v105
    %v658 = vunpack.c.l.bf16 %v106
    %v659 = vunpack.c.l.bf16 %v107
    %v660 = vunpack.c.l.bf16 %v108
    %v661 = vunpack.c.l.bf16 %v109
    %v662 = vunpack.c.l.bf16 %v110
    %v663 = vunpack.c.l.bf16 %v111
    %v664 = vunpack.c.l.bf16 %v112
    %v665 = vunpack.c.l.bf16 %v113
    %v666 = vunpack.c.l.bf16 %v114
    %v667 = vunpack.c.l.bf16 %v115
    %v668 = vunpack.c.l.bf16 %v116
    %v669 = vunpack.c.l.bf16 %v117
    %v670 = vunpack.c.l.bf16 %v118
    %v671 = vunpack.c.l.bf16 %v119
    %v672 = vunpack.c.l.bf16 %v120
    %v673 = vunpack.c.l.bf16 %v121
    %v674 = vunpack.c.l.bf16 %v122
    %v675 = vunpack.c.l.bf16 %v123
    %v676 = vunpack.c.l.bf16 %v124
    %v677 = vunpack.c.l.bf16 %v125
    %v678 = vunpack.c.l.bf16 %v126
    %v679 = vunpack.c.l.bf16 %v127
    %v680 = vunpack.c.l.bf16 %v128
    %v681 = vunpack.c.l.bf16 %v129
    %v682 = vunpack.c.l.bf16 %v130
    %v683 = vunpack.c.l.bf16 %v131
    %v684 = vunpack.c.l.bf16 %v132
    %v685 = vunpack.c.l.bf16 %v133
    %v686 = vunpack.c.l.bf16 %v134
    %v687 = vunpack.c.l.bf16 %v135
    %v688 = vunpack.c.l.bf16 %v136
    %v689 = vunpack.c.l.bf16 %v137
    %v690 = vunpack.c.l.bf16 %v138
    %v691 = vunpack.c.l.bf16 %v139
    %v692 = vunpack.c.l.bf16 %v140
    %v693 = vunpack.c.l.bf16 %v141
    %v694 = vunpack.c.l.bf16 %v142
    %v695 = vunpack.c.l.bf16 %v143
    %v696 = vunpack.c.l.bf16 %v144
    %v697 = vunpack.c.l.bf16 %v145
    %v698 = vunpack.c.l.bf16 %v146
    %v699 = vunpack.c.l.bf16 %v147
    %v700 = vunpack.c.l.bf16 %v148
    %v701 = vunpack.c.l.bf16 %v149
    %v702 = vunpack.c.l.bf16 %v150
    %v703 = vunpack.c.l.bf16 %v151
    %v704 = vunpack.c.l.bf16 %v152
    %v705 = vunpack.c.l.bf16 %v153
    %v706 = vunpack.c.l.bf16 %v154
    %v707 = vunpack.c.l.bf16 %v155
    %v708 = vunpack.c.l.bf16 %v156
    %v709 = vunpack.c.l.bf16 %v157
    %v710 = vunpack.c.l.bf16 %v158
    %v711 = vunpack.c.l.bf16 %v159
    %v712 = vunpack.c.l.bf16 %v160
    %v713 = vunpack.c.l.bf16 %v161
    %v714 = vunpack.c.l.bf16 %v162
    %v715 = vunpack.c.l.bf16 %v163
    %v716 = vunpack.c.l.bf16 %v164
    %v717 = vunpack.c.l.bf16 %v165
    %v718 = vunpack.c.l.bf16 %v166
    %v719 = vunpack.c.l.bf16 %v167
    %v720 = vunpack.c.l.bf16 %v168
    %v721 = vunpack.c.l.bf16 %v169
    %v722 = vunpack.c.l.bf16 %v170
    %v723 = vunpack.c.l.bf16 %v171
    %v724 = vunpack.c.l.bf16 %v172
    %v725 = vunpack.c.l.bf16 %v173
    %v726 = vunpack.c.l.bf16 %v174
    %v727 = vunpack.c.l.bf16 %v175
    %v728 = vunpack.c.l.bf16 %v176
    %v729 = vunpack.c.l.bf16 %v177
    %v730 = vunpack.c.l.bf16 %v178
    %v731 = vunpack.c.l.bf16 %v179
    %v732 = vunpack.c.l.bf16 %v180
    %v733 = vunpack.c.l.bf16 %v181
    %v734 = vunpack.c.l.bf16 %v182
    %v735 = vunpack.c.l.bf16 %v183
    %v736 = vunpack.c.l.bf16 %v184
    %v737 = vunpack.c.l.bf16 %v185
    %v738 = vunpack.c.l.bf16 %v186
    %v739 = vunpack.c.l.bf16 %v187
    %v740 = vunpack.c.l.bf16 %v188
    %v741 = vunpack.c.l.bf16 %v189
    %v742 = vunpack.c.l.bf16 %v190
    %v743 = vunpack.c.l.bf16 %v191
    %v744 = vunpack.c.l.bf16 %v192
    %v745 = vunpack.c.l.bf16 %v193
    %v746 = vunpack.c.l.bf16 %v194
    %v747 = vunpack.c.l.bf16 %v195
    %v748 = vunpack.c.l.bf16 %v196
    %v749 = vunpack.c.l.bf16 %v197
    %v750 = vunpack.c.l.bf16 %v198
    %v751 = vunpack.c.l.bf16 %v199
    %v752 = vunpack.c.l.bf16 %v200
    %v753 = vunpack.c.l.bf16 %v201
    %v754 = vunpack.c.l.bf16 %v202
    %v755 = vunpack.c.l.bf16 %v203
    %v756 = vunpack.c.l.bf16 %v204
    %v757 = vunpack.c.l.bf16 %v205
    %v758 = vunpack.c.l.bf16 %v206
    %v759 = vunpack.c.l.bf16 %v207
    %v760 = vunpack.c.l.bf16 %v208
    %v761 = vunpack.c.l.bf16 %v209
    %v762 = vunpack.c.l.bf16 %v210
    %v763 = vunpack.c.l.bf16 %v211
    %v764 = vunpack.c.l.bf16 %v212
    %v765 = vunpack.c.l.bf16 %v213
    %v766 = vunpack.c.l.bf16 %v214
    %v767 = vunpack.c.l.bf16 %v215
    %v768 = vunpack.c.l.bf16 %v216
    %v769 = vunpack.c.l.bf16 %v217
    %v770 = vunpack.c.l.bf16 %v218
    %v771 = vunpack.c.l.bf16 %v219
    %v772 = vunpack.c.l.bf16 %v220
    %v773 = vunpack.c.l.bf16 %v221
    %v774 = vunpack.c.l.bf16 %v222
    %v775 = vunpack.c.l.bf16 %v223
    %v776 = vunpack.c.l.bf16 %v224
    %v777 = vunpack.c.l.bf16 %v225
    %v778 = vunpack.c.l.bf16 %v226
    %v779 = vunpack.c.l.bf16 %v227
    %v780 = vunpack.c.l.bf16 %v228
    %v781 = vunpack.c.l.bf16 %v229
    %v782 = vunpack.c.l.bf16 %v230
    %v783 = vunpack.c.l.bf16 %v231
    %v784 = vunpack.c.l.bf16 %v232
    %v785 = vunpack.c.l.bf16 %v233
    %v786 = vunpack.c.l.bf16 %v234
    %v787 = vunpack.c.l.bf16 %v235
    %v788 = vunpack.c.l.bf16 %v236
    %v789 = vunpack.c.l.bf16 %v237
    %v790 = vunpack.c.l.bf16 %v238
    %v791 = vunpack.c.l.bf16 %v239
    %v792 = vunpack.c.l.bf16 %v240
    %v793 = vunpack.c.l.bf16 %v241
    %v794 = vunpack.c.l.bf16 %v242
    %v795 = vunpack.c.l.bf16 %v243
    %v796 = vunpack.c.l.bf16 %v244
    %v797 = vunpack.c.l.bf16 %v245
    %v798 = vunpack.c.l.bf16 %v246
    %v799 = vunpack.c.l.bf16 %v247
    %v800 = vunpack.c.l.bf16 %v248
    %v801 = vunpack.c.l.bf16 %v249
    %v802 = vunpack.c.l.bf16 %v250
    %v803 = vunpack.c.l.bf16 %v251
    %v804 = vunpack.c.l.bf16 %v252
    %v805 = vunpack.c.l.bf16 %v253
    %v806 = vunpack.c.l.bf16 %v254
    %v807 = vunpack.c.l.bf16 %v255
    %v808 = vunpack.c.l.bf16 %v256
    %v809 = vunpack.c.l.bf16 %v257
    %v810 = vunpack.c.l.bf16 %v258
    %v811 = vunpack.c.l.bf16 %v259
    %v812 = vunpack.c.l.bf16 %v260
    %v813 = vunpack.c.l.bf16 %v261
    %v814 = vunpack.c.l.bf16 %v262
    %v815 = vunpack.c.l.bf16 %v263
    %v816 = vunpack.c.l.bf16 %v264
    %v817 = vunpack.c.l.bf16 %v265
    %v818 = vunpack.c.l.bf16 %v266
    %v819 = vunpack.c.l.bf16 %v267
    %v820 = vunpack.c.l.bf16 %v268
    %v821 = vunpack.c.l.bf16 %v269
    %v822 = vunpack.c.l.bf16 %v270
    %v823 = vunpack.c.l.bf16 %v271
    %v824 = vunpack.c.l.bf16 %v272
    %v825 = vunpack.c.l.bf16 %v273
    %v826 = vunpack.c.l.bf16 %v274
    %v827 = vunpack.c.l.bf16 %v275
    %v828 = vunpack.c.l.bf16 %v276
    %v829 = vunpack.c.l.bf16 %v277
    %v830 = vunpack.c.l.bf16 %v278
    %v831 = vunpack.c.l.bf16 %v279
    %v832 = vunpack.c.l.bf16 %v280
    %v833 = vunpack.c.l.bf16 %v281
    %v834 = vunpack.c.l.bf16 %v282
    %v835 = vunpack.c.l.bf16 %v283
    %v836 = vunpack.c.l.bf16 %v284
    %v837 = vunpack.c.l.bf16 %v285
    %v838 = vunpack.c.l.bf16 %v286
    %v839 = vunpack.c.l.bf16 %v287
    %v840 = vunpack.c.l.bf16 %v288
    %v841 = vunpack.c.l.bf16 %v289
    %v842 = vunpack.c.l.bf16 %v290
    %v843 = vunpack.c.l.bf16 %v291
    %v844 = vunpack.c.l.bf16 %v292
    %v845 = vunpack.c.l.bf16 %v293
    %v846 = vunpack.c.l.bf16 %v294
    %v847 = vunpack.c.l.bf16 %v295
    %v848 = vunpack.c.l.bf16 %v296
    %v849 = vunpack.c.l.bf16 %v297
    %v850 = vunpack.c.l.bf16 %v298
    %v851 = vunpack.c.l.bf16 %v299
    %v852 = vunpack.c.l.bf16 %v300
    %v853 = vunpack.c.l.bf16 %v301
    %v854 = vunpack.c.l.bf16 %v302
    %v855 = vunpack.c.l.bf16 %v303
    %v856 = vunpack.c.l.bf16 %v304
    %v857 = vunpack.c.l.bf16 %v305
    %v858 = vunpack.c.l.bf16 %v306
    %v859 = vunpack.c.l.bf16 %v307
    %v860 = vunpack.c.l.bf16 %v308
    %v861 = vunpack.c.l.bf16 %v309
    %v862 = vunpack.c.l.bf16 %v310
    %v863 = vunpack.c.l.bf16 %v311
    %v864 = vunpack.c.l.bf16 %v312
    %v865 = vunpack.c.l.bf16 %v313
    %v866 = vunpack.c.l.bf16 %v314
    %v867 = vunpack.c.l.bf16 %v315
    %v868 = vunpack.c.l.bf16 %v316
    %v869 = vunpack.c.l.bf16 %v317
    %v870 = vunpack.c.l.bf16 %v318
    %v871 = vunpack.c.l.bf16 %v319
    %v872 = vunpack.c.l.bf16 %v320
    %v873 = vunpack.c.l.bf16 %v321
    %v874 = vunpack.c.l.bf16 %v322
    %v875 = vunpack.c.l.bf16 %v323
    %v876 = vunpack.c.l.bf16 %v324
    %v877 = vunpack.c.l.bf16 %v325
    %v878 = vunpack.c.l.bf16 %v326
    %v879 = vunpack.c.l.bf16 %v327
    %v880 = vunpack.c.l.bf16 %v328
    %v881 = vunpack.c.l.bf16 %v329
    %v882 = vunpack.c.l.bf16 %v330
    %v883 = vunpack.c.l.bf16 %v331
    %v884 = vunpack.c.l.bf16 %v332
    %v885 = vunpack.c.l.bf16 %v333
    %v886 = vunpack.c.l.bf16 %v334
    %v887 = vunpack.c.l.bf16 %v335
    %v888 = vunpack.c.l.bf16 %v336
    %v889 = vunpack.c.l.bf16 %v337
    %v890 = vunpack.c.l.bf16 %v338
    %v891 = vunpack.c.l.bf16 %v339
    %v892 = vunpack.c.l.bf16 %v340
    %v893 = vunpack.c.l.bf16 %v341
    %v894 = vunpack.c.l.bf16 %v342
    %v895 = vunpack.c.l.bf16 %v343
    %v896 = vunpack.c.l.bf16 %v344
    %v897 = vunpack.c.l.bf16 %v345
    %v898 = vunpack.c.l.bf16 %v346
    %v899 = vunpack.c.l.bf16 %v347
    %v900 = vunpack.c.l.bf16 %v348
    %v901 = vunpack.c.l.bf16 %v349
    %v902 = vunpack.c.l.bf16 %v350
    %v903 = vunpack.c.l.bf16 %v351
    %v904 = vunpack.c.l.bf16 %v352
    %v905 = vunpack.c.l.bf16 %v353
    %v906 = vunpack.c.l.bf16 %v354
    %v907 = vunpack.c.l.bf16 %v355
    %v908 = vunpack.c.l.bf16 %v356
    %v909 = vunpack.c.l.bf16 %v357
    %v910 = vunpack.c.l.bf16 %v358
    %v911 = vunpack.c.l.bf16 %v359
    %v912 = vunpack.c.l.bf16 %v360
    %v913 = vunpack.c.l.bf16 %v361
    %v914 = vunpack.c.l.bf16 %v362
    %v915 = vunpack.c.l.bf16 %v363
    %v916 = vunpack.c.l.bf16 %v364
    %v917 = vunpack.c.l.bf16 %v365
    %v918 = vunpack.c.l.bf16 %v366
    %v919 = vunpack.c.l.bf16 %v367
    %v920 = vunpack.c.l.bf16 %v368
    %v921 = vunpack.c.l.bf16 %v369
    %v922 = vunpack.c.l.bf16 %v370
    %v923 = vunpack.c.l.bf16 %v371
    %v924 = vunpack.c.l.bf16 %v372
    %v925 = vunpack.c.l.bf16 %v373
    %v926 = vunpack.c.l.bf16 %v374
    %v927 = vunpack.c.l.bf16 %v375
    %v928 = vunpack.c.l.bf16 %v376
    %v929 = vunpack.c.l.bf16 %v377
    %v930 = vunpack.c.l.bf16 %v378
    %v931 = vunpack.c.l.bf16 %v379
    %v932 = vunpack.c.l.bf16 %v380
    %v933 = vunpack.c.l.bf16 %v381
    %v934 = vunpack.c.l.bf16 %v382
    %v935 = vunpack.c.l.bf16 %v383
    %v936 = vunpack.c.l.bf16 %v384
    %v937 = vunpack.c.l.bf16 %v385
    %v938 = vunpack.c.l.bf16 %v386
    %v939 = vunpack.c.l.bf16 %v387
    %v940 = vunpack.c.l.bf16 %v388
    %v941 = vunpack.c.l.bf16 %v389
    %v942 = vunpack.c.l.bf16 %v390
    %v943 = vunpack.c.l.bf16 %v391
    %v944 = vunpack.c.l.bf16 %v392
    %v945 = vunpack.c.l.bf16 %v393
    %v946 = vunpack.c.l.bf16 %v394
    %v947 = vunpack.c.l.bf16 %v395
    %v948 = vunpack.c.l.bf16 %v396
    %v949 = vunpack.c.l.bf16 %v397
    %v950 = vunpack.c.l.bf16 %v398
    %v951 = vunpack.c.l.bf16 %v399
    %v952 = vunpack.c.l.bf16 %v400
    %v953 = vunpack.c.l.bf16 %v401
    %v954 = vunpack.c.l.bf16 %v402
    %v955 = vunpack.c.l.bf16 %v403
    %v956 = vunpack.c.l.bf16 %v404
    %v957 = vunpack.c.l.bf16 %v405
    %v958 = vunpack.c.l.bf16 %v406
    %v959 = vunpack.c.l.bf16 %v407
    %v960 = vunpack.c.l.bf16 %v408
    %v961 = vunpack.c.l.bf16 %v409
    %v962 = vunpack.c.l.bf16 %v410
    %v963 = vunpack.c.l.bf16 %v411
    %v964 = vunpack.c.l.bf16 %v412
    %v965 = vunpack.c.l.bf16 %v413
    %v966 = vunpack.c.l.bf16 %v414
    %v967 = vunpack.c.l.bf16 %v415
    %v968 = vunpack.c.l.bf16 %v416
    %v969 = vunpack.c.l.bf16 %v417
    %v970 = vunpack.c.l.bf16 %v418
    %v971 = vunpack.c.l.bf16 %v419
    %v972 = vunpack.c.l.bf16 %v420
    %v973 = vunpack.c.l.bf16 %v421
    %v974 = vunpack.c.l.bf16 %v422
    %v975 = vunpack.c.l.bf16 %v423
    %v976 = vunpack.c.l.bf16 %v424
    %v977 = vunpack.c.l.bf16 %v425
    %v978 = vunpack.c.l.bf16 %v426
    %v979 = vunpack.c.l.bf16 %v427
    %v980 = vunpack.c.l.bf16 %v428
    %v981 = vunpack.c.l.bf16 %v429
    %v982 = vunpack.c.l.bf16 %v430
    %v983 = vunpack.c.l.bf16 %v431
    %v984 = vunpack.c.l.bf16 %v432
    %v985 = vunpack.c.l.bf16 %v433
    %v986 = vunpack.c.l.bf16 %v434
    %v987 = vunpack.c.l.bf16 %v435
    %v988 = vunpack.c.l.bf16 %v436
    %v989 = vunpack.c.l.bf16 %v437
    %v990 = vunpack.c.l.bf16 %v438
    %v991 = vunpack.c.l.bf16 %v439
    %v992 = vunpack.c.l.bf16 %v440
    %v993 = vunpack.c.l.bf16 %v441
    %v994 = vunpack.c.l.bf16 %v442
    %v995 = vunpack.c.l.bf16 %v443
    %v996 = vunpack.c.l.bf16 %v444
    %v997 = vunpack.c.l.bf16 %v445
    %v998 = vunpack.c.l.bf16 %v446
    %v999 = vunpack.c.l.bf16 %v447
    %v1000 = vunpack.c.l.bf16 %v448
    %v1001 = vunpack.c.l.bf16 %v449
    %v1002 = vunpack.c.l.bf16 %v450
    %v1003 = vunpack.c.l.bf16 %v451
    %v1004 = vunpack.c.l.bf16 %v452
    %v1005 = vunpack.c.l.bf16 %v453
    %v1006 = vunpack.c.l.bf16 %v454
    %v1007 = vunpack.c.l.bf16 %v455
    %v1008 = vunpack.c.l.bf16 %v456
    %v1009 = vunpack.c.l.bf16 %v457
    %v1010 = vunpack.c.l.bf16 %v458
    %v1011 = vunpack.c.l.bf16 %v459
    %v1012 = vunpack.c.l.bf16 %v460
    %v1013 = vunpack.c.l.bf16 %v461
    %v1014 = vunpack.c.l.bf16 %v462
    %v1015 = vunpack.c.l.bf16 %v463
    %v1016 = vunpack.c.l.bf16 %v464
    %v1017 = vunpack.c.l.bf16 %v465
    %v1018 = vunpack.c.l.bf16 %v466
    %v1019 = vunpack.c.l.bf16 %v467
    %v1020 = vunpack.c.l.bf16 %v468
    %v1021 = vunpack.c.l.bf16 %v469
    %v1022 = vunpack.c.l.bf16 %v470
    %v1023 = vunpack.c.l.bf16 %v471
    %v1024 = vunpack.c.l.bf16 %v472
    %v1025 = vunpack.c.l.bf16 %v473
    %v1026 = vunpack.c.l.bf16 %v474
    %v1027 = vunpack.c.l.bf16 %v475
    %v1028 = vunpack.c.l.bf16 %v476
    %v1029 = vunpack.c.l.bf16 %v477
    %v1030 = vunpack.c.l.bf16 %v478
    %v1031 = vunpack.c.l.bf16 %v479
    %v1032 = vunpack.c.l.bf16 %v480
    %v1033 = vunpack.c.l.bf16 %v481
    %v1034 = vunpack.c.l.bf16 %v482
    %v1035 = vunpack.c.l.bf16 %v483
    %v1036 = vunpack.c.l.bf16 %v484
    %v1037 = vunpack.c.l.bf16 %v485
    %v1038 = vunpack.c.l.bf16 %v486
    %v1039 = vunpack.c.l.bf16 %v487
    %v1040 = vunpack.c.l.bf16 %v488
    %v1041 = vunpack.c.l.bf16 %v489
    %v1042 = vunpack.c.l.bf16 %v490
    %v1043 = vunpack.c.l.bf16 %v491
    %v1044 = vunpack.c.l.bf16 %v492
    %v1045 = vunpack.c.l.bf16 %v493
    %v1046 = vunpack.c.l.bf16 %v494
    %v1047 = vunpack.c.l.bf16 %v495
    %v1048 = vunpack.c.l.bf16 %v496
    %v1049 = vunpack.c.l.bf16 %v497
    %v1050 = vunpack.c.l.bf16 %v498
    %v1051 = vunpack.c.l.bf16 %v499
    %v1052 = vunpack.c.l.bf16 %v500
    %v1053 = vunpack.c.l.bf16 %v501
    %v1054 = vunpack.c.l.bf16 %v502
    %v1055 = vunpack.c.l.bf16 %v503
    %v1056 = vunpack.c.l.bf16 %v504
    %v1057 = vunpack.c.l.bf16 %v505
    %v1058 = vunpack.c.l.bf16 %v506
    %v1059 = vunpack.c.l.bf16 %v507
    %v1060 = vunpack.c.l.bf16 %v508
    %v1061 = vunpack.c.l.bf16 %v509
    %v1062 = vunpack.c.l.bf16 %v510
    %v1063 = vunpack.c.l.bf16 %v511
    %v1064 = vunpack.c.l.bf16 %v512
    %v1065 = vunpack.c.l.bf16 %v513
    %v1066 = vunpack.c.l.bf16 %v514
    %v1067 = vunpack.c.l.bf16 %v515
    %v1068 = vunpack.c.l.bf16 %v516
    %v1069 = vunpack.c.l.bf16 %v517
    %v1070 = vunpack.c.l.bf16 %v518
    %v1071 = vunpack.c.l.bf16 %v519
    %v1072 = vunpack.c.l.bf16 %v520
    %v1073 = vunpack.c.l.bf16 %v521
    %v1074 = vunpack.c.l.bf16 %v522
    %v1075 = vunpack.c.l.bf16 %v523
    %v1076 = vunpack.c.l.bf16 %v524
    %v1077 = vunpack.c.l.bf16 %v525
    %v1078 = vunpack.c.l.bf16 %v526
    %v1079 = vunpack.c.l.bf16 %v527
    %v1080 = vunpack.c.l.bf16 %v528
    %v1081 = vunpack.c.l.bf16 %v529
    %v1082 = vunpack.c.l.bf16 %v530
    %v1083 = vunpack.c.l.bf16 %v531
    %v1084 = vunpack.c.l.bf16 %v532
    %v1085 = vunpack.c.l.bf16 %v533
    %v1086 = vunpack.c.l.bf16 %v534
    %v1087 = vunpack.c.l.bf16 %v535
    %v1088 = vunpack.c.l.bf16 %v536
    %v1089 = vunpack.c.l.bf16 %v537
    %v1090 = vunpack.c.l.bf16 %v538
    %v1091 = vunpack.c.l.bf16 %v539
    %v1092 = vunpack.c.l.bf16 %v540
    %v1093 = vunpack.c.l.bf16 %v541
    %v1094 = vunpack.c.l.bf16 %v542
    %v1095 = vunpack.c.l.bf16 %v543
    %v1096 = vunpack.c.l.bf16 %v544
    %v1097 = vunpack.c.l.bf16 %v545
    %v1098 = vunpack.c.l.bf16 %v546
    %v1099 = vunpack.c.l.bf16 %v547
    %v1100 = vunpack.c.l.bf16 %v548
    %v1101 = vunpack.c.l.bf16 %v549
    %v1102 = vunpack.c.l.bf16 %v550
    %v1103 = vunpack.c.l.bf16 %v551
    %v1104 = vunpack.c.l.bf16 %v552
    %v1105 = vunpack.c.l.bf16 %v553
    %v1106 = vunpack.c.l.bf16 %v554
    %v1107 = vunpack.c.l.bf16 %v555
    %v1108 = vunpack.c.l.bf16 %v556
    %v1109 = vunpack.c.l.bf16 %v557
    %v1110 = vunpack.c.l.bf16 %v558
    %v1111 = vunpack.c.l.bf16 %v559
    %v1112 = vunpack.c.l.bf16 %v560
    %v1113 = vunpack.c.l.bf16 %v561
    %v1114 = vunpack.c.l.bf16 %v562
    %v1115 = vunpack.c.l.bf16 %v563
    %v1116 = vunpack.c.l.bf16 %v564
    %v1117 = vunpack.c.l.bf16 %v565
    %v1118 = vunpack.c.l.bf16 %v566
    %v1119 = vmax.f32 %v567, 0.0
    %v1120 = vmax.f32 %v568, 0.0
    %v1121 = vmax.f32 %v569, 0.0
    %v1122 = vmax.f32 %v570, 0.0
    %v1123 = vmax.f32 %v571, 0.0
    %v1124 = vmax.f32 %v572, 0.0
    %v1125 = vmax.f32 %v573, 0.0
    %v1126 = vmax.f32 %v574, 0.0
    %v1127 = vmax.f32 %v575, 0.0
    %v1128 = vmax.f32 %v576, 0.0
    %v1129 = vmax.f32 %v577, 0.0
    %v1130 = vmax.f32 %v578, 0.0
    %v1131 = vmax.f32 %v579, 0.0
    %v1132 = vmax.f32 %v580, 0.0
    %v1133 = vmax.f32 %v581, 0.0
    %v1134 = vmax.f32 %v582, 0.0
    %v1135 = vmax.f32 %v583, 0.0
    %v1136 = vmax.f32 %v584, 0.0
    %v1137 = vmax.f32 %v585, 0.0
    %v1138 = vmax.f32 %v586, 0.0
    %v1139 = vmax.f32 %v587, 0.0
    %v1140 = vmax.f32 %v588, 0.0
    %v1141 = vmax.f32 %v589, 0.0
    %v1142 = vmax.f32 %v590, 0.0
    %v1143 = vmax.f32 %v591, 0.0
    %v1144 = vmax.f32 %v592, 0.0
    %v1145 = vmax.f32 %v593, 0.0
    %v1146 = vmax.f32 %v594, 0.0
    %v1147 = vmax.f32 %v595, 0.0
    %v1148 = vmax.f32 %v596, 0.0
    %v1149 = vmax.f32 %v597, 0.0
    %v1150 = vmax.f32 %v598, 0.0
    %v1151 = vmax.f32 %v599, 0.0
    %v1152 = vmax.f32 %v600, 0.0
    %v1153 = vmax.f32 %v601, 0.0
    %v1154 = vmax.f32 %v602, 0.0
    %v1155 = vmax.f32 %v603, 0.0
    %v1156 = vmax.f32 %v604, 0.0
    %v1157 = vmax.f32 %v605, 0.0
    %v1158 = vmax.f32 %v606, 0.0
    %v1159 = vmax.f32 %v607, 0.0
    %v1160 = vmax.f32 %v608, 0.0
    %v1161 = vmax.f32 %v609, 0.0
    %v1162 = vmax.f32 %v610, 0.0
    %v1163 = vmax.f32 %v611, 0.0
    %v1164 = vmax.f32 %v612, 0.0
    %v1165 = vmax.f32 %v613, 0.0
    %v1166 = vmax.f32 %v614, 0.0
    %v1167 = vmax.f32 %v615, 0.0
    %v1168 = vmax.f32 %v616, 0.0
    %v1169 = vmax.f32 %v617, 0.0
    %v1170 = vmax.f32 %v618, 0.0
    %v1171 = vmax.f32 %v619, 0.0
    %v1172 = vmax.f32 %v620, 0.0
    %v1173 = vmax.f32 %v621, 0.0
    %v1174 = vmax.f32 %v622, 0.0
    %v1175 = vmax.f32 %v623, 0.0
    %v1176 = vmax.f32 %v624, 0.0
    %v1177 = vmax.f32 %v625, 0.0
    %v1178 = vmax.f32 %v626, 0.0
    %v1179 = vmax.f32 %v627, 0.0
    %v1180 = vmax.f32 %v628, 0.0
    %v1181 = vmax.f32 %v629, 0.0
    %v1182 = vmax.f32 %v630, 0.0
    %v1183 = vmax.f32 %v631, 0.0
    %v1184 = vmax.f32 %v632, 0.0
    %v1185 = vmax.f32 %v633, 0.0
    %v1186 = vmax.f32 %v634, 0.0
    %v1187 = vmax.f32 %v635, 0.0
    %v1188 = vmax.f32 %v636, 0.0
    %v1189 = vmax.f32 %v637, 0.0
    %v1190 = vmax.f32 %v638, 0.0
    %v1191 = vmax.f32 %v639, 0.0
    %v1192 = vmax.f32 %v640, 0.0
    %v1193 = vmax.f32 %v641, 0.0
    %v1194 = vmax.f32 %v642, 0.0
    %v1195 = vmax.f32 %v643, 0.0
    %v1196 = vmax.f32 %v644, 0.0
    %v1197 = vmax.f32 %v645, 0.0
    %v1198 = vmax.f32 %v646, 0.0
    %v1199 = vmax.f32 %v647, 0.0
    %v1200 = vmax.f32 %v648, 0.0
    %v1201 = vmax.f32 %v649, 0.0
    %v1202 = vmax.f32 %v650, 0.0
    %v1203 = vmax.f32 %v651, 0.0
    %v1204 = vmax.f32 %v652, 0.0
    %v1205 = vmax.f32 %v653, 0.0
    %v1206 = vmax.f32 %v654, 0.0
    %v1207 = vmax.f32 %v655, 0.0
    %v1208 = vmax.f32 %v656, 0.0
    %v1209 = vmax.f32 %v657, 0.0
    %v1210 = vmax.f32 %v658, 0.0
    %v1211 = vmax.f32 %v659, 0.0
    %v1212 = vmax.f32 %v660, 0.0
    %v1213 = vmax.f32 %v661, 0.0
    %v1214 = vmax.f32 %v662, 0.0
    %v1215 = vmax.f32 %v663, 0.0
    %v1216 = vmax.f32 %v664, 0.0
    %v1217 = vmax.f32 %v665, 0.0
    %v1218 = vmax.f32 %v666, 0.0
    %v1219 = vmax.f32 %v667, 0.0
    %v1220 = vmax.f32 %v668, 0.0
    %v1221 = vmax.f32 %v669, 0.0
    %v1222 = vmax.f32 %v670, 0.0
    %v1223 = vmax.f32 %v671, 0.0
    %v1224 = vmax.f32 %v672, 0.0
    %v1225 = vmax.f32 %v673, 0.0
    %v1226 = vmax.f32 %v674, 0.0
    %v1227 = vmax.f32 %v675, 0.0
    %v1228 = vmax.f32 %v676, 0.0
    %v1229 = vmax.f32 %v677, 0.0
    %v1230 = vmax.f32 %v678, 0.0
    %v1231 = vmax.f32 %v679, 0.0
    %v1232 = vmax.f32 %v680, 0.0
    %v1233 = vmax.f32 %v681, 0.0
    %v1234 = vmax.f32 %v682, 0.0
    %v1235 = vmax.f32 %v683, 0.0
    %v1236 = vmax.f32 %v684, 0.0
    %v1237 = vmax.f32 %v685, 0.0
    %v1238 = vmax.f32 %v686, 0.0
    %v1239 = vmax.f32 %v687, 0.0
    %v1240 = vmax.f32 %v688, 0.0
    %v1241 = vmax.f32 %v689, 0.0
    %v1242 = vmax.f32 %v690, 0.0
    %v1243 = vmax.f32 %v691, 0.0
    %v1244 = vmax.f32 %v692, 0.0
    %v1245 = vmax.f32 %v693, 0.0
    %v1246 = vmax.f32 %v694, 0.0
    %v1247 = vmax.f32 %v695, 0.0
    %v1248 = vmax.f32 %v696, 0.0
    %v1249 = vmax.f32 %v697, 0.0
    %v1250 = vmax.f32 %v698, 0.0
    %v1251 = vmax.f32 %v699, 0.0
    %v1252 = vmax.f32 %v700, 0.0
    %v1253 = vmax.f32 %v701, 0.0
    %v1254 = vmax.f32 %v702, 0.0
    %v1255 = vmax.f32 %v703, 0.0
    %v1256 = vmax.f32 %v704, 0.0
    %v1257 = vmax.f32 %v705, 0.0
    %v1258 = vmax.f32 %v706, 0.0
    %v1259 = vmax.f32 %v707, 0.0
    %v1260 = vmax.f32 %v708, 0.0
    %v1261 = vmax.f32 %v709, 0.0
    %v1262 = vmax.f32 %v710, 0.0
    %v1263 = vmax.f32 %v711, 0.0
    %v1264 = vmax.f32 %v712, 0.0
    %v1265 = vmax.f32 %v713, 0.0
    %v1266 = vmax.f32 %v714, 0.0
    %v1267 = vmax.f32 %v715, 0.0
    %v1268 = vmax.f32 %v716, 0.0
    %v1269 = vmax.f32 %v717, 0.0
    %v1270 = vmax.f32 %v718, 0.0
    %v1271 = vmax.f32 %v719, 0.0
    %v1272 = vmax.f32 %v720, 0.0
    %v1273 = vmax.f32 %v721, 0.0
    %v1274 = vmax.f32 %v722, 0.0
    %v1275 = vmax.f32 %v723, 0.0
    %v1276 = vmax.f32 %v724, 0.0
    %v1277 = vmax.f32 %v725, 0.0
    %v1278 = vmax.f32 %v726, 0.0
    %v1279 = vmax.f32 %v727, 0.0
    %v1280 = vmax.f32 %v728, 0.0
    %v1281 = vmax.f32 %v729, 0.0
    %v1282 = vmax.f32 %v730, 0.0
    %v1283 = vmax.f32 %v731, 0.0
    %v1284 = vmax.f32 %v732, 0.0
    %v1285 = vmax.f32 %v733, 0.0
    %v1286 = vmax.f32 %v734, 0.0
    %v1287 = vmax.f32 %v735, 0.0
    %v1288 = vmax.f32 %v736, 0.0
    %v1289 = vmax.f32 %v737, 0.0
    %v1290 = vmax.f32 %v738, 0.0
    %v1291 = vmax.f32 %v739, 0.0
    %v1292 = vmax.f32 %v740, 0.0
    %v1293 = vmax.f32 %v741, 0.0
    %v1294 = vmax.f32 %v742, 0.0
    %v1295 = vmax.f32 %v743, 0.0
    %v1296 = vmax.f32 %v744, 0.0
    %v1297 = vmax.f32 %v745, 0.0
    %v1298 = vmax.f32 %v746, 0.0
    %v1299 = vmax.f32 %v747, 0.0
    %v1300 = vmax.f32 %v748, 0.0
    %v1301 = vmax.f32 %v749, 0.0
    %v1302 = vmax.f32 %v750, 0.0
    %v1303 = vmax.f32 %v751, 0.0
    %v1304 = vmax.f32 %v752, 0.0
    %v1305 = vmax.f32 %v753, 0.0
    %v1306 = vmax.f32 %v754, 0.0
    %v1307 = vmax.f32 %v755, 0.0
    %v1308 = vmax.f32 %v756, 0.0
    %v1309 = vmax.f32 %v757, 0.0
    %v1310 = vmax.f32 %v758, 0.0
    %v1311 = vmax.f32 %v759, 0.0
    %v1312 = vmax.f32 %v760, 0.0
    %v1313 = vmax.f32 %v761, 0.0
    %v1314 = vmax.f32 %v762, 0.0
    %v1315 = vmax.f32 %v763, 0.0
    %v1316 = vmax.f32 %v764, 0.0
    %v1317 = vmax.f32 %v765, 0.0
    %v1318 = vmax.f32 %v766, 0.0
    %v1319 = vmax.f32 %v767, 0.0
    %v1320 = vmax.f32 %v768, 0.0
    %v1321 = vmax.f32 %v769, 0.0
    %v1322 = vmax.f32 %v770, 0.0
    %v1323 = vmax.f32 %v771, 0.0
    %v1324 = vmax.f32 %v772, 0.0
    %v1325 = vmax.f32 %v773, 0.0
    %v1326 = vmax.f32 %v774, 0.0
    %v1327 = vmax.f32 %v775, 0.0
    %v1328 = vmax.f32 %v776, 0.0
    %v1329 = vmax.f32 %v777, 0.0
    %v1330 = vmax.f32 %v778, 0.0
    %v1331 = vmax.f32 %v779, 0.0
    %v1332 = vmax.f32 %v780, 0.0
    %v1333 = vmax.f32 %v781, 0.0
    %v1334 = vmax.f32 %v782, 0.0
    %v1335 = vmax.f32 %v783, 0.0
    %v1336 = vmax.f32 %v784, 0.0
    %v1337 = vmax.f32 %v785, 0.0
    %v1338 = vmax.f32 %v786, 0.0
    %v1339 = vmax.f32 %v787, 0.0
    %v1340 = vmax.f32 %v788, 0.0
    %v1341 = vmax.f32 %v789, 0.0
    %v1342 = vmax.f32 %v790, 0.0
    %v1343 = vmax.f32 %v791, 0.0
    %v1344 = vmax.f32 %v792, 0.0
    %v1345 = vmax.f32 %v793, 0.0
    %v1346 = vmax.f32 %v794, 0.0
    %v1347 = vmax.f32 %v795, 0.0
    %v1348 = vmax.f32 %v796, 0.0
    %v1349 = vmax.f32 %v797, 0.0
    %v1350 = vmax.f32 %v798, 0.0
    %v1351 = vmax.f32 %v799, 0.0
    %v1352 = vmax.f32 %v800, 0.0
    %v1353 = vmax.f32 %v801, 0.0
    %v1354 = vmax.f32 %v802, 0.0
    %v1355 = vmax.f32 %v803, 0.0
    %v1356 = vmax.f32 %v804, 0.0
    %v1357 = vmax.f32 %v805, 0.0
    %v1358 = vmax.f32 %v806, 0.0
    %v1359 = vmax.f32 %v807, 0.0
    %v1360 = vmax.f32 %v808, 0.0
    %v1361 = vmax.f32 %v809, 0.0
    %v1362 = vmax.f32 %v810, 0.0
    %v1363 = vmax.f32 %v811, 0.0
    %v1364 = vmax.f32 %v812, 0.0
    %v1365 = vmax.f32 %v813, 0.0
    %v1366 = vmax.f32 %v814, 0.0
    %v1367 = vmax.f32 %v815, 0.0
    %v1368 = vmax.f32 %v816, 0.0
    %v1369 = vmax.f32 %v817, 0.0
    %v1370 = vmax.f32 %v818, 0.0
    %v1371 = vmax.f32 %v819, 0.0
    %v1372 = vmax.f32 %v820, 0.0
    %v1373 = vmax.f32 %v821, 0.0
    %v1374 = vmax.f32 %v822, 0.0
    %v1375 = vmax.f32 %v823, 0.0
    %v1376 = vmax.f32 %v824, 0.0
    %v1377 = vmax.f32 %v825, 0.0
    %v1378 = vmax.f32 %v826, 0.0
    %v1379 = vmax.f32 %v827, 0.0
    %v1380 = vmax.f32 %v828, 0.0
    %v1381 = vmax.f32 %v829, 0.0
    %v1382 = vmax.f32 %v830, 0.0
    %v1383 = vmax.f32 %v831, 0.0
    %v1384 = vmax.f32 %v832, 0.0
    %v1385 = vmax.f32 %v833, 0.0
    %v1386 = vmax.f32 %v834, 0.0
    %v1387 = vmax.f32 %v835, 0.0
    %v1388 = vmax.f32 %v836, 0.0
    %v1389 = vmax.f32 %v837, 0.0
    %v1390 = vmax.f32 %v838, 0.0
    %v1391 = vmax.f32 %v839, 0.0
    %v1392 = vmax.f32 %v840, 0.0
    %v1393 = vmax.f32 %v841, 0.0
    %v1394 = vmax.f32 %v842, 0.0
    %v1395 = vmax.f32 %v843, 0.0
    %v1396 = vmax.f32 %v844, 0.0
    %v1397 = vmax.f32 %v845, 0.0
    %v1398 = vmax.f32 %v846, 0.0
    %v1399 = vmax.f32 %v847, 0.0
    %v1400 = vmax.f32 %v848, 0.0
    %v1401 = vmax.f32 %v849, 0.0
    %v1402 = vmax.f32 %v850, 0.0
    %v1403 = vmax.f32 %v851, 0.0
    %v1404 = vmax.f32 %v852, 0.0
    %v1405 = vmax.f32 %v853, 0.0
    %v1406 = vmax.f32 %v854, 0.0
    %v1407 = vmax.f32 %v855, 0.0
    %v1408 = vmax.f32 %v856, 0.0
    %v1409 = vmax.f32 %v857, 0.0
    %v1410 = vmax.f32 %v858, 0.0
    %v1411 = vmax.f32 %v859, 0.0
    %v1412 = vmax.f32 %v860, 0.0
    %v1413 = vmax.f32 %v861, 0.0
    %v1414 = vmax.f32 %v862, 0.0
    %v1415 = vmax.f32 %v863, 0.0
    %v1416 = vmax.f32 %v864, 0.0
    %v1417 = vmax.f32 %v865, 0.0
    %v1418 = vmax.f32 %v866, 0.0
    %v1419 = vmax.f32 %v867, 0.0
    %v1420 = vmax.f32 %v868, 0.0
    %v1421 = vmax.f32 %v869, 0.0
    %v1422 = vmax.f32 %v870, 0.0
    %v1423 = vmax.f32 %v871, 0.0
    %v1424 = vmax.f32 %v872, 0.0
    %v1425 = vmax.f32 %v873, 0.0
    %v1426 = vmax.f32 %v874, 0.0
    %v1427 = vmax.f32 %v875, 0.0
    %v1428 = vmax.f32 %v876, 0.0
    %v1429 = vmax.f32 %v877, 0.0
    %v1430 = vmax.f32 %v878, 0.0
    %v1431 = vmax.f32 %v879, 0.0
    %v1432 = vmax.f32 %v880, 0.0
    %v1433 = vmax.f32 %v881, 0.0
    %v1434 = vmax.f32 %v882, 0.0
    %v1435 = vmax.f32 %v883, 0.0
    %v1436 = vmax.f32 %v884, 0.0
    %v1437 = vmax.f32 %v885, 0.0
    %v1438 = vmax.f32 %v886, 0.0
    %v1439 = vmax.f32 %v887, 0.0
    %v1440 = vmax.f32 %v888, 0.0
    %v1441 = vmax.f32 %v889, 0.0
    %v1442 = vmax.f32 %v890, 0.0
    %v1443 = vmax.f32 %v891, 0.0
    %v1444 = vmax.f32 %v892, 0.0
    %v1445 = vmax.f32 %v893, 0.0
    %v1446 = vmax.f32 %v894, 0.0
    %v1447 = vmax.f32 %v895, 0.0
    %v1448 = vmax.f32 %v896, 0.0
    %v1449 = vmax.f32 %v897, 0.0
    %v1450 = vmax.f32 %v898, 0.0
    %v1451 = vmax.f32 %v899, 0.0
    %v1452 = vmax.f32 %v900, 0.0
    %v1453 = vmax.f32 %v901, 0.0
    %v1454 = vmax.f32 %v902, 0.0
    %v1455 = vmax.f32 %v903, 0.0
    %v1456 = vmax.f32 %v904, 0.0
    %v1457 = vmax.f32 %v905, 0.0
    %v1458 = vmax.f32 %v906, 0.0
    %v1459 = vmax.f32 %v907, 0.0
    %v1460 = vmax.f32 %v908, 0.0
    %v1461 = vmax.f32 %v909, 0.0
    %v1462 = vmax.f32 %v910, 0.0
    %v1463 = vmax.f32 %v911, 0.0
    %v1464 = vmax.f32 %v912, 0.0
    %v1465 = vmax.f32 %v913, 0.0
    %v1466 = vmax.f32 %v914, 0.0
    %v1467 = vmax.f32 %v915, 0.0
    %v1468 = vmax.f32 %v916, 0.0
    %v1469 = vmax.f32 %v917, 0.0
    %v1470 = vmax.f32 %v918, 0.0
    %v1471 = vmax.f32 %v919, 0.0
    %v1472 = vmax.f32 %v920, 0.0
    %v1473 = vmax.f32 %v921, 0.0
    %v1474 = vmax.f32 %v922, 0.0
    %v1475 = vmax.f32 %v923, 0.0
    %v1476 = vmax.f32 %v924, 0.0
    %v1477 = vmax.f32 %v925, 0.0
    %v1478 = vmax.f32 %v926, 0.0
    %v1479 = vmax.f32 %v927, 0.0
    %v1480 = vmax.f32 %v928, 0.0
    %v1481 = vmax.f32 %v929, 0.0
    %v1482 = vmax.f32 %v930, 0.0
    %v1483 = vmax.f32 %v931, 0.0
    %v1484 = vmax.f32 %v932, 0.0
    %v1485 = vmax.f32 %v933, 0.0
    %v1486 = vmax.f32 %v934, 0.0
    %v1487 = vmax.f32 %v935, 0.0
    %v1488 = vmax.f32 %v936, 0.0
    %v1489 = vmax.f32 %v937, 0.0
    %v1490 = vmax.f32 %v938, 0.0
    %v1491 = vmax.f32 %v939, 0.0
    %v1492 = vmax.f32 %v940, 0.0
    %v1493 = vmax.f32 %v941, 0.0
    %v1494 = vmax.f32 %v942, 0.0
    %v1495 = vmax.f32 %v943, 0.0
    %v1496 = vmax.f32 %v944, 0.0
    %v1497 = vmax.f32 %v945, 0.0
    %v1498 = vmax.f32 %v946, 0.0
    %v1499 = vmax.f32 %v947, 0.0
    %v1500 = vmax.f32 %v948, 0.0
    %v1501 = vmax.f32 %v949, 0.0
    %v1502 = vmax.f32 %v950, 0.0
    %v1503 = vmax.f32 %v951, 0.0
    %v1504 = vmax.f32 %v952, 0.0
    %v1505 = vmax.f32 %v953, 0.0
    %v1506 = vmax.f32 %v954, 0.0
    %v1507 = vmax.f32 %v955, 0.0
    %v1508 = vmax.f32 %v956, 0.0
    %v1509 = vmax.f32 %v957, 0.0
    %v1510 = vmax.f32 %v958, 0.0
    %v1511 = vmax.f32 %v959, 0.0
    %v1512 = vmax.f32 %v960, 0.0
    %v1513 = vmax.f32 %v961, 0.0
    %v1514 = vmax.f32 %v962, 0.0
    %v1515 = vmax.f32 %v963, 0.0
    %v1516 = vmax.f32 %v964, 0.0
    %v1517 = vmax.f32 %v965, 0.0
    %v1518 = vmax.f32 %v966, 0.0
    %v1519 = vmax.f32 %v967, 0.0
    %v1520 = vmax.f32 %v968, 0.0
    %v1521 = vmax.f32 %v969, 0.0
    %v1522 = vmax.f32 %v970, 0.0
    %v1523 = vmax.f32 %v971, 0.0
    %v1524 = vmax.f32 %v972, 0.0
    %v1525 = vmax.f32 %v973, 0.0
    %v1526 = vmax.f32 %v974, 0.0
    %v1527 = vmax.f32 %v975, 0.0
    %v1528 = vmax.f32 %v976, 0.0
    %v1529 = vmax.f32 %v977, 0.0
    %v1530 = vmax.f32 %v978, 0.0
    %v1531 = vmax.f32 %v979, 0.0
    %v1532 = vmax.f32 %v980, 0.0
    %v1533 = vmax.f32 %v981, 0.0
    %v1534 = vmax.f32 %v982, 0.0
    %v1535 = vmax.f32 %v983, 0.0
    %v1536 = vmax.f32 %v984, 0.0
    %v1537 = vmax.f32 %v985, 0.0
    %v1538 = vmax.f32 %v986, 0.0
    %v1539 = vmax.f32 %v987, 0.0
    %v1540 = vmax.f32 %v988, 0.0
    %v1541 = vmax.f32 %v989, 0.0
    %v1542 = vmax.f32 %v990, 0.0
    %v1543 = vmax.f32 %v991, 0.0
    %v1544 = vmax.f32 %v992, 0.0
    %v1545 = vmax.f32 %v993, 0.0
    %v1546 = vmax.f32 %v994, 0.0
    %v1547 = vmax.f32 %v995, 0.0
    %v1548 = vmax.f32 %v996, 0.0
    %v1549 = vmax.f32 %v997, 0.0
    %v1550 = vmax.f32 %v998, 0.0
    %v1551 = vmax.f32 %v999, 0.0
    %v1552 = vmax.f32 %v1000, 0.0
    %v1553 = vmax.f32 %v1001, 0.0
    %v1554 = vmax.f32 %v1002, 0.0
    %v1555 = vmax.f32 %v1003, 0.0
    %v1556 = vmax.f32 %v1004, 0.0
    %v1557 = vmax.f32 %v1005, 0.0
    %v1558 = vmax.f32 %v1006, 0.0
    %v1559 = vmax.f32 %v1007, 0.0
    %v1560 = vmax.f32 %v1008, 0.0
    %v1561 = vmax.f32 %v1009, 0.0
    %v1562 = vmax.f32 %v1010, 0.0
    %v1563 = vmax.f32 %v1011, 0.0
    %v1564 = vmax.f32 %v1012, 0.0
    %v1565 = vmax.f32 %v1013, 0.0
    %v1566 = vmax.f32 %v1014, 0.0
    %v1567 = vmax.f32 %v1015, 0.0
    %v1568 = vmax.f32 %v1016, 0.0
    %v1569 = vmax.f32 %v1017, 0.0
    %v1570 = vmax.f32 %v1018, 0.0
    %v1571 = vmax.f32 %v1019, 0.0
    %v1572 = vmax.f32 %v1020, 0.0
    %v1573 = vmax.f32 %v1021, 0.0
    %v1574 = vmax.f32 %v1022, 0.0
    %v1575 = vmax.f32 %v1023, 0.0
    %v1576 = vmax.f32 %v1024, 0.0
    %v1577 = vmax.f32 %v1025, 0.0
    %v1578 = vmax.f32 %v1026, 0.0
    %v1579 = vmax.f32 %v1027, 0.0
    %v1580 = vmax.f32 %v1028, 0.0
    %v1581 = vmax.f32 %v1029, 0.0
    %v1582 = vmax.f32 %v1030, 0.0
    %v1583 = vmax.f32 %v1031, 0.0
    %v1584 = vmax.f32 %v1032, 0.0
    %v1585 = vmax.f32 %v1033, 0.0
    %v1586 = vmax.f32 %v1034, 0.0
    %v1587 = vmax.f32 %v1035, 0.0
    %v1588 = vmax.f32 %v1036, 0.0
    %v1589 = vmax.f32 %v1037, 0.0
    %v1590 = vmax.f32 %v1038, 0.0
    %v1591 = vmax.f32 %v1039, 0.0
    %v1592 = vmax.f32 %v1040, 0.0
    %v1593 = vmax.f32 %v1041, 0.0
    %v1594 = vmax.f32 %v1042, 0.0
    %v1595 = vmax.f32 %v1043, 0.0
    %v1596 = vmax.f32 %v1044, 0.0
    %v1597 = vmax.f32 %v1045, 0.0
    %v1598 = vmax.f32 %v1046, 0.0
    %v1599 = vmax.f32 %v1047, 0.0
    %v1600 = vmax.f32 %v1048, 0.0
    %v1601 = vmax.f32 %v1049, 0.0
    %v1602 = vmax.f32 %v1050, 0.0
    %v1603 = vmax.f32 %v1051, 0.0
    %v1604 = vmax.f32 %v1052, 0.0
    %v1605 = vmax.f32 %v1053, 0.0
    %v1606 = vmax.f32 %v1054, 0.0
    %v1607 = vmax.f32 %v1055, 0.0
    %v1608 = vmax.f32 %v1056, 0.0
    %v1609 = vmax.f32 %v1057, 0.0
    %v1610 = vmax.f32 %v1058, 0.0
    %v1611 = vmax.f32 %v1059, 0.0
    %v1612 = vmax.f32 %v1060, 0.0
    %v1613 = vmax.f32 %v1061, 0.0
    %v1614 = vmax.f32 %v1062, 0.0
    %v1615 = vmax.f32 %v1063, 0.0
    %v1616 = vmax.f32 %v1064, 0.0
    %v1617 = vmax.f32 %v1065, 0.0
    %v1618 = vmax.f32 %v1066, 0.0
    %v1619 = vmax.f32 %v1067, 0.0
    %v1620 = vmax.f32 %v1068, 0.0
    %v1621 = vmax.f32 %v1069, 0.0
    %v1622 = vmax.f32 %v1070, 0.0
    %v1623 = vmax.f32 %v1071, 0.0
    %v1624 = vmax.f32 %v1072, 0.0
    %v1625 = vmax.f32 %v1073, 0.0
    %v1626 = vmax.f32 %v1074, 0.0
    %v1627 = vmax.f32 %v1075, 0.0
    %v1628 = vmax.f32 %v1076, 0.0
    %v1629 = vmax.f32 %v1077, 0.0
    %v1630 = vmax.f32 %v1078, 0.0
    %v1631 = vmax.f32 %v1079, 0.0
    %v1632 = vmax.f32 %v1080, 0.0
    %v1633 = vmax.f32 %v1081, 0.0
    %v1634 = vmax.f32 %v1082, 0.0
    %v1635 = vmax.f32 %v1083, 0.0
    %v1636 = vmax.f32 %v1084, 0.0
    %v1637 = vmax.f32 %v1085, 0.0
    %v1638 = vmax.f32 %v1086, 0.0
    %v1639 = vmax.f32 %v1087, 0.0
    %v1640 = vmax.f32 %v1088, 0.0
    %v1641 = vmax.f32 %v1089, 0.0
    %v1642 = vmax.f32 %v1090, 0.0
    %v1643 = vmax.f32 %v1091, 0.0
    %v1644 = vmax.f32 %v1092, 0.0
    %v1645 = vmax.f32 %v1093, 0.0
    %v1646 = vmax.f32 %v1094, 0.0
    %v1647 = vmax.f32 %v1095, 0.0
    %v1648 = vmax.f32 %v1096, 0.0
    %v1649 = vmax.f32 %v1097, 0.0
    %v1650 = vmax.f32 %v1098, 0.0
    %v1651 = vmax.f32 %v1099, 0.0
    %v1652 = vmax.f32 %v1100, 0.0
    %v1653 = vmax.f32 %v1101, 0.0
    %v1654 = vmax.f32 %v1102, 0.0
    %v1655 = vmax.f32 %v1103, 0.0
    %v1656 = vmax.f32 %v1104, 0.0
    %v1657 = vmax.f32 %v1105, 0.0
    %v1658 = vmax.f32 %v1106, 0.0
    %v1659 = vmax.f32 %v1107, 0.0
    %v1660 = vmax.f32 %v1108, 0.0
    %v1661 = vmax.f32 %v1109, 0.0
    %v1662 = vmax.f32 %v1110, 0.0
    %v1663 = vmax.f32 %v1111, 0.0
    %v1664 = vmax.f32 %v1112, 0.0
    %v1665 = vmax.f32 %v1113, 0.0
    %v1666 = vmax.f32 %v1114, 0.0
    %v1667 = vmax.f32 %v1115, 0.0
    %v1668 = vmax.f32 %v1116, 0.0
    %v1669 = vmax.f32 %v1117, 0.0
    %v1670 = vmax.f32 %v1118, 0.0
    %vm1671 = vcmask 400384
    %v1672 = vsel %vm1671, %v1119, 0.0
    %1673 = vadd.xlane.f32.xlu0 %v1672
    %v1674 = vpop.xlane.xlu0 %1673
    %v1675 = vsel %vm1671, %v1120, 0.0
    %1676 = vadd.xlane.f32.xlu0 %v1675
    %v1677 = vpop.xlane.xlu0 %1676
    %v1678 = vsel %vm1671, %v1121, 0.0
    %1679 = vadd.xlane.f32.xlu0 %v1678
    %v1680 = vpop.xlane.xlu0 %1679
    %v1681 = vsel %vm1671, %v1122, 0.0
    %1682 = vadd.xlane.f32.xlu0 %v1681
    %v1683 = vpop.xlane.xlu0 %1682
    %v1684 = vsel %vm1671, %v1123, 0.0
    %1685 = vadd.xlane.f32.xlu0 %v1684
    %v1686 = vpop.xlane.xlu0 %1685
    %v1687 = vsel %vm1671, %v1124, 0.0
    %1688 = vadd.xlane.f32.xlu0 %v1687
    %v1689 = vpop.xlane.xlu0 %1688
    %v1690 = vsel %vm1671, %v1125, 0.0
    %1691 = vadd.xlane.f32.xlu0 %v1690
    %v1692 = vpop.xlane.xlu0 %1691
    %v1693 = vsel %vm1671, %v1126, 0.0
    %1694 = vadd.xlane.f32.xlu0 %v1693
    %v1695 = vpop.xlane.xlu0 %1694
    %v1696 = vsel %vm1671, %v1127, 0.0
    %1697 = vadd.xlane.f32.xlu0 %v1696
    %v1698 = vpop.xlane.xlu0 %1697
    %v1699 = vsel %vm1671, %v1128, 0.0
    %1700 = vadd.xlane.f32.xlu0 %v1699
    %v1701 = vpop.xlane.xlu0 %1700
    %v1702 = vsel %vm1671, %v1129, 0.0
    %1703 = vadd.xlane.f32.xlu0 %v1702
    %v1704 = vpop.xlane.xlu0 %1703
    %v1705 = vsel %vm1671, %v1130, 0.0
    %1706 = vadd.xlane.f32.xlu0 %v1705
    %v1707 = vpop.xlane.xlu0 %1706
    %v1708 = vsel %vm1671, %v1131, 0.0
    %1709 = vadd.xlane.f32.xlu0 %v1708
    %v1710 = vpop.xlane.xlu0 %1709
    %v1711 = vsel %vm1671, %v1132, 0.0
    %1712 = vadd.xlane.f32.xlu0 %v1711
    %v1713 = vpop.xlane.xlu0 %1712
    %v1714 = vsel %vm1671, %v1133, 0.0
    %1715 = vadd.xlane.f32.xlu0 %v1714
    %v1716 = vpop.xlane.xlu0 %1715
    %v1717 = vsel %vm1671, %v1134, 0.0
    %1718 = vadd.xlane.f32.xlu0 %v1717
    %v1719 = vpop.xlane.xlu0 %1718
    %v1720 = vsel %vm1671, %v1135, 0.0
    %1721 = vadd.xlane.f32.xlu0 %v1720
    %v1722 = vpop.xlane.xlu0 %1721
    %v1723 = vsel %vm1671, %v1136, 0.0
    %1724 = vadd.xlane.f32.xlu0 %v1723
    %v1725 = vpop.xlane.xlu0 %1724
    %v1726 = vsel %vm1671, %v1137, 0.0
    %1727 = vadd.xlane.f32.xlu0 %v1726
    %v1728 = vpop.xlane.xlu0 %1727
    %v1729 = vsel %vm1671, %v1138, 0.0
    %1730 = vadd.xlane.f32.xlu0 %v1729
    %v1731 = vpop.xlane.xlu0 %1730
    %v1732 = vsel %vm1671, %v1139, 0.0
    %1733 = vadd.xlane.f32.xlu0 %v1732
    %v1734 = vpop.xlane.xlu0 %1733
    %v1735 = vsel %vm1671, %v1140, 0.0
    %1736 = vadd.xlane.f32.xlu0 %v1735
    %v1737 = vpop.xlane.xlu0 %1736
    %v1738 = vsel %vm1671, %v1141, 0.0
    %1739 = vadd.xlane.f32.xlu0 %v1738
    %v1740 = vpop.xlane.xlu0 %1739
    %v1741 = vsel %vm1671, %v1142, 0.0
    %1742 = vadd.xlane.f32.xlu0 %v1741
    %v1743 = vpop.xlane.xlu0 %1742
    %v1744 = vsel %vm1671, %v1143, 0.0
    %1745 = vadd.xlane.f32.xlu0 %v1744
    %v1746 = vpop.xlane.xlu0 %1745
    %v1747 = vsel %vm1671, %v1144, 0.0
    %1748 = vadd.xlane.f32.xlu0 %v1747
    %v1749 = vpop.xlane.xlu0 %1748
    %v1750 = vsel %vm1671, %v1145, 0.0
    %1751 = vadd.xlane.f32.xlu0 %v1750
    %v1752 = vpop.xlane.xlu0 %1751
    %v1753 = vsel %vm1671, %v1146, 0.0
    %1754 = vadd.xlane.f32.xlu0 %v1753
    %v1755 = vpop.xlane.xlu0 %1754
    %v1756 = vsel %vm1671, %v1147, 0.0
    %1757 = vadd.xlane.f32.xlu0 %v1756
    %v1758 = vpop.xlane.xlu0 %1757
    %v1759 = vsel %vm1671, %v1148, 0.0
    %1760 = vadd.xlane.f32.xlu0 %v1759
    %v1761 = vpop.xlane.xlu0 %1760
    %v1762 = vsel %vm1671, %v1149, 0.0
    %1763 = vadd.xlane.f32.xlu0 %v1762
    %v1764 = vpop.xlane.xlu0 %1763
    %v1765 = vsel %vm1671, %v1150, 0.0
    %1766 = vadd.xlane.f32.xlu0 %v1765
    %v1767 = vpop.xlane.xlu0 %1766
    %v1768 = vsel %vm1671, %v1151, 0.0
    %1769 = vadd.xlane.f32.xlu0 %v1768
    %v1770 = vpop.xlane.xlu0 %1769
    %v1771 = vsel %vm1671, %v1152, 0.0
    %1772 = vadd.xlane.f32.xlu0 %v1771
    %v1773 = vpop.xlane.xlu0 %1772
    %v1774 = vsel %vm1671, %v1153, 0.0
    %1775 = vadd.xlane.f32.xlu0 %v1774
    %v1776 = vpop.xlane.xlu0 %1775
    %v1777 = vsel %vm1671, %v1154, 0.0
    %1778 = vadd.xlane.f32.xlu0 %v1777
    %v1779 = vpop.xlane.xlu0 %1778
    %v1780 = vsel %vm1671, %v1155, 0.0
    %1781 = vadd.xlane.f32.xlu0 %v1780
    %v1782 = vpop.xlane.xlu0 %1781
    %v1783 = vsel %vm1671, %v1156, 0.0
    %1784 = vadd.xlane.f32.xlu0 %v1783
    %v1785 = vpop.xlane.xlu0 %1784
    %v1786 = vsel %vm1671, %v1157, 0.0
    %1787 = vadd.xlane.f32.xlu0 %v1786
    %v1788 = vpop.xlane.xlu0 %1787
    %v1789 = vsel %vm1671, %v1158, 0.0
    %1790 = vadd.xlane.f32.xlu0 %v1789
    %v1791 = vpop.xlane.xlu0 %1790
    %v1792 = vsel %vm1671, %v1159, 0.0
    %1793 = vadd.xlane.f32.xlu0 %v1792
    %v1794 = vpop.xlane.xlu0 %1793
    %v1795 = vsel %vm1671, %v1160, 0.0
    %1796 = vadd.xlane.f32.xlu0 %v1795
    %v1797 = vpop.xlane.xlu0 %1796
    %v1798 = vsel %vm1671, %v1161, 0.0
    %1799 = vadd.xlane.f32.xlu0 %v1798
    %v1800 = vpop.xlane.xlu0 %1799
    %v1801 = vsel %vm1671, %v1162, 0.0
    %1802 = vadd.xlane.f32.xlu0 %v1801
    %v1803 = vpop.xlane.xlu0 %1802
    %v1804 = vsel %vm1671, %v1163, 0.0
    %1805 = vadd.xlane.f32.xlu0 %v1804
    %v1806 = vpop.xlane.xlu0 %1805
    %v1807 = vsel %vm1671, %v1164, 0.0
    %1808 = vadd.xlane.f32.xlu0 %v1807
    %v1809 = vpop.xlane.xlu0 %1808
    %v1810 = vsel %vm1671, %v1165, 0.0
    %1811 = vadd.xlane.f32.xlu0 %v1810
    %v1812 = vpop.xlane.xlu0 %1811
    %v1813 = vsel %vm1671, %v1166, 0.0
    %1814 = vadd.xlane.f32.xlu0 %v1813
    %v1815 = vpop.xlane.xlu0 %1814
    %v1816 = vsel %vm1671, %v1167, 0.0
    %1817 = vadd.xlane.f32.xlu0 %v1816
    %v1818 = vpop.xlane.xlu0 %1817
    %v1819 = vsel %vm1671, %v1168, 0.0
    %1820 = vadd.xlane.f32.xlu0 %v1819
    %v1821 = vpop.xlane.xlu0 %1820
    %v1822 = vsel %vm1671, %v1169, 0.0
    %1823 = vadd.xlane.f32.xlu0 %v1822
    %v1824 = vpop.xlane.xlu0 %1823
    %v1825 = vsel %vm1671, %v1170, 0.0
    %1826 = vadd.xlane.f32.xlu0 %v1825
    %v1827 = vpop.xlane.xlu0 %1826
    %v1828 = vsel %vm1671, %v1171, 0.0
    %1829 = vadd.xlane.f32.xlu0 %v1828
    %v1830 = vpop.xlane.xlu0 %1829
    %v1831 = vsel %vm1671, %v1172, 0.0
    %1832 = vadd.xlane.f32.xlu0 %v1831
    %v1833 = vpop.xlane.xlu0 %1832
    %v1834 = vsel %vm1671, %v1173, 0.0
    %1835 = vadd.xlane.f32.xlu0 %v1834
    %v1836 = vpop.xlane.xlu0 %1835
    %v1837 = vsel %vm1671, %v1174, 0.0
    %1838 = vadd.xlane.f32.xlu0 %v1837
    %v1839 = vpop.xlane.xlu0 %1838
    %v1840 = vsel %vm1671, %v1175, 0.0
    %1841 = vadd.xlane.f32.xlu0 %v1840
    %v1842 = vpop.xlane.xlu0 %1841
    %v1843 = vsel %vm1671, %v1176, 0.0
    %1844 = vadd.xlane.f32.xlu0 %v1843
    %v1845 = vpop.xlane.xlu0 %1844
    %v1846 = vsel %vm1671, %v1177, 0.0
    %1847 = vadd.xlane.f32.xlu0 %v1846
    %v1848 = vpop.xlane.xlu0 %1847
    %v1849 = vsel %vm1671, %v1178, 0.0
    %1850 = vadd.xlane.f32.xlu0 %v1849
    %v1851 = vpop.xlane.xlu0 %1850
    %v1852 = vsel %vm1671, %v1179, 0.0
    %1853 = vadd.xlane.f32.xlu0 %v1852
    %v1854 = vpop.xlane.xlu0 %1853
    %v1855 = vsel %vm1671, %v1180, 0.0
    %1856 = vadd.xlane.f32.xlu0 %v1855
    %v1857 = vpop.xlane.xlu0 %1856
    %v1858 = vsel %vm1671, %v1181, 0.0
    %1859 = vadd.xlane.f32.xlu0 %v1858
    %v1860 = vpop.xlane.xlu0 %1859
    %v1861 = vsel %vm1671, %v1182, 0.0
    %1862 = vadd.xlane.f32.xlu0 %v1861
    %v1863 = vpop.xlane.xlu0 %1862
    %v1864 = vsel %vm1671, %v1183, 0.0
    %1865 = vadd.xlane.f32.xlu0 %v1864
    %v1866 = vpop.xlane.xlu0 %1865
    %v1867 = vsel %vm1671, %v1184, 0.0
    %1868 = vadd.xlane.f32.xlu0 %v1867
    %v1869 = vpop.xlane.xlu0 %1868
    %v1870 = vsel %vm1671, %v1185, 0.0
    %1871 = vadd.xlane.f32.xlu0 %v1870
    %v1872 = vpop.xlane.xlu0 %1871
    %v1873 = vsel %vm1671, %v1186, 0.0
    %1874 = vadd.xlane.f32.xlu0 %v1873
    %v1875 = vpop.xlane.xlu0 %1874
    %v1876 = vsel %vm1671, %v1187, 0.0
    %1877 = vadd.xlane.f32.xlu0 %v1876
    %v1878 = vpop.xlane.xlu0 %1877
    %v1879 = vsel %vm1671, %v1188, 0.0
    %1880 = vadd.xlane.f32.xlu0 %v1879
    %v1881 = vpop.xlane.xlu0 %1880
    %v1882 = vsel %vm1671, %v1189, 0.0
    %1883 = vadd.xlane.f32.xlu0 %v1882
    %v1884 = vpop.xlane.xlu0 %1883
    %v1885 = vsel %vm1671, %v1190, 0.0
    %1886 = vadd.xlane.f32.xlu0 %v1885
    %v1887 = vpop.xlane.xlu0 %1886
    %v1888 = vsel %vm1671, %v1191, 0.0
    %1889 = vadd.xlane.f32.xlu0 %v1888
    %v1890 = vpop.xlane.xlu0 %1889
    %v1891 = vsel %vm1671, %v1192, 0.0
    %1892 = vadd.xlane.f32.xlu0 %v1891
    %v1893 = vpop.xlane.xlu0 %1892
    %v1894 = vsel %vm1671, %v1193, 0.0
    %1895 = vadd.xlane.f32.xlu0 %v1894
    %v1896 = vpop.xlane.xlu0 %1895
    %v1897 = vsel %vm1671, %v1194, 0.0
    %1898 = vadd.xlane.f32.xlu0 %v1897
    %v1899 = vpop.xlane.xlu0 %1898
    %v1900 = vsel %vm1671, %v1195, 0.0
    %1901 = vadd.xlane.f32.xlu0 %v1900
    %v1902 = vpop.xlane.xlu0 %1901
    %v1903 = vsel %vm1671, %v1196, 0.0
    %1904 = vadd.xlane.f32.xlu0 %v1903
    %v1905 = vpop.xlane.xlu0 %1904
    %v1906 = vsel %vm1671, %v1197, 0.0
    %1907 = vadd.xlane.f32.xlu0 %v1906
    %v1908 = vpop.xlane.xlu0 %1907
    %v1909 = vsel %vm1671, %v1198, 0.0
    %1910 = vadd.xlane.f32.xlu0 %v1909
    %v1911 = vpop.xlane.xlu0 %1910
    %v1912 = vsel %vm1671, %v1199, 0.0
    %1913 = vadd.xlane.f32.xlu0 %v1912
    %v1914 = vpop.xlane.xlu0 %1913
    %v1915 = vsel %vm1671, %v1200, 0.0
    %1916 = vadd.xlane.f32.xlu0 %v1915
    %v1917 = vpop.xlane.xlu0 %1916
    %v1918 = vsel %vm1671, %v1201, 0.0
    %1919 = vadd.xlane.f32.xlu0 %v1918
    %v1920 = vpop.xlane.xlu0 %1919
    %v1921 = vsel %vm1671, %v1202, 0.0
    %1922 = vadd.xlane.f32.xlu0 %v1921
    %v1923 = vpop.xlane.xlu0 %1922
    %v1924 = vsel %vm1671, %v1203, 0.0
    %1925 = vadd.xlane.f32.xlu0 %v1924
    %v1926 = vpop.xlane.xlu0 %1925
    %v1927 = vsel %vm1671, %v1204, 0.0
    %1928 = vadd.xlane.f32.xlu0 %v1927
    %v1929 = vpop.xlane.xlu0 %1928
    %v1930 = vsel %vm1671, %v1205, 0.0
    %1931 = vadd.xlane.f32.xlu0 %v1930
    %v1932 = vpop.xlane.xlu0 %1931
    %v1933 = vsel %vm1671, %v1206, 0.0
    %1934 = vadd.xlane.f32.xlu0 %v1933
    %v1935 = vpop.xlane.xlu0 %1934
    %v1936 = vsel %vm1671, %v1207, 0.0
    %1937 = vadd.xlane.f32.xlu0 %v1936
    %v1938 = vpop.xlane.xlu0 %1937
    %v1939 = vsel %vm1671, %v1208, 0.0
    %1940 = vadd.xlane.f32.xlu0 %v1939
    %v1941 = vpop.xlane.xlu0 %1940
    %v1942 = vsel %vm1671, %v1209, 0.0
    %1943 = vadd.xlane.f32.xlu0 %v1942
    %v1944 = vpop.xlane.xlu0 %1943
    %v1945 = vsel %vm1671, %v1210, 0.0
    %1946 = vadd.xlane.f32.xlu0 %v1945
    %v1947 = vpop.xlane.xlu0 %1946
    %v1948 = vsel %vm1671, %v1211, 0.0
    %1949 = vadd.xlane.f32.xlu0 %v1948
    %v1950 = vpop.xlane.xlu0 %1949
    %v1951 = vsel %vm1671, %v1212, 0.0
    %1952 = vadd.xlane.f32.xlu0 %v1951
    %v1953 = vpop.xlane.xlu0 %1952
    %v1954 = vsel %vm1671, %v1213, 0.0
    %1955 = vadd.xlane.f32.xlu0 %v1954
    %v1956 = vpop.xlane.xlu0 %1955
    %v1957 = vsel %vm1671, %v1214, 0.0
    %1958 = vadd.xlane.f32.xlu0 %v1957
    %v1959 = vpop.xlane.xlu0 %1958
    %v1960 = vsel %vm1671, %v1215, 0.0
    %1961 = vadd.xlane.f32.xlu0 %v1960
    %v1962 = vpop.xlane.xlu0 %1961
    %v1963 = vsel %vm1671, %v1216, 0.0
    %1964 = vadd.xlane.f32.xlu0 %v1963
    %v1965 = vpop.xlane.xlu0 %1964
    %v1966 = vsel %vm1671, %v1217, 0.0
    %1967 = vadd.xlane.f32.xlu0 %v1966
    %v1968 = vpop.xlane.xlu0 %1967
    %v1969 = vsel %vm1671, %v1218, 0.0
    %1970 = vadd.xlane.f32.xlu0 %v1969
    %v1971 = vpop.xlane.xlu0 %1970
    %v1972 = vsel %vm1671, %v1219, 0.0
    %1973 = vadd.xlane.f32.xlu0 %v1972
    %v1974 = vpop.xlane.xlu0 %1973
    %v1975 = vsel %vm1671, %v1220, 0.0
    %1976 = vadd.xlane.f32.xlu0 %v1975
    %v1977 = vpop.xlane.xlu0 %1976
    %v1978 = vsel %vm1671, %v1221, 0.0
    %1979 = vadd.xlane.f32.xlu0 %v1978
    %v1980 = vpop.xlane.xlu0 %1979
    %v1981 = vsel %vm1671, %v1222, 0.0
    %1982 = vadd.xlane.f32.xlu0 %v1981
    %v1983 = vpop.xlane.xlu0 %1982
    %v1984 = vsel %vm1671, %v1223, 0.0
    %1985 = vadd.xlane.f32.xlu0 %v1984
    %v1986 = vpop.xlane.xlu0 %1985
    %v1987 = vsel %vm1671, %v1224, 0.0
    %1988 = vadd.xlane.f32.xlu0 %v1987
    %v1989 = vpop.xlane.xlu0 %1988
    %v1990 = vsel %vm1671, %v1225, 0.0
    %1991 = vadd.xlane.f32.xlu0 %v1990
    %v1992 = vpop.xlane.xlu0 %1991
    %v1993 = vsel %vm1671, %v1226, 0.0
    %1994 = vadd.xlane.f32.xlu0 %v1993
    %v1995 = vpop.xlane.xlu0 %1994
    %v1996 = vsel %vm1671, %v1227, 0.0
    %1997 = vadd.xlane.f32.xlu0 %v1996
    %v1998 = vpop.xlane.xlu0 %1997
    %v1999 = vsel %vm1671, %v1228, 0.0
    %2000 = vadd.xlane.f32.xlu0 %v1999
    %v2001 = vpop.xlane.xlu0 %2000
    %v2002 = vsel %vm1671, %v1229, 0.0
    %2003 = vadd.xlane.f32.xlu0 %v2002
    %v2004 = vpop.xlane.xlu0 %2003
    %v2005 = vsel %vm1671, %v1230, 0.0
    %2006 = vadd.xlane.f32.xlu0 %v2005
    %v2007 = vpop.xlane.xlu0 %2006
    %v2008 = vsel %vm1671, %v1231, 0.0
    %2009 = vadd.xlane.f32.xlu0 %v2008
    %v2010 = vpop.xlane.xlu0 %2009
    %v2011 = vsel %vm1671, %v1232, 0.0
    %2012 = vadd.xlane.f32.xlu0 %v2011
    %v2013 = vpop.xlane.xlu0 %2012
    %v2014 = vsel %vm1671, %v1233, 0.0
    %2015 = vadd.xlane.f32.xlu0 %v2014
    %v2016 = vpop.xlane.xlu0 %2015
    %v2017 = vsel %vm1671, %v1234, 0.0
    %2018 = vadd.xlane.f32.xlu0 %v2017
    %v2019 = vpop.xlane.xlu0 %2018
    %v2020 = vsel %vm1671, %v1235, 0.0
    %2021 = vadd.xlane.f32.xlu0 %v2020
    %v2022 = vpop.xlane.xlu0 %2021
    %v2023 = vsel %vm1671, %v1236, 0.0
    %2024 = vadd.xlane.f32.xlu0 %v2023
    %v2025 = vpop.xlane.xlu0 %2024
    %v2026 = vsel %vm1671, %v1237, 0.0
    %2027 = vadd.xlane.f32.xlu0 %v2026
    %v2028 = vpop.xlane.xlu0 %2027
    %v2029 = vsel %vm1671, %v1238, 0.0
    %2030 = vadd.xlane.f32.xlu0 %v2029
    %v2031 = vpop.xlane.xlu0 %2030
    %v2032 = vsel %vm1671, %v1239, 0.0
    %2033 = vadd.xlane.f32.xlu0 %v2032
    %v2034 = vpop.xlane.xlu0 %2033
    %v2035 = vsel %vm1671, %v1240, 0.0
    %2036 = vadd.xlane.f32.xlu0 %v2035
    %v2037 = vpop.xlane.xlu0 %2036
    %v2038 = vsel %vm1671, %v1241, 0.0
    %2039 = vadd.xlane.f32.xlu0 %v2038
    %v2040 = vpop.xlane.xlu0 %2039
    %v2041 = vsel %vm1671, %v1242, 0.0
    %2042 = vadd.xlane.f32.xlu0 %v2041
    %v2043 = vpop.xlane.xlu0 %2042
    %v2044 = vsel %vm1671, %v1243, 0.0
    %2045 = vadd.xlane.f32.xlu0 %v2044
    %v2046 = vpop.xlane.xlu0 %2045
    %v2047 = vsel %vm1671, %v1244, 0.0
    %2048 = vadd.xlane.f32.xlu0 %v2047
    %v2049 = vpop.xlane.xlu0 %2048
    %v2050 = vsel %vm1671, %v1245, 0.0
    %2051 = vadd.xlane.f32.xlu0 %v2050
    %v2052 = vpop.xlane.xlu0 %2051
    %v2053 = vsel %vm1671, %v1246, 0.0
    %2054 = vadd.xlane.f32.xlu0 %v2053
    %v2055 = vpop.xlane.xlu0 %2054
    %v2056 = vsel %vm1671, %v1247, 0.0
    %2057 = vadd.xlane.f32.xlu0 %v2056
    %v2058 = vpop.xlane.xlu0 %2057
    %v2059 = vsel %vm1671, %v1248, 0.0
    %2060 = vadd.xlane.f32.xlu0 %v2059
    %v2061 = vpop.xlane.xlu0 %2060
    %v2062 = vsel %vm1671, %v1249, 0.0
    %2063 = vadd.xlane.f32.xlu0 %v2062
    %v2064 = vpop.xlane.xlu0 %2063
    %v2065 = vsel %vm1671, %v1250, 0.0
    %2066 = vadd.xlane.f32.xlu0 %v2065
    %v2067 = vpop.xlane.xlu0 %2066
    %v2068 = vsel %vm1671, %v1251, 0.0
    %2069 = vadd.xlane.f32.xlu0 %v2068
    %v2070 = vpop.xlane.xlu0 %2069
    %v2071 = vsel %vm1671, %v1252, 0.0
    %2072 = vadd.xlane.f32.xlu0 %v2071
    %v2073 = vpop.xlane.xlu0 %2072
    %v2074 = vsel %vm1671, %v1253, 0.0
    %2075 = vadd.xlane.f32.xlu0 %v2074
    %v2076 = vpop.xlane.xlu0 %2075
    %v2077 = vsel %vm1671, %v1254, 0.0
    %2078 = vadd.xlane.f32.xlu0 %v2077
    %v2079 = vpop.xlane.xlu0 %2078
    %v2080 = vsel %vm1671, %v1255, 0.0
    %2081 = vadd.xlane.f32.xlu0 %v2080
    %v2082 = vpop.xlane.xlu0 %2081
    %v2083 = vsel %vm1671, %v1256, 0.0
    %2084 = vadd.xlane.f32.xlu0 %v2083
    %v2085 = vpop.xlane.xlu0 %2084
    %v2086 = vsel %vm1671, %v1257, 0.0
    %2087 = vadd.xlane.f32.xlu0 %v2086
    %v2088 = vpop.xlane.xlu0 %2087
    %v2089 = vsel %vm1671, %v1258, 0.0
    %2090 = vadd.xlane.f32.xlu0 %v2089
    %v2091 = vpop.xlane.xlu0 %2090
    %v2092 = vsel %vm1671, %v1259, 0.0
    %2093 = vadd.xlane.f32.xlu0 %v2092
    %v2094 = vpop.xlane.xlu0 %2093
    %v2095 = vsel %vm1671, %v1260, 0.0
    %2096 = vadd.xlane.f32.xlu0 %v2095
    %v2097 = vpop.xlane.xlu0 %2096
    %v2098 = vsel %vm1671, %v1261, 0.0
    %2099 = vadd.xlane.f32.xlu0 %v2098
    %v2100 = vpop.xlane.xlu0 %2099
    %v2101 = vsel %vm1671, %v1262, 0.0
    %2102 = vadd.xlane.f32.xlu0 %v2101
    %v2103 = vpop.xlane.xlu0 %2102
    %v2104 = vsel %vm1671, %v1263, 0.0
    %2105 = vadd.xlane.f32.xlu0 %v2104
    %v2106 = vpop.xlane.xlu0 %2105
    %v2107 = vsel %vm1671, %v1264, 0.0
    %2108 = vadd.xlane.f32.xlu0 %v2107
    %v2109 = vpop.xlane.xlu0 %2108
    %v2110 = vsel %vm1671, %v1265, 0.0
    %2111 = vadd.xlane.f32.xlu0 %v2110
    %v2112 = vpop.xlane.xlu0 %2111
    %v2113 = vsel %vm1671, %v1266, 0.0
    %2114 = vadd.xlane.f32.xlu0 %v2113
    %v2115 = vpop.xlane.xlu0 %2114
    %v2116 = vsel %vm1671, %v1267, 0.0
    %2117 = vadd.xlane.f32.xlu0 %v2116
    %v2118 = vpop.xlane.xlu0 %2117
    %v2119 = vsel %vm1671, %v1268, 0.0
    %2120 = vadd.xlane.f32.xlu0 %v2119
    %v2121 = vpop.xlane.xlu0 %2120
    %v2122 = vsel %vm1671, %v1269, 0.0
    %2123 = vadd.xlane.f32.xlu0 %v2122
    %v2124 = vpop.xlane.xlu0 %2123
    %v2125 = vsel %vm1671, %v1270, 0.0
    %2126 = vadd.xlane.f32.xlu0 %v2125
    %v2127 = vpop.xlane.xlu0 %2126
    %v2128 = vsel %vm1671, %v1271, 0.0
    %2129 = vadd.xlane.f32.xlu0 %v2128
    %v2130 = vpop.xlane.xlu0 %2129
    %v2131 = vsel %vm1671, %v1272, 0.0
    %2132 = vadd.xlane.f32.xlu0 %v2131
    %v2133 = vpop.xlane.xlu0 %2132
    %v2134 = vsel %vm1671, %v1273, 0.0
    %2135 = vadd.xlane.f32.xlu0 %v2134
    %v2136 = vpop.xlane.xlu0 %2135
    %v2137 = vsel %vm1671, %v1274, 0.0
    %2138 = vadd.xlane.f32.xlu0 %v2137
    %v2139 = vpop.xlane.xlu0 %2138
    %v2140 = vsel %vm1671, %v1275, 0.0
    %2141 = vadd.xlane.f32.xlu0 %v2140
    %v2142 = vpop.xlane.xlu0 %2141
    %v2143 = vsel %vm1671, %v1276, 0.0
    %2144 = vadd.xlane.f32.xlu0 %v2143
    %v2145 = vpop.xlane.xlu0 %2144
    %v2146 = vsel %vm1671, %v1277, 0.0
    %2147 = vadd.xlane.f32.xlu0 %v2146
    %v2148 = vpop.xlane.xlu0 %2147
    %v2149 = vsel %vm1671, %v1278, 0.0
    %2150 = vadd.xlane.f32.xlu0 %v2149
    %v2151 = vpop.xlane.xlu0 %2150
    %v2152 = vsel %vm1671, %v1279, 0.0
    %2153 = vadd.xlane.f32.xlu0 %v2152
    %v2154 = vpop.xlane.xlu0 %2153
    %v2155 = vsel %vm1671, %v1280, 0.0
    %2156 = vadd.xlane.f32.xlu0 %v2155
    %v2157 = vpop.xlane.xlu0 %2156
    %v2158 = vsel %vm1671, %v1281, 0.0
    %2159 = vadd.xlane.f32.xlu0 %v2158
    %v2160 = vpop.xlane.xlu0 %2159
    %v2161 = vsel %vm1671, %v1282, 0.0
    %2162 = vadd.xlane.f32.xlu0 %v2161
    %v2163 = vpop.xlane.xlu0 %2162
    %v2164 = vsel %vm1671, %v1283, 0.0
    %2165 = vadd.xlane.f32.xlu0 %v2164
    %v2166 = vpop.xlane.xlu0 %2165
    %v2167 = vsel %vm1671, %v1284, 0.0
    %2168 = vadd.xlane.f32.xlu0 %v2167
    %v2169 = vpop.xlane.xlu0 %2168
    %v2170 = vsel %vm1671, %v1285, 0.0
    %2171 = vadd.xlane.f32.xlu0 %v2170
    %v2172 = vpop.xlane.xlu0 %2171
    %v2173 = vsel %vm1671, %v1286, 0.0
    %2174 = vadd.xlane.f32.xlu0 %v2173
    %v2175 = vpop.xlane.xlu0 %2174
    %v2176 = vsel %vm1671, %v1287, 0.0
    %2177 = vadd.xlane.f32.xlu0 %v2176
    %v2178 = vpop.xlane.xlu0 %2177
    %v2179 = vsel %vm1671, %v1288, 0.0
    %2180 = vadd.xlane.f32.xlu0 %v2179
    %v2181 = vpop.xlane.xlu0 %2180
    %v2182 = vsel %vm1671, %v1289, 0.0
    %2183 = vadd.xlane.f32.xlu0 %v2182
    %v2184 = vpop.xlane.xlu0 %2183
    %v2185 = vsel %vm1671, %v1290, 0.0
    %2186 = vadd.xlane.f32.xlu0 %v2185
    %v2187 = vpop.xlane.xlu0 %2186
    %v2188 = vsel %vm1671, %v1291, 0.0
    %2189 = vadd.xlane.f32.xlu0 %v2188
    %v2190 = vpop.xlane.xlu0 %2189
    %v2191 = vsel %vm1671, %v1292, 0.0
    %2192 = vadd.xlane.f32.xlu0 %v2191
    %v2193 = vpop.xlane.xlu0 %2192
    %v2194 = vsel %vm1671, %v1293, 0.0
    %2195 = vadd.xlane.f32.xlu0 %v2194
    %v2196 = vpop.xlane.xlu0 %2195
    %v2197 = vsel %vm1671, %v1294, 0.0
    %2198 = vadd.xlane.f32.xlu0 %v2197
    %v2199 = vpop.xlane.xlu0 %2198
    %v2200 = vsel %vm1671, %v1295, 0.0
    %2201 = vadd.xlane.f32.xlu0 %v2200
    %v2202 = vpop.xlane.xlu0 %2201
    %v2203 = vsel %vm1671, %v1296, 0.0
    %2204 = vadd.xlane.f32.xlu0 %v2203
    %v2205 = vpop.xlane.xlu0 %2204
    %v2206 = vsel %vm1671, %v1297, 0.0
    %2207 = vadd.xlane.f32.xlu0 %v2206
    %v2208 = vpop.xlane.xlu0 %2207
    %v2209 = vsel %vm1671, %v1298, 0.0
    %2210 = vadd.xlane.f32.xlu0 %v2209
    %v2211 = vpop.xlane.xlu0 %2210
    %v2212 = vsel %vm1671, %v1299, 0.0
    %2213 = vadd.xlane.f32.xlu0 %v2212
    %v2214 = vpop.xlane.xlu0 %2213
    %v2215 = vsel %vm1671, %v1300, 0.0
    %2216 = vadd.xlane.f32.xlu0 %v2215
    %v2217 = vpop.xlane.xlu0 %2216
    %v2218 = vsel %vm1671, %v1301, 0.0
    %2219 = vadd.xlane.f32.xlu0 %v2218
    %v2220 = vpop.xlane.xlu0 %2219
    %v2221 = vsel %vm1671, %v1302, 0.0
    %2222 = vadd.xlane.f32.xlu0 %v2221
    %v2223 = vpop.xlane.xlu0 %2222
    %v2224 = vsel %vm1671, %v1303, 0.0
    %2225 = vadd.xlane.f32.xlu0 %v2224
    %v2226 = vpop.xlane.xlu0 %2225
    %v2227 = vsel %vm1671, %v1304, 0.0
    %2228 = vadd.xlane.f32.xlu0 %v2227
    %v2229 = vpop.xlane.xlu0 %2228
    %v2230 = vsel %vm1671, %v1305, 0.0
    %2231 = vadd.xlane.f32.xlu0 %v2230
    %v2232 = vpop.xlane.xlu0 %2231
    %v2233 = vsel %vm1671, %v1306, 0.0
    %2234 = vadd.xlane.f32.xlu0 %v2233
    %v2235 = vpop.xlane.xlu0 %2234
    %v2236 = vsel %vm1671, %v1307, 0.0
    %2237 = vadd.xlane.f32.xlu0 %v2236
    %v2238 = vpop.xlane.xlu0 %2237
    %v2239 = vsel %vm1671, %v1308, 0.0
    %2240 = vadd.xlane.f32.xlu0 %v2239
    %v2241 = vpop.xlane.xlu0 %2240
    %v2242 = vsel %vm1671, %v1309, 0.0
    %2243 = vadd.xlane.f32.xlu0 %v2242
    %v2244 = vpop.xlane.xlu0 %2243
    %v2245 = vsel %vm1671, %v1310, 0.0
    %2246 = vadd.xlane.f32.xlu0 %v2245
    %v2247 = vpop.xlane.xlu0 %2246
    %v2248 = vsel %vm1671, %v1311, 0.0
    %2249 = vadd.xlane.f32.xlu0 %v2248
    %v2250 = vpop.xlane.xlu0 %2249
    %v2251 = vsel %vm1671, %v1312, 0.0
    %2252 = vadd.xlane.f32.xlu0 %v2251
    %v2253 = vpop.xlane.xlu0 %2252
    %v2254 = vsel %vm1671, %v1313, 0.0
    %2255 = vadd.xlane.f32.xlu0 %v2254
    %v2256 = vpop.xlane.xlu0 %2255
    %v2257 = vsel %vm1671, %v1314, 0.0
    %2258 = vadd.xlane.f32.xlu0 %v2257
    %v2259 = vpop.xlane.xlu0 %2258
    %v2260 = vsel %vm1671, %v1315, 0.0
    %2261 = vadd.xlane.f32.xlu0 %v2260
    %v2262 = vpop.xlane.xlu0 %2261
    %v2263 = vsel %vm1671, %v1316, 0.0
    %2264 = vadd.xlane.f32.xlu0 %v2263
    %v2265 = vpop.xlane.xlu0 %2264
    %v2266 = vsel %vm1671, %v1317, 0.0
    %2267 = vadd.xlane.f32.xlu0 %v2266
    %v2268 = vpop.xlane.xlu0 %2267
    %v2269 = vsel %vm1671, %v1318, 0.0
    %2270 = vadd.xlane.f32.xlu0 %v2269
    %v2271 = vpop.xlane.xlu0 %2270
    %v2272 = vsel %vm1671, %v1319, 0.0
    %2273 = vadd.xlane.f32.xlu0 %v2272
    %v2274 = vpop.xlane.xlu0 %2273
    %v2275 = vsel %vm1671, %v1320, 0.0
    %2276 = vadd.xlane.f32.xlu0 %v2275
    %v2277 = vpop.xlane.xlu0 %2276
    %v2278 = vsel %vm1671, %v1321, 0.0
    %2279 = vadd.xlane.f32.xlu0 %v2278
    %v2280 = vpop.xlane.xlu0 %2279
    %v2281 = vsel %vm1671, %v1322, 0.0
    %2282 = vadd.xlane.f32.xlu0 %v2281
    %v2283 = vpop.xlane.xlu0 %2282
    %v2284 = vsel %vm1671, %v1323, 0.0
    %2285 = vadd.xlane.f32.xlu0 %v2284
    %v2286 = vpop.xlane.xlu0 %2285
    %v2287 = vsel %vm1671, %v1324, 0.0
    %2288 = vadd.xlane.f32.xlu0 %v2287
    %v2289 = vpop.xlane.xlu0 %2288
    %v2290 = vsel %vm1671, %v1325, 0.0
    %2291 = vadd.xlane.f32.xlu0 %v2290
    %v2292 = vpop.xlane.xlu0 %2291
    %v2293 = vsel %vm1671, %v1326, 0.0
    %2294 = vadd.xlane.f32.xlu0 %v2293
    %v2295 = vpop.xlane.xlu0 %2294
    %v2296 = vsel %vm1671, %v1327, 0.0
    %2297 = vadd.xlane.f32.xlu0 %v2296
    %v2298 = vpop.xlane.xlu0 %2297
    %v2299 = vsel %vm1671, %v1328, 0.0
    %2300 = vadd.xlane.f32.xlu0 %v2299
    %v2301 = vpop.xlane.xlu0 %2300
    %v2302 = vsel %vm1671, %v1329, 0.0
    %2303 = vadd.xlane.f32.xlu0 %v2302
    %v2304 = vpop.xlane.xlu0 %2303
    %v2305 = vsel %vm1671, %v1330, 0.0
    %2306 = vadd.xlane.f32.xlu0 %v2305
    %v2307 = vpop.xlane.xlu0 %2306
    %v2308 = vsel %vm1671, %v1331, 0.0
    %2309 = vadd.xlane.f32.xlu0 %v2308
    %v2310 = vpop.xlane.xlu0 %2309
    %v2311 = vsel %vm1671, %v1332, 0.0
    %2312 = vadd.xlane.f32.xlu0 %v2311
    %v2313 = vpop.xlane.xlu0 %2312
    %v2314 = vsel %vm1671, %v1333, 0.0
    %2315 = vadd.xlane.f32.xlu0 %v2314
    %v2316 = vpop.xlane.xlu0 %2315
    %v2317 = vsel %vm1671, %v1334, 0.0
    %2318 = vadd.xlane.f32.xlu0 %v2317
    %v2319 = vpop.xlane.xlu0 %2318
    %v2320 = vsel %vm1671, %v1335, 0.0
    %2321 = vadd.xlane.f32.xlu0 %v2320
    %v2322 = vpop.xlane.xlu0 %2321
    %v2323 = vsel %vm1671, %v1336, 0.0
    %2324 = vadd.xlane.f32.xlu0 %v2323
    %v2325 = vpop.xlane.xlu0 %2324
    %v2326 = vsel %vm1671, %v1337, 0.0
    %2327 = vadd.xlane.f32.xlu0 %v2326
    %v2328 = vpop.xlane.xlu0 %2327
    %v2329 = vsel %vm1671, %v1338, 0.0
    %2330 = vadd.xlane.f32.xlu0 %v2329
    %v2331 = vpop.xlane.xlu0 %2330
    %v2332 = vsel %vm1671, %v1339, 0.0
    %2333 = vadd.xlane.f32.xlu0 %v2332
    %v2334 = vpop.xlane.xlu0 %2333
    %v2335 = vsel %vm1671, %v1340, 0.0
    %2336 = vadd.xlane.f32.xlu0 %v2335
    %v2337 = vpop.xlane.xlu0 %2336
    %v2338 = vsel %vm1671, %v1341, 0.0
    %2339 = vadd.xlane.f32.xlu0 %v2338
    %v2340 = vpop.xlane.xlu0 %2339
    %v2341 = vsel %vm1671, %v1342, 0.0
    %2342 = vadd.xlane.f32.xlu0 %v2341
    %v2343 = vpop.xlane.xlu0 %2342
    %v2344 = vsel %vm1671, %v1343, 0.0
    %2345 = vadd.xlane.f32.xlu0 %v2344
    %v2346 = vpop.xlane.xlu0 %2345
    %v2347 = vsel %vm1671, %v1344, 0.0
    %2348 = vadd.xlane.f32.xlu0 %v2347
    %v2349 = vpop.xlane.xlu0 %2348
    %v2350 = vsel %vm1671, %v1345, 0.0
    %2351 = vadd.xlane.f32.xlu0 %v2350
    %v2352 = vpop.xlane.xlu0 %2351
    %v2353 = vsel %vm1671, %v1346, 0.0
    %2354 = vadd.xlane.f32.xlu0 %v2353
    %v2355 = vpop.xlane.xlu0 %2354
    %v2356 = vsel %vm1671, %v1347, 0.0
    %2357 = vadd.xlane.f32.xlu0 %v2356
    %v2358 = vpop.xlane.xlu0 %2357
    %v2359 = vsel %vm1671, %v1348, 0.0
    %2360 = vadd.xlane.f32.xlu0 %v2359
    %v2361 = vpop.xlane.xlu0 %2360
    %v2362 = vsel %vm1671, %v1349, 0.0
    %2363 = vadd.xlane.f32.xlu0 %v2362
    %v2364 = vpop.xlane.xlu0 %2363
    %v2365 = vsel %vm1671, %v1350, 0.0
    %2366 = vadd.xlane.f32.xlu0 %v2365
    %v2367 = vpop.xlane.xlu0 %2366
    %v2368 = vsel %vm1671, %v1351, 0.0
    %2369 = vadd.xlane.f32.xlu0 %v2368
    %v2370 = vpop.xlane.xlu0 %2369
    %v2371 = vsel %vm1671, %v1352, 0.0
    %2372 = vadd.xlane.f32.xlu0 %v2371
    %v2373 = vpop.xlane.xlu0 %2372
    %v2374 = vsel %vm1671, %v1353, 0.0
    %2375 = vadd.xlane.f32.xlu0 %v2374
    %v2376 = vpop.xlane.xlu0 %2375
    %v2377 = vsel %vm1671, %v1354, 0.0
    %2378 = vadd.xlane.f32.xlu0 %v2377
    %v2379 = vpop.xlane.xlu0 %2378
    %v2380 = vsel %vm1671, %v1355, 0.0
    %2381 = vadd.xlane.f32.xlu0 %v2380
    %v2382 = vpop.xlane.xlu0 %2381
    %v2383 = vsel %vm1671, %v1356, 0.0
    %2384 = vadd.xlane.f32.xlu0 %v2383
    %v2385 = vpop.xlane.xlu0 %2384
    %v2386 = vsel %vm1671, %v1357, 0.0
    %2387 = vadd.xlane.f32.xlu0 %v2386
    %v2388 = vpop.xlane.xlu0 %2387
    %v2389 = vsel %vm1671, %v1358, 0.0
    %2390 = vadd.xlane.f32.xlu0 %v2389
    %v2391 = vpop.xlane.xlu0 %2390
    %v2392 = vsel %vm1671, %v1359, 0.0
    %2393 = vadd.xlane.f32.xlu0 %v2392
    %v2394 = vpop.xlane.xlu0 %2393
    %v2395 = vsel %vm1671, %v1360, 0.0
    %2396 = vadd.xlane.f32.xlu0 %v2395
    %v2397 = vpop.xlane.xlu0 %2396
    %v2398 = vsel %vm1671, %v1361, 0.0
    %2399 = vadd.xlane.f32.xlu0 %v2398
    %v2400 = vpop.xlane.xlu0 %2399
    %v2401 = vsel %vm1671, %v1362, 0.0
    %2402 = vadd.xlane.f32.xlu0 %v2401
    %v2403 = vpop.xlane.xlu0 %2402
    %v2404 = vsel %vm1671, %v1363, 0.0
    %2405 = vadd.xlane.f32.xlu0 %v2404
    %v2406 = vpop.xlane.xlu0 %2405
    %v2407 = vsel %vm1671, %v1364, 0.0
    %2408 = vadd.xlane.f32.xlu0 %v2407
    %v2409 = vpop.xlane.xlu0 %2408
    %v2410 = vsel %vm1671, %v1365, 0.0
    %2411 = vadd.xlane.f32.xlu0 %v2410
    %v2412 = vpop.xlane.xlu0 %2411
    %v2413 = vsel %vm1671, %v1366, 0.0
    %2414 = vadd.xlane.f32.xlu0 %v2413
    %v2415 = vpop.xlane.xlu0 %2414
    %v2416 = vsel %vm1671, %v1367, 0.0
    %2417 = vadd.xlane.f32.xlu0 %v2416
    %v2418 = vpop.xlane.xlu0 %2417
    %v2419 = vsel %vm1671, %v1368, 0.0
    %2420 = vadd.xlane.f32.xlu0 %v2419
    %v2421 = vpop.xlane.xlu0 %2420
    %v2422 = vsel %vm1671, %v1369, 0.0
    %2423 = vadd.xlane.f32.xlu0 %v2422
    %v2424 = vpop.xlane.xlu0 %2423
    %v2425 = vsel %vm1671, %v1370, 0.0
    %2426 = vadd.xlane.f32.xlu0 %v2425
    %v2427 = vpop.xlane.xlu0 %2426
    %v2428 = vsel %vm1671, %v1371, 0.0
    %2429 = vadd.xlane.f32.xlu0 %v2428
    %v2430 = vpop.xlane.xlu0 %2429
    %v2431 = vsel %vm1671, %v1372, 0.0
    %2432 = vadd.xlane.f32.xlu0 %v2431
    %v2433 = vpop.xlane.xlu0 %2432
    %v2434 = vsel %vm1671, %v1373, 0.0
    %2435 = vadd.xlane.f32.xlu0 %v2434
    %v2436 = vpop.xlane.xlu0 %2435
    %v2437 = vsel %vm1671, %v1374, 0.0
    %2438 = vadd.xlane.f32.xlu0 %v2437
    %v2439 = vpop.xlane.xlu0 %2438
    %v2440 = vsel %vm1671, %v1375, 0.0
    %2441 = vadd.xlane.f32.xlu0 %v2440
    %v2442 = vpop.xlane.xlu0 %2441
    %v2443 = vsel %vm1671, %v1376, 0.0
    %2444 = vadd.xlane.f32.xlu0 %v2443
    %v2445 = vpop.xlane.xlu0 %2444
    %v2446 = vsel %vm1671, %v1377, 0.0
    %2447 = vadd.xlane.f32.xlu0 %v2446
    %v2448 = vpop.xlane.xlu0 %2447
    %v2449 = vsel %vm1671, %v1378, 0.0
    %2450 = vadd.xlane.f32.xlu0 %v2449
    %v2451 = vpop.xlane.xlu0 %2450
    %v2452 = vsel %vm1671, %v1379, 0.0
    %2453 = vadd.xlane.f32.xlu0 %v2452
    %v2454 = vpop.xlane.xlu0 %2453
    %v2455 = vsel %vm1671, %v1380, 0.0
    %2456 = vadd.xlane.f32.xlu0 %v2455
    %v2457 = vpop.xlane.xlu0 %2456
    %v2458 = vsel %vm1671, %v1381, 0.0
    %2459 = vadd.xlane.f32.xlu0 %v2458
    %v2460 = vpop.xlane.xlu0 %2459
    %v2461 = vsel %vm1671, %v1382, 0.0
    %2462 = vadd.xlane.f32.xlu0 %v2461
    %v2463 = vpop.xlane.xlu0 %2462
    %v2464 = vsel %vm1671, %v1383, 0.0
    %2465 = vadd.xlane.f32.xlu0 %v2464
    %v2466 = vpop.xlane.xlu0 %2465
    %v2467 = vsel %vm1671, %v1384, 0.0
    %2468 = vadd.xlane.f32.xlu0 %v2467
    %v2469 = vpop.xlane.xlu0 %2468
    %v2470 = vsel %vm1671, %v1385, 0.0
    %2471 = vadd.xlane.f32.xlu0 %v2470
    %v2472 = vpop.xlane.xlu0 %2471
    %v2473 = vsel %vm1671, %v1386, 0.0
    %2474 = vadd.xlane.f32.xlu0 %v2473
    %v2475 = vpop.xlane.xlu0 %2474
    %v2476 = vsel %vm1671, %v1387, 0.0
    %2477 = vadd.xlane.f32.xlu0 %v2476
    %v2478 = vpop.xlane.xlu0 %2477
    %v2479 = vsel %vm1671, %v1388, 0.0
    %2480 = vadd.xlane.f32.xlu0 %v2479
    %v2481 = vpop.xlane.xlu0 %2480
    %v2482 = vsel %vm1671, %v1389, 0.0
    %2483 = vadd.xlane.f32.xlu0 %v2482
    %v2484 = vpop.xlane.xlu0 %2483
    %v2485 = vsel %vm1671, %v1390, 0.0
    %2486 = vadd.xlane.f32.xlu0 %v2485
    %v2487 = vpop.xlane.xlu0 %2486
    %v2488 = vsel %vm1671, %v1391, 0.0
    %2489 = vadd.xlane.f32.xlu0 %v2488
    %v2490 = vpop.xlane.xlu0 %2489
    %v2491 = vsel %vm1671, %v1392, 0.0
    %2492 = vadd.xlane.f32.xlu0 %v2491
    %v2493 = vpop.xlane.xlu0 %2492
    %v2494 = vsel %vm1671, %v1393, 0.0
    %2495 = vadd.xlane.f32.xlu0 %v2494
    %v2496 = vpop.xlane.xlu0 %2495
    %v2497 = vsel %vm1671, %v1394, 0.0
    %2498 = vadd.xlane.f32.xlu0 %v2497
    %v2499 = vpop.xlane.xlu0 %2498
    %v2500 = vsel %vm1671, %v1395, 0.0
    %2501 = vadd.xlane.f32.xlu0 %v2500
    %v2502 = vpop.xlane.xlu0 %2501
    %v2503 = vsel %vm1671, %v1396, 0.0
    %2504 = vadd.xlane.f32.xlu0 %v2503
    %v2505 = vpop.xlane.xlu0 %2504
    %v2506 = vsel %vm1671, %v1397, 0.0
    %2507 = vadd.xlane.f32.xlu0 %v2506
    %v2508 = vpop.xlane.xlu0 %2507
    %v2509 = vsel %vm1671, %v1398, 0.0
    %2510 = vadd.xlane.f32.xlu0 %v2509
    %v2511 = vpop.xlane.xlu0 %2510
    %v2512 = vsel %vm1671, %v1399, 0.0
    %2513 = vadd.xlane.f32.xlu0 %v2512
    %v2514 = vpop.xlane.xlu0 %2513
    %v2515 = vsel %vm1671, %v1400, 0.0
    %2516 = vadd.xlane.f32.xlu0 %v2515
    %v2517 = vpop.xlane.xlu0 %2516
    %v2518 = vsel %vm1671, %v1401, 0.0
    %2519 = vadd.xlane.f32.xlu0 %v2518
    %v2520 = vpop.xlane.xlu0 %2519
    %v2521 = vsel %vm1671, %v1402, 0.0
    %2522 = vadd.xlane.f32.xlu0 %v2521
    %v2523 = vpop.xlane.xlu0 %2522
    %v2524 = vsel %vm1671, %v1403, 0.0
    %2525 = vadd.xlane.f32.xlu0 %v2524
    %v2526 = vpop.xlane.xlu0 %2525
    %v2527 = vsel %vm1671, %v1404, 0.0
    %2528 = vadd.xlane.f32.xlu0 %v2527
    %v2529 = vpop.xlane.xlu0 %2528
    %v2530 = vsel %vm1671, %v1405, 0.0
    %2531 = vadd.xlane.f32.xlu0 %v2530
    %v2532 = vpop.xlane.xlu0 %2531
    %v2533 = vsel %vm1671, %v1406, 0.0
    %2534 = vadd.xlane.f32.xlu0 %v2533
    %v2535 = vpop.xlane.xlu0 %2534
    %v2536 = vsel %vm1671, %v1407, 0.0
    %2537 = vadd.xlane.f32.xlu0 %v2536
    %v2538 = vpop.xlane.xlu0 %2537
    %v2539 = vsel %vm1671, %v1408, 0.0
    %2540 = vadd.xlane.f32.xlu0 %v2539
    %v2541 = vpop.xlane.xlu0 %2540
    %v2542 = vsel %vm1671, %v1409, 0.0
    %2543 = vadd.xlane.f32.xlu0 %v2542
    %v2544 = vpop.xlane.xlu0 %2543
    %v2545 = vsel %vm1671, %v1410, 0.0
    %2546 = vadd.xlane.f32.xlu0 %v2545
    %v2547 = vpop.xlane.xlu0 %2546
    %v2548 = vsel %vm1671, %v1411, 0.0
    %2549 = vadd.xlane.f32.xlu0 %v2548
    %v2550 = vpop.xlane.xlu0 %2549
    %v2551 = vsel %vm1671, %v1412, 0.0
    %2552 = vadd.xlane.f32.xlu0 %v2551
    %v2553 = vpop.xlane.xlu0 %2552
    %v2554 = vsel %vm1671, %v1413, 0.0
    %2555 = vadd.xlane.f32.xlu0 %v2554
    %v2556 = vpop.xlane.xlu0 %2555
    %v2557 = vsel %vm1671, %v1414, 0.0
    %2558 = vadd.xlane.f32.xlu0 %v2557
    %v2559 = vpop.xlane.xlu0 %2558
    %v2560 = vsel %vm1671, %v1415, 0.0
    %2561 = vadd.xlane.f32.xlu0 %v2560
    %v2562 = vpop.xlane.xlu0 %2561
    %v2563 = vsel %vm1671, %v1416, 0.0
    %2564 = vadd.xlane.f32.xlu0 %v2563
    %v2565 = vpop.xlane.xlu0 %2564
    %v2566 = vsel %vm1671, %v1417, 0.0
    %2567 = vadd.xlane.f32.xlu0 %v2566
    %v2568 = vpop.xlane.xlu0 %2567
    %v2569 = vsel %vm1671, %v1418, 0.0
    %2570 = vadd.xlane.f32.xlu0 %v2569
    %v2571 = vpop.xlane.xlu0 %2570
    %v2572 = vsel %vm1671, %v1419, 0.0
    %2573 = vadd.xlane.f32.xlu0 %v2572
    %v2574 = vpop.xlane.xlu0 %2573
    %v2575 = vsel %vm1671, %v1420, 0.0
    %2576 = vadd.xlane.f32.xlu0 %v2575
    %v2577 = vpop.xlane.xlu0 %2576
    %v2578 = vsel %vm1671, %v1421, 0.0
    %2579 = vadd.xlane.f32.xlu0 %v2578
    %v2580 = vpop.xlane.xlu0 %2579
    %v2581 = vsel %vm1671, %v1422, 0.0
    %2582 = vadd.xlane.f32.xlu0 %v2581
    %v2583 = vpop.xlane.xlu0 %2582
    %v2584 = vsel %vm1671, %v1423, 0.0
    %2585 = vadd.xlane.f32.xlu0 %v2584
    %v2586 = vpop.xlane.xlu0 %2585
    %v2587 = vsel %vm1671, %v1424, 0.0
    %2588 = vadd.xlane.f32.xlu0 %v2587
    %v2589 = vpop.xlane.xlu0 %2588
    %v2590 = vsel %vm1671, %v1425, 0.0
    %2591 = vadd.xlane.f32.xlu0 %v2590
    %v2592 = vpop.xlane.xlu0 %2591
    %v2593 = vsel %vm1671, %v1426, 0.0
    %2594 = vadd.xlane.f32.xlu0 %v2593
    %v2595 = vpop.xlane.xlu0 %2594
    %v2596 = vsel %vm1671, %v1427, 0.0
    %2597 = vadd.xlane.f32.xlu0 %v2596
    %v2598 = vpop.xlane.xlu0 %2597
    %v2599 = vsel %vm1671, %v1428, 0.0
    %2600 = vadd.xlane.f32.xlu0 %v2599
    %v2601 = vpop.xlane.xlu0 %2600
    %v2602 = vsel %vm1671, %v1429, 0.0
    %2603 = vadd.xlane.f32.xlu0 %v2602
    %v2604 = vpop.xlane.xlu0 %2603
    %v2605 = vsel %vm1671, %v1430, 0.0
    %2606 = vadd.xlane.f32.xlu0 %v2605
    %v2607 = vpop.xlane.xlu0 %2606
    %v2608 = vsel %vm1671, %v1431, 0.0
    %2609 = vadd.xlane.f32.xlu0 %v2608
    %v2610 = vpop.xlane.xlu0 %2609
    %v2611 = vsel %vm1671, %v1432, 0.0
    %2612 = vadd.xlane.f32.xlu0 %v2611
    %v2613 = vpop.xlane.xlu0 %2612
    %v2614 = vsel %vm1671, %v1433, 0.0
    %2615 = vadd.xlane.f32.xlu0 %v2614
    %v2616 = vpop.xlane.xlu0 %2615
    %v2617 = vsel %vm1671, %v1434, 0.0
    %2618 = vadd.xlane.f32.xlu0 %v2617
    %v2619 = vpop.xlane.xlu0 %2618
    %v2620 = vsel %vm1671, %v1435, 0.0
    %2621 = vadd.xlane.f32.xlu0 %v2620
    %v2622 = vpop.xlane.xlu0 %2621
    %v2623 = vsel %vm1671, %v1436, 0.0
    %2624 = vadd.xlane.f32.xlu0 %v2623
    %v2625 = vpop.xlane.xlu0 %2624
    %v2626 = vsel %vm1671, %v1437, 0.0
    %2627 = vadd.xlane.f32.xlu0 %v2626
    %v2628 = vpop.xlane.xlu0 %2627
    %v2629 = vsel %vm1671, %v1438, 0.0
    %2630 = vadd.xlane.f32.xlu0 %v2629
    %v2631 = vpop.xlane.xlu0 %2630
    %v2632 = vsel %vm1671, %v1439, 0.0
    %2633 = vadd.xlane.f32.xlu0 %v2632
    %v2634 = vpop.xlane.xlu0 %2633
    %v2635 = vsel %vm1671, %v1440, 0.0
    %2636 = vadd.xlane.f32.xlu0 %v2635
    %v2637 = vpop.xlane.xlu0 %2636
    %v2638 = vsel %vm1671, %v1441, 0.0
    %2639 = vadd.xlane.f32.xlu0 %v2638
    %v2640 = vpop.xlane.xlu0 %2639
    %v2641 = vsel %vm1671, %v1442, 0.0
    %2642 = vadd.xlane.f32.xlu0 %v2641
    %v2643 = vpop.xlane.xlu0 %2642
    %v2644 = vsel %vm1671, %v1443, 0.0
    %2645 = vadd.xlane.f32.xlu0 %v2644
    %v2646 = vpop.xlane.xlu0 %2645
    %v2647 = vsel %vm1671, %v1444, 0.0
    %2648 = vadd.xlane.f32.xlu0 %v2647
    %v2649 = vpop.xlane.xlu0 %2648
    %v2650 = vsel %vm1671, %v1445, 0.0
    %2651 = vadd.xlane.f32.xlu0 %v2650
    %v2652 = vpop.xlane.xlu0 %2651
    %v2653 = vsel %vm1671, %v1446, 0.0
    %2654 = vadd.xlane.f32.xlu0 %v2653
    %v2655 = vpop.xlane.xlu0 %2654
    %v2656 = vsel %vm1671, %v1447, 0.0
    %2657 = vadd.xlane.f32.xlu0 %v2656
    %v2658 = vpop.xlane.xlu0 %2657
    %v2659 = vsel %vm1671, %v1448, 0.0
    %2660 = vadd.xlane.f32.xlu0 %v2659
    %v2661 = vpop.xlane.xlu0 %2660
    %v2662 = vsel %vm1671, %v1449, 0.0
    %2663 = vadd.xlane.f32.xlu0 %v2662
    %v2664 = vpop.xlane.xlu0 %2663
    %v2665 = vsel %vm1671, %v1450, 0.0
    %2666 = vadd.xlane.f32.xlu0 %v2665
    %v2667 = vpop.xlane.xlu0 %2666
    %v2668 = vsel %vm1671, %v1451, 0.0
    %2669 = vadd.xlane.f32.xlu0 %v2668
    %v2670 = vpop.xlane.xlu0 %2669
    %v2671 = vsel %vm1671, %v1452, 0.0
    %2672 = vadd.xlane.f32.xlu0 %v2671
    %v2673 = vpop.xlane.xlu0 %2672
    %v2674 = vsel %vm1671, %v1453, 0.0
    %2675 = vadd.xlane.f32.xlu0 %v2674
    %v2676 = vpop.xlane.xlu0 %2675
    %v2677 = vsel %vm1671, %v1454, 0.0
    %2678 = vadd.xlane.f32.xlu0 %v2677
    %v2679 = vpop.xlane.xlu0 %2678
    %v2680 = vsel %vm1671, %v1455, 0.0
    %2681 = vadd.xlane.f32.xlu0 %v2680
    %v2682 = vpop.xlane.xlu0 %2681
    %v2683 = vsel %vm1671, %v1456, 0.0
    %2684 = vadd.xlane.f32.xlu0 %v2683
    %v2685 = vpop.xlane.xlu0 %2684
    %v2686 = vsel %vm1671, %v1457, 0.0
    %2687 = vadd.xlane.f32.xlu0 %v2686
    %v2688 = vpop.xlane.xlu0 %2687
    %v2689 = vsel %vm1671, %v1458, 0.0
    %2690 = vadd.xlane.f32.xlu0 %v2689
    %v2691 = vpop.xlane.xlu0 %2690
    %v2692 = vsel %vm1671, %v1459, 0.0
    %2693 = vadd.xlane.f32.xlu0 %v2692
    %v2694 = vpop.xlane.xlu0 %2693
    %v2695 = vsel %vm1671, %v1460, 0.0
    %2696 = vadd.xlane.f32.xlu0 %v2695
    %v2697 = vpop.xlane.xlu0 %2696
    %v2698 = vsel %vm1671, %v1461, 0.0
    %2699 = vadd.xlane.f32.xlu0 %v2698
    %v2700 = vpop.xlane.xlu0 %2699
    %v2701 = vsel %vm1671, %v1462, 0.0
    %2702 = vadd.xlane.f32.xlu0 %v2701
    %v2703 = vpop.xlane.xlu0 %2702
    %v2704 = vsel %vm1671, %v1463, 0.0
    %2705 = vadd.xlane.f32.xlu0 %v2704
    %v2706 = vpop.xlane.xlu0 %2705
    %v2707 = vsel %vm1671, %v1464, 0.0
    %2708 = vadd.xlane.f32.xlu0 %v2707
    %v2709 = vpop.xlane.xlu0 %2708
    %v2710 = vsel %vm1671, %v1465, 0.0
    %2711 = vadd.xlane.f32.xlu0 %v2710
    %v2712 = vpop.xlane.xlu0 %2711
    %v2713 = vsel %vm1671, %v1466, 0.0
    %2714 = vadd.xlane.f32.xlu0 %v2713
    %v2715 = vpop.xlane.xlu0 %2714
    %v2716 = vsel %vm1671, %v1467, 0.0
    %2717 = vadd.xlane.f32.xlu0 %v2716
    %v2718 = vpop.xlane.xlu0 %2717
    %v2719 = vsel %vm1671, %v1468, 0.0
    %2720 = vadd.xlane.f32.xlu0 %v2719
    %v2721 = vpop.xlane.xlu0 %2720
    %v2722 = vsel %vm1671, %v1469, 0.0
    %2723 = vadd.xlane.f32.xlu0 %v2722
    %v2724 = vpop.xlane.xlu0 %2723
    %v2725 = vsel %vm1671, %v1470, 0.0
    %2726 = vadd.xlane.f32.xlu0 %v2725
    %v2727 = vpop.xlane.xlu0 %2726
    %v2728 = vsel %vm1671, %v1471, 0.0
    %2729 = vadd.xlane.f32.xlu0 %v2728
    %v2730 = vpop.xlane.xlu0 %2729
    %v2731 = vsel %vm1671, %v1472, 0.0
    %2732 = vadd.xlane.f32.xlu0 %v2731
    %v2733 = vpop.xlane.xlu0 %2732
    %v2734 = vsel %vm1671, %v1473, 0.0
    %2735 = vadd.xlane.f32.xlu0 %v2734
    %v2736 = vpop.xlane.xlu0 %2735
    %v2737 = vsel %vm1671, %v1474, 0.0
    %2738 = vadd.xlane.f32.xlu0 %v2737
    %v2739 = vpop.xlane.xlu0 %2738
    %v2740 = vsel %vm1671, %v1475, 0.0
    %2741 = vadd.xlane.f32.xlu0 %v2740
    %v2742 = vpop.xlane.xlu0 %2741
    %v2743 = vsel %vm1671, %v1476, 0.0
    %2744 = vadd.xlane.f32.xlu0 %v2743
    %v2745 = vpop.xlane.xlu0 %2744
    %v2746 = vsel %vm1671, %v1477, 0.0
    %2747 = vadd.xlane.f32.xlu0 %v2746
    %v2748 = vpop.xlane.xlu0 %2747
    %v2749 = vsel %vm1671, %v1478, 0.0
    %2750 = vadd.xlane.f32.xlu0 %v2749
    %v2751 = vpop.xlane.xlu0 %2750
    %v2752 = vsel %vm1671, %v1479, 0.0
    %2753 = vadd.xlane.f32.xlu0 %v2752
    %v2754 = vpop.xlane.xlu0 %2753
    %v2755 = vsel %vm1671, %v1480, 0.0
    %2756 = vadd.xlane.f32.xlu0 %v2755
    %v2757 = vpop.xlane.xlu0 %2756
    %v2758 = vsel %vm1671, %v1481, 0.0
    %2759 = vadd.xlane.f32.xlu0 %v2758
    %v2760 = vpop.xlane.xlu0 %2759
    %v2761 = vsel %vm1671, %v1482, 0.0
    %2762 = vadd.xlane.f32.xlu0 %v2761
    %v2763 = vpop.xlane.xlu0 %2762
    %v2764 = vsel %vm1671, %v1483, 0.0
    %2765 = vadd.xlane.f32.xlu0 %v2764
    %v2766 = vpop.xlane.xlu0 %2765
    %v2767 = vsel %vm1671, %v1484, 0.0
    %2768 = vadd.xlane.f32.xlu0 %v2767
    %v2769 = vpop.xlane.xlu0 %2768
    %v2770 = vsel %vm1671, %v1485, 0.0
    %2771 = vadd.xlane.f32.xlu0 %v2770
    %v2772 = vpop.xlane.xlu0 %2771
    %v2773 = vsel %vm1671, %v1486, 0.0
    %2774 = vadd.xlane.f32.xlu0 %v2773
    %v2775 = vpop.xlane.xlu0 %2774
    %v2776 = vsel %vm1671, %v1487, 0.0
    %2777 = vadd.xlane.f32.xlu0 %v2776
    %v2778 = vpop.xlane.xlu0 %2777
    %v2779 = vsel %vm1671, %v1488, 0.0
    %2780 = vadd.xlane.f32.xlu0 %v2779
    %v2781 = vpop.xlane.xlu0 %2780
    %v2782 = vsel %vm1671, %v1489, 0.0
    %2783 = vadd.xlane.f32.xlu0 %v2782
    %v2784 = vpop.xlane.xlu0 %2783
    %v2785 = vsel %vm1671, %v1490, 0.0
    %2786 = vadd.xlane.f32.xlu0 %v2785
    %v2787 = vpop.xlane.xlu0 %2786
    %v2788 = vsel %vm1671, %v1491, 0.0
    %2789 = vadd.xlane.f32.xlu0 %v2788
    %v2790 = vpop.xlane.xlu0 %2789
    %v2791 = vsel %vm1671, %v1492, 0.0
    %2792 = vadd.xlane.f32.xlu0 %v2791
    %v2793 = vpop.xlane.xlu0 %2792
    %v2794 = vsel %vm1671, %v1493, 0.0
    %2795 = vadd.xlane.f32.xlu0 %v2794
    %v2796 = vpop.xlane.xlu0 %2795
    %v2797 = vsel %vm1671, %v1494, 0.0
    %2798 = vadd.xlane.f32.xlu0 %v2797
    %v2799 = vpop.xlane.xlu0 %2798
    %v2800 = vsel %vm1671, %v1495, 0.0
    %2801 = vadd.xlane.f32.xlu0 %v2800
    %v2802 = vpop.xlane.xlu0 %2801
    %v2803 = vsel %vm1671, %v1496, 0.0
    %2804 = vadd.xlane.f32.xlu0 %v2803
    %v2805 = vpop.xlane.xlu0 %2804
    %v2806 = vsel %vm1671, %v1497, 0.0
    %2807 = vadd.xlane.f32.xlu0 %v2806
    %v2808 = vpop.xlane.xlu0 %2807
    %v2809 = vsel %vm1671, %v1498, 0.0
    %2810 = vadd.xlane.f32.xlu0 %v2809
    %v2811 = vpop.xlane.xlu0 %2810
    %v2812 = vsel %vm1671, %v1499, 0.0
    %2813 = vadd.xlane.f32.xlu0 %v2812
    %v2814 = vpop.xlane.xlu0 %2813
    %v2815 = vsel %vm1671, %v1500, 0.0
    %2816 = vadd.xlane.f32.xlu0 %v2815
    %v2817 = vpop.xlane.xlu0 %2816
    %v2818 = vsel %vm1671, %v1501, 0.0
    %2819 = vadd.xlane.f32.xlu0 %v2818
    %v2820 = vpop.xlane.xlu0 %2819
    %v2821 = vsel %vm1671, %v1502, 0.0
    %2822 = vadd.xlane.f32.xlu0 %v2821
    %v2823 = vpop.xlane.xlu0 %2822
    %v2824 = vsel %vm1671, %v1503, 0.0
    %2825 = vadd.xlane.f32.xlu0 %v2824
    %v2826 = vpop.xlane.xlu0 %2825
    %v2827 = vsel %vm1671, %v1504, 0.0
    %2828 = vadd.xlane.f32.xlu0 %v2827
    %v2829 = vpop.xlane.xlu0 %2828
    %v2830 = vsel %vm1671, %v1505, 0.0
    %2831 = vadd.xlane.f32.xlu0 %v2830
    %v2832 = vpop.xlane.xlu0 %2831
    %v2833 = vsel %vm1671, %v1506, 0.0
    %2834 = vadd.xlane.f32.xlu0 %v2833
    %v2835 = vpop.xlane.xlu0 %2834
    %v2836 = vsel %vm1671, %v1507, 0.0
    %2837 = vadd.xlane.f32.xlu0 %v2836
    %v2838 = vpop.xlane.xlu0 %2837
    %v2839 = vsel %vm1671, %v1508, 0.0
    %2840 = vadd.xlane.f32.xlu0 %v2839
    %v2841 = vpop.xlane.xlu0 %2840
    %v2842 = vsel %vm1671, %v1509, 0.0
    %2843 = vadd.xlane.f32.xlu0 %v2842
    %v2844 = vpop.xlane.xlu0 %2843
    %v2845 = vsel %vm1671, %v1510, 0.0
    %2846 = vadd.xlane.f32.xlu0 %v2845
    %v2847 = vpop.xlane.xlu0 %2846
    %v2848 = vsel %vm1671, %v1511, 0.0
    %2849 = vadd.xlane.f32.xlu0 %v2848
    %v2850 = vpop.xlane.xlu0 %2849
    %v2851 = vsel %vm1671, %v1512, 0.0
    %2852 = vadd.xlane.f32.xlu0 %v2851
    %v2853 = vpop.xlane.xlu0 %2852
    %v2854 = vsel %vm1671, %v1513, 0.0
    %2855 = vadd.xlane.f32.xlu0 %v2854
    %v2856 = vpop.xlane.xlu0 %2855
    %v2857 = vsel %vm1671, %v1514, 0.0
    %2858 = vadd.xlane.f32.xlu0 %v2857
    %v2859 = vpop.xlane.xlu0 %2858
    %v2860 = vsel %vm1671, %v1515, 0.0
    %2861 = vadd.xlane.f32.xlu0 %v2860
    %v2862 = vpop.xlane.xlu0 %2861
    %v2863 = vsel %vm1671, %v1516, 0.0
    %2864 = vadd.xlane.f32.xlu0 %v2863
    %v2865 = vpop.xlane.xlu0 %2864
    %v2866 = vsel %vm1671, %v1517, 0.0
    %2867 = vadd.xlane.f32.xlu0 %v2866
    %v2868 = vpop.xlane.xlu0 %2867
    %v2869 = vsel %vm1671, %v1518, 0.0
    %2870 = vadd.xlane.f32.xlu0 %v2869
    %v2871 = vpop.xlane.xlu0 %2870
    %v2872 = vsel %vm1671, %v1519, 0.0
    %2873 = vadd.xlane.f32.xlu0 %v2872
    %v2874 = vpop.xlane.xlu0 %2873
    %v2875 = vsel %vm1671, %v1520, 0.0
    %2876 = vadd.xlane.f32.xlu0 %v2875
    %v2877 = vpop.xlane.xlu0 %2876
    %v2878 = vsel %vm1671, %v1521, 0.0
    %2879 = vadd.xlane.f32.xlu0 %v2878
    %v2880 = vpop.xlane.xlu0 %2879
    %v2881 = vsel %vm1671, %v1522, 0.0
    %2882 = vadd.xlane.f32.xlu0 %v2881
    %v2883 = vpop.xlane.xlu0 %2882
    %v2884 = vsel %vm1671, %v1523, 0.0
    %2885 = vadd.xlane.f32.xlu0 %v2884
    %v2886 = vpop.xlane.xlu0 %2885
    %v2887 = vsel %vm1671, %v1524, 0.0
    %2888 = vadd.xlane.f32.xlu0 %v2887
    %v2889 = vpop.xlane.xlu0 %2888
    %v2890 = vsel %vm1671, %v1525, 0.0
    %2891 = vadd.xlane.f32.xlu0 %v2890
    %v2892 = vpop.xlane.xlu0 %2891
    %v2893 = vsel %vm1671, %v1526, 0.0
    %2894 = vadd.xlane.f32.xlu0 %v2893
    %v2895 = vpop.xlane.xlu0 %2894
    %v2896 = vsel %vm1671, %v1527, 0.0
    %2897 = vadd.xlane.f32.xlu0 %v2896
    %v2898 = vpop.xlane.xlu0 %2897
    %v2899 = vsel %vm1671, %v1528, 0.0
    %2900 = vadd.xlane.f32.xlu0 %v2899
    %v2901 = vpop.xlane.xlu0 %2900
    %v2902 = vsel %vm1671, %v1529, 0.0
    %2903 = vadd.xlane.f32.xlu0 %v2902
    %v2904 = vpop.xlane.xlu0 %2903
    %v2905 = vsel %vm1671, %v1530, 0.0
    %2906 = vadd.xlane.f32.xlu0 %v2905
    %v2907 = vpop.xlane.xlu0 %2906
    %v2908 = vsel %vm1671, %v1531, 0.0
    %2909 = vadd.xlane.f32.xlu0 %v2908
    %v2910 = vpop.xlane.xlu0 %2909
    %v2911 = vsel %vm1671, %v1532, 0.0
    %2912 = vadd.xlane.f32.xlu0 %v2911
    %v2913 = vpop.xlane.xlu0 %2912
    %v2914 = vsel %vm1671, %v1533, 0.0
    %2915 = vadd.xlane.f32.xlu0 %v2914
    %v2916 = vpop.xlane.xlu0 %2915
    %v2917 = vsel %vm1671, %v1534, 0.0
    %2918 = vadd.xlane.f32.xlu0 %v2917
    %v2919 = vpop.xlane.xlu0 %2918
    %v2920 = vsel %vm1671, %v1535, 0.0
    %2921 = vadd.xlane.f32.xlu0 %v2920
    %v2922 = vpop.xlane.xlu0 %2921
    %v2923 = vsel %vm1671, %v1536, 0.0
    %2924 = vadd.xlane.f32.xlu0 %v2923
    %v2925 = vpop.xlane.xlu0 %2924
    %v2926 = vsel %vm1671, %v1537, 0.0
    %2927 = vadd.xlane.f32.xlu0 %v2926
    %v2928 = vpop.xlane.xlu0 %2927
    %v2929 = vsel %vm1671, %v1538, 0.0
    %2930 = vadd.xlane.f32.xlu0 %v2929
    %v2931 = vpop.xlane.xlu0 %2930
    %v2932 = vsel %vm1671, %v1539, 0.0
    %2933 = vadd.xlane.f32.xlu0 %v2932
    %v2934 = vpop.xlane.xlu0 %2933
    %v2935 = vsel %vm1671, %v1540, 0.0
    %2936 = vadd.xlane.f32.xlu0 %v2935
    %v2937 = vpop.xlane.xlu0 %2936
    %v2938 = vsel %vm1671, %v1541, 0.0
    %2939 = vadd.xlane.f32.xlu0 %v2938
    %v2940 = vpop.xlane.xlu0 %2939
    %v2941 = vsel %vm1671, %v1542, 0.0
    %2942 = vadd.xlane.f32.xlu0 %v2941
    %v2943 = vpop.xlane.xlu0 %2942
    %v2944 = vsel %vm1671, %v1543, 0.0
    %2945 = vadd.xlane.f32.xlu0 %v2944
    %v2946 = vpop.xlane.xlu0 %2945
    %v2947 = vsel %vm1671, %v1544, 0.0
    %2948 = vadd.xlane.f32.xlu0 %v2947
    %v2949 = vpop.xlane.xlu0 %2948
    %v2950 = vsel %vm1671, %v1545, 0.0
    %2951 = vadd.xlane.f32.xlu0 %v2950
    %v2952 = vpop.xlane.xlu0 %2951
    %v2953 = vsel %vm1671, %v1546, 0.0
    %2954 = vadd.xlane.f32.xlu0 %v2953
    %v2955 = vpop.xlane.xlu0 %2954
    %v2956 = vsel %vm1671, %v1547, 0.0
    %2957 = vadd.xlane.f32.xlu0 %v2956
    %v2958 = vpop.xlane.xlu0 %2957
    %v2959 = vsel %vm1671, %v1548, 0.0
    %2960 = vadd.xlane.f32.xlu0 %v2959
    %v2961 = vpop.xlane.xlu0 %2960
    %v2962 = vsel %vm1671, %v1549, 0.0
    %2963 = vadd.xlane.f32.xlu0 %v2962
    %v2964 = vpop.xlane.xlu0 %2963
    %v2965 = vsel %vm1671, %v1550, 0.0
    %2966 = vadd.xlane.f32.xlu0 %v2965
    %v2967 = vpop.xlane.xlu0 %2966
    %v2968 = vsel %vm1671, %v1551, 0.0
    %2969 = vadd.xlane.f32.xlu0 %v2968
    %v2970 = vpop.xlane.xlu0 %2969
    %v2971 = vsel %vm1671, %v1552, 0.0
    %2972 = vadd.xlane.f32.xlu0 %v2971
    %v2973 = vpop.xlane.xlu0 %2972
    %v2974 = vsel %vm1671, %v1553, 0.0
    %2975 = vadd.xlane.f32.xlu0 %v2974
    %v2976 = vpop.xlane.xlu0 %2975
    %v2977 = vsel %vm1671, %v1554, 0.0
    %2978 = vadd.xlane.f32.xlu0 %v2977
    %v2979 = vpop.xlane.xlu0 %2978
    %v2980 = vsel %vm1671, %v1555, 0.0
    %2981 = vadd.xlane.f32.xlu0 %v2980
    %v2982 = vpop.xlane.xlu0 %2981
    %v2983 = vsel %vm1671, %v1556, 0.0
    %2984 = vadd.xlane.f32.xlu0 %v2983
    %v2985 = vpop.xlane.xlu0 %2984
    %v2986 = vsel %vm1671, %v1557, 0.0
    %2987 = vadd.xlane.f32.xlu0 %v2986
    %v2988 = vpop.xlane.xlu0 %2987
    %v2989 = vsel %vm1671, %v1558, 0.0
    %2990 = vadd.xlane.f32.xlu0 %v2989
    %v2991 = vpop.xlane.xlu0 %2990
    %v2992 = vsel %vm1671, %v1559, 0.0
    %2993 = vadd.xlane.f32.xlu0 %v2992
    %v2994 = vpop.xlane.xlu0 %2993
    %v2995 = vsel %vm1671, %v1560, 0.0
    %2996 = vadd.xlane.f32.xlu0 %v2995
    %v2997 = vpop.xlane.xlu0 %2996
    %v2998 = vsel %vm1671, %v1561, 0.0
    %2999 = vadd.xlane.f32.xlu0 %v2998
    %v3000 = vpop.xlane.xlu0 %2999
    %v3001 = vsel %vm1671, %v1562, 0.0
    %3002 = vadd.xlane.f32.xlu0 %v3001
    %v3003 = vpop.xlane.xlu0 %3002
    %v3004 = vsel %vm1671, %v1563, 0.0
    %3005 = vadd.xlane.f32.xlu0 %v3004
    %v3006 = vpop.xlane.xlu0 %3005
    %v3007 = vsel %vm1671, %v1564, 0.0
    %3008 = vadd.xlane.f32.xlu0 %v3007
    %v3009 = vpop.xlane.xlu0 %3008
    %v3010 = vsel %vm1671, %v1565, 0.0
    %3011 = vadd.xlane.f32.xlu0 %v3010
    %v3012 = vpop.xlane.xlu0 %3011
    %v3013 = vsel %vm1671, %v1566, 0.0
    %3014 = vadd.xlane.f32.xlu0 %v3013
    %v3015 = vpop.xlane.xlu0 %3014
    %v3016 = vsel %vm1671, %v1567, 0.0
    %3017 = vadd.xlane.f32.xlu0 %v3016
    %v3018 = vpop.xlane.xlu0 %3017
    %v3019 = vsel %vm1671, %v1568, 0.0
    %3020 = vadd.xlane.f32.xlu0 %v3019
    %v3021 = vpop.xlane.xlu0 %3020
    %v3022 = vsel %vm1671, %v1569, 0.0
    %3023 = vadd.xlane.f32.xlu0 %v3022
    %v3024 = vpop.xlane.xlu0 %3023
    %v3025 = vsel %vm1671, %v1570, 0.0
    %3026 = vadd.xlane.f32.xlu0 %v3025
    %v3027 = vpop.xlane.xlu0 %3026
    %v3028 = vsel %vm1671, %v1571, 0.0
    %3029 = vadd.xlane.f32.xlu0 %v3028
    %v3030 = vpop.xlane.xlu0 %3029
    %v3031 = vsel %vm1671, %v1572, 0.0
    %3032 = vadd.xlane.f32.xlu0 %v3031
    %v3033 = vpop.xlane.xlu0 %3032
    %v3034 = vsel %vm1671, %v1573, 0.0
    %3035 = vadd.xlane.f32.xlu0 %v3034
    %v3036 = vpop.xlane.xlu0 %3035
    %v3037 = vsel %vm1671, %v1574, 0.0
    %3038 = vadd.xlane.f32.xlu0 %v3037
    %v3039 = vpop.xlane.xlu0 %3038
    %v3040 = vsel %vm1671, %v1575, 0.0
    %3041 = vadd.xlane.f32.xlu0 %v3040
    %v3042 = vpop.xlane.xlu0 %3041
    %v3043 = vsel %vm1671, %v1576, 0.0
    %3044 = vadd.xlane.f32.xlu0 %v3043
    %v3045 = vpop.xlane.xlu0 %3044
    %v3046 = vsel %vm1671, %v1577, 0.0
    %3047 = vadd.xlane.f32.xlu0 %v3046
    %v3048 = vpop.xlane.xlu0 %3047
    %v3049 = vsel %vm1671, %v1578, 0.0
    %3050 = vadd.xlane.f32.xlu0 %v3049
    %v3051 = vpop.xlane.xlu0 %3050
    %v3052 = vsel %vm1671, %v1579, 0.0
    %3053 = vadd.xlane.f32.xlu0 %v3052
    %v3054 = vpop.xlane.xlu0 %3053
    %v3055 = vsel %vm1671, %v1580, 0.0
    %3056 = vadd.xlane.f32.xlu0 %v3055
    %v3057 = vpop.xlane.xlu0 %3056
    %v3058 = vsel %vm1671, %v1581, 0.0
    %3059 = vadd.xlane.f32.xlu0 %v3058
    %v3060 = vpop.xlane.xlu0 %3059
    %v3061 = vsel %vm1671, %v1582, 0.0
    %3062 = vadd.xlane.f32.xlu0 %v3061
    %v3063 = vpop.xlane.xlu0 %3062
    %v3064 = vsel %vm1671, %v1583, 0.0
    %3065 = vadd.xlane.f32.xlu0 %v3064
    %v3066 = vpop.xlane.xlu0 %3065
    %v3067 = vsel %vm1671, %v1584, 0.0
    %3068 = vadd.xlane.f32.xlu0 %v3067
    %v3069 = vpop.xlane.xlu0 %3068
    %v3070 = vsel %vm1671, %v1585, 0.0
    %3071 = vadd.xlane.f32.xlu0 %v3070
    %v3072 = vpop.xlane.xlu0 %3071
    %v3073 = vsel %vm1671, %v1586, 0.0
    %3074 = vadd.xlane.f32.xlu0 %v3073
    %v3075 = vpop.xlane.xlu0 %3074
    %v3076 = vsel %vm1671, %v1587, 0.0
    %3077 = vadd.xlane.f32.xlu0 %v3076
    %v3078 = vpop.xlane.xlu0 %3077
    %v3079 = vsel %vm1671, %v1588, 0.0
    %3080 = vadd.xlane.f32.xlu0 %v3079
    %v3081 = vpop.xlane.xlu0 %3080
    %v3082 = vsel %vm1671, %v1589, 0.0
    %3083 = vadd.xlane.f32.xlu0 %v3082
    %v3084 = vpop.xlane.xlu0 %3083
    %v3085 = vsel %vm1671, %v1590, 0.0
    %3086 = vadd.xlane.f32.xlu0 %v3085
    %v3087 = vpop.xlane.xlu0 %3086
    %v3088 = vsel %vm1671, %v1591, 0.0
    %3089 = vadd.xlane.f32.xlu0 %v3088
    %v3090 = vpop.xlane.xlu0 %3089
    %v3091 = vsel %vm1671, %v1592, 0.0
    %3092 = vadd.xlane.f32.xlu0 %v3091
    %v3093 = vpop.xlane.xlu0 %3092
    %v3094 = vsel %vm1671, %v1593, 0.0
    %3095 = vadd.xlane.f32.xlu0 %v3094
    %v3096 = vpop.xlane.xlu0 %3095
    %v3097 = vsel %vm1671, %v1594, 0.0
    %3098 = vadd.xlane.f32.xlu0 %v3097
    %v3099 = vpop.xlane.xlu0 %3098
    %v3100 = vsel %vm1671, %v1595, 0.0
    %3101 = vadd.xlane.f32.xlu0 %v3100
    %v3102 = vpop.xlane.xlu0 %3101
    %v3103 = vsel %vm1671, %v1596, 0.0
    %3104 = vadd.xlane.f32.xlu0 %v3103
    %v3105 = vpop.xlane.xlu0 %3104
    %v3106 = vsel %vm1671, %v1597, 0.0
    %3107 = vadd.xlane.f32.xlu0 %v3106
    %v3108 = vpop.xlane.xlu0 %3107
    %v3109 = vsel %vm1671, %v1598, 0.0
    %3110 = vadd.xlane.f32.xlu0 %v3109
    %v3111 = vpop.xlane.xlu0 %3110
    %v3112 = vsel %vm1671, %v1599, 0.0
    %3113 = vadd.xlane.f32.xlu0 %v3112
    %v3114 = vpop.xlane.xlu0 %3113
    %v3115 = vsel %vm1671, %v1600, 0.0
    %3116 = vadd.xlane.f32.xlu0 %v3115
    %v3117 = vpop.xlane.xlu0 %3116
    %v3118 = vsel %vm1671, %v1601, 0.0
    %3119 = vadd.xlane.f32.xlu0 %v3118
    %v3120 = vpop.xlane.xlu0 %3119
    %v3121 = vsel %vm1671, %v1602, 0.0
    %3122 = vadd.xlane.f32.xlu0 %v3121
    %v3123 = vpop.xlane.xlu0 %3122
    %v3124 = vsel %vm1671, %v1603, 0.0
    %3125 = vadd.xlane.f32.xlu0 %v3124
    %v3126 = vpop.xlane.xlu0 %3125
    %v3127 = vsel %vm1671, %v1604, 0.0
    %3128 = vadd.xlane.f32.xlu0 %v3127
    %v3129 = vpop.xlane.xlu0 %3128
    %v3130 = vsel %vm1671, %v1605, 0.0
    %3131 = vadd.xlane.f32.xlu0 %v3130
    %v3132 = vpop.xlane.xlu0 %3131
    %v3133 = vsel %vm1671, %v1606, 0.0
    %3134 = vadd.xlane.f32.xlu0 %v3133
    %v3135 = vpop.xlane.xlu0 %3134
    %v3136 = vsel %vm1671, %v1607, 0.0
    %3137 = vadd.xlane.f32.xlu0 %v3136
    %v3138 = vpop.xlane.xlu0 %3137
    %v3139 = vsel %vm1671, %v1608, 0.0
    %3140 = vadd.xlane.f32.xlu0 %v3139
    %v3141 = vpop.xlane.xlu0 %3140
    %v3142 = vsel %vm1671, %v1609, 0.0
    %3143 = vadd.xlane.f32.xlu0 %v3142
    %v3144 = vpop.xlane.xlu0 %3143
    %v3145 = vsel %vm1671, %v1610, 0.0
    %3146 = vadd.xlane.f32.xlu0 %v3145
    %v3147 = vpop.xlane.xlu0 %3146
    %v3148 = vsel %vm1671, %v1611, 0.0
    %3149 = vadd.xlane.f32.xlu0 %v3148
    %v3150 = vpop.xlane.xlu0 %3149
    %v3151 = vsel %vm1671, %v1612, 0.0
    %3152 = vadd.xlane.f32.xlu0 %v3151
    %v3153 = vpop.xlane.xlu0 %3152
    %v3154 = vsel %vm1671, %v1613, 0.0
    %3155 = vadd.xlane.f32.xlu0 %v3154
    %v3156 = vpop.xlane.xlu0 %3155
    %v3157 = vsel %vm1671, %v1614, 0.0
    %3158 = vadd.xlane.f32.xlu0 %v3157
    %v3159 = vpop.xlane.xlu0 %3158
    %v3160 = vsel %vm1671, %v1615, 0.0
    %3161 = vadd.xlane.f32.xlu0 %v3160
    %v3162 = vpop.xlane.xlu0 %3161
    %v3163 = vsel %vm1671, %v1616, 0.0
    %3164 = vadd.xlane.f32.xlu0 %v3163
    %v3165 = vpop.xlane.xlu0 %3164
    %v3166 = vsel %vm1671, %v1617, 0.0
    %3167 = vadd.xlane.f32.xlu0 %v3166
    %v3168 = vpop.xlane.xlu0 %3167
    %v3169 = vsel %vm1671, %v1618, 0.0
    %3170 = vadd.xlane.f32.xlu0 %v3169
    %v3171 = vpop.xlane.xlu0 %3170
    %v3172 = vsel %vm1671, %v1619, 0.0
    %3173 = vadd.xlane.f32.xlu0 %v3172
    %v3174 = vpop.xlane.xlu0 %3173
    %v3175 = vsel %vm1671, %v1620, 0.0
    %3176 = vadd.xlane.f32.xlu0 %v3175
    %v3177 = vpop.xlane.xlu0 %3176
    %v3178 = vsel %vm1671, %v1621, 0.0
    %3179 = vadd.xlane.f32.xlu0 %v3178
    %v3180 = vpop.xlane.xlu0 %3179
    %v3181 = vsel %vm1671, %v1622, 0.0
    %3182 = vadd.xlane.f32.xlu0 %v3181
    %v3183 = vpop.xlane.xlu0 %3182
    %v3184 = vsel %vm1671, %v1623, 0.0
    %3185 = vadd.xlane.f32.xlu0 %v3184
    %v3186 = vpop.xlane.xlu0 %3185
    %v3187 = vsel %vm1671, %v1624, 0.0
    %3188 = vadd.xlane.f32.xlu0 %v3187
    %v3189 = vpop.xlane.xlu0 %3188
    %v3190 = vsel %vm1671, %v1625, 0.0
    %3191 = vadd.xlane.f32.xlu0 %v3190
    %v3192 = vpop.xlane.xlu0 %3191
    %v3193 = vsel %vm1671, %v1626, 0.0
    %3194 = vadd.xlane.f32.xlu0 %v3193
    %v3195 = vpop.xlane.xlu0 %3194
    %v3196 = vsel %vm1671, %v1627, 0.0
    %3197 = vadd.xlane.f32.xlu0 %v3196
    %v3198 = vpop.xlane.xlu0 %3197
    %v3199 = vsel %vm1671, %v1628, 0.0
    %3200 = vadd.xlane.f32.xlu0 %v3199
    %v3201 = vpop.xlane.xlu0 %3200
    %v3202 = vsel %vm1671, %v1629, 0.0
    %3203 = vadd.xlane.f32.xlu0 %v3202
    %v3204 = vpop.xlane.xlu0 %3203
    %v3205 = vsel %vm1671, %v1630, 0.0
    %3206 = vadd.xlane.f32.xlu0 %v3205
    %v3207 = vpop.xlane.xlu0 %3206
    %v3208 = vsel %vm1671, %v1631, 0.0
    %3209 = vadd.xlane.f32.xlu0 %v3208
    %v3210 = vpop.xlane.xlu0 %3209
    %v3211 = vsel %vm1671, %v1632, 0.0
    %3212 = vadd.xlane.f32.xlu0 %v3211
    %v3213 = vpop.xlane.xlu0 %3212
    %v3214 = vsel %vm1671, %v1633, 0.0
    %3215 = vadd.xlane.f32.xlu0 %v3214
    %v3216 = vpop.xlane.xlu0 %3215
    %v3217 = vsel %vm1671, %v1634, 0.0
    %3218 = vadd.xlane.f32.xlu0 %v3217
    %v3219 = vpop.xlane.xlu0 %3218
    %v3220 = vsel %vm1671, %v1635, 0.0
    %3221 = vadd.xlane.f32.xlu0 %v3220
    %v3222 = vpop.xlane.xlu0 %3221
    %v3223 = vsel %vm1671, %v1636, 0.0
    %3224 = vadd.xlane.f32.xlu0 %v3223
    %v3225 = vpop.xlane.xlu0 %3224
    %v3226 = vsel %vm1671, %v1637, 0.0
    %3227 = vadd.xlane.f32.xlu0 %v3226
    %v3228 = vpop.xlane.xlu0 %3227
    %v3229 = vsel %vm1671, %v1638, 0.0
    %3230 = vadd.xlane.f32.xlu0 %v3229
    %v3231 = vpop.xlane.xlu0 %3230
    %v3232 = vsel %vm1671, %v1639, 0.0
    %3233 = vadd.xlane.f32.xlu0 %v3232
    %v3234 = vpop.xlane.xlu0 %3233
    %v3235 = vsel %vm1671, %v1640, 0.0
    %3236 = vadd.xlane.f32.xlu0 %v3235
    %v3237 = vpop.xlane.xlu0 %3236
    %v3238 = vsel %vm1671, %v1641, 0.0
    %3239 = vadd.xlane.f32.xlu0 %v3238
    %v3240 = vpop.xlane.xlu0 %3239
    %v3241 = vsel %vm1671, %v1642, 0.0
    %3242 = vadd.xlane.f32.xlu0 %v3241
    %v3243 = vpop.xlane.xlu0 %3242
    %v3244 = vsel %vm1671, %v1643, 0.0
    %3245 = vadd.xlane.f32.xlu0 %v3244
    %v3246 = vpop.xlane.xlu0 %3245
    %v3247 = vsel %vm1671, %v1644, 0.0
    %3248 = vadd.xlane.f32.xlu0 %v3247
    %v3249 = vpop.xlane.xlu0 %3248
    %v3250 = vsel %vm1671, %v1645, 0.0
    %3251 = vadd.xlane.f32.xlu0 %v3250
    %v3252 = vpop.xlane.xlu0 %3251
    %v3253 = vsel %vm1671, %v1646, 0.0
    %3254 = vadd.xlane.f32.xlu0 %v3253
    %v3255 = vpop.xlane.xlu0 %3254
    %v3256 = vsel %vm1671, %v1647, 0.0
    %3257 = vadd.xlane.f32.xlu0 %v3256
    %v3258 = vpop.xlane.xlu0 %3257
    %v3259 = vsel %vm1671, %v1648, 0.0
    %3260 = vadd.xlane.f32.xlu0 %v3259
    %v3261 = vpop.xlane.xlu0 %3260
    %v3262 = vsel %vm1671, %v1649, 0.0
    %3263 = vadd.xlane.f32.xlu0 %v3262
    %v3264 = vpop.xlane.xlu0 %3263
    %v3265 = vsel %vm1671, %v1650, 0.0
    %3266 = vadd.xlane.f32.xlu0 %v3265
    %v3267 = vpop.xlane.xlu0 %3266
    %v3268 = vsel %vm1671, %v1651, 0.0
    %3269 = vadd.xlane.f32.xlu0 %v3268
    %v3270 = vpop.xlane.xlu0 %3269
    %v3271 = vsel %vm1671, %v1652, 0.0
    %3272 = vadd.xlane.f32.xlu0 %v3271
    %v3273 = vpop.xlane.xlu0 %3272
    %v3274 = vsel %vm1671, %v1653, 0.0
    %3275 = vadd.xlane.f32.xlu0 %v3274
    %v3276 = vpop.xlane.xlu0 %3275
    %v3277 = vsel %vm1671, %v1654, 0.0
    %3278 = vadd.xlane.f32.xlu0 %v3277
    %v3279 = vpop.xlane.xlu0 %3278
    %v3280 = vsel %vm1671, %v1655, 0.0
    %3281 = vadd.xlane.f32.xlu0 %v3280
    %v3282 = vpop.xlane.xlu0 %3281
    %v3283 = vsel %vm1671, %v1656, 0.0
    %3284 = vadd.xlane.f32.xlu0 %v3283
    %v3285 = vpop.xlane.xlu0 %3284
    %v3286 = vsel %vm1671, %v1657, 0.0
    %3287 = vadd.xlane.f32.xlu0 %v3286
    %v3288 = vpop.xlane.xlu0 %3287
    %v3289 = vsel %vm1671, %v1658, 0.0
    %3290 = vadd.xlane.f32.xlu0 %v3289
    %v3291 = vpop.xlane.xlu0 %3290
    %v3292 = vsel %vm1671, %v1659, 0.0
    %3293 = vadd.xlane.f32.xlu0 %v3292
    %v3294 = vpop.xlane.xlu0 %3293
    %v3295 = vsel %vm1671, %v1660, 0.0
    %3296 = vadd.xlane.f32.xlu0 %v3295
    %v3297 = vpop.xlane.xlu0 %3296
    %v3298 = vsel %vm1671, %v1661, 0.0
    %3299 = vadd.xlane.f32.xlu0 %v3298
    %v3300 = vpop.xlane.xlu0 %3299
    %v3301 = vsel %vm1671, %v1662, 0.0
    %3302 = vadd.xlane.f32.xlu0 %v3301
    %v3303 = vpop.xlane.xlu0 %3302
    %v3304 = vsel %vm1671, %v1663, 0.0
    %3305 = vadd.xlane.f32.xlu0 %v3304
    %v3306 = vpop.xlane.xlu0 %3305
    %v3307 = vsel %vm1671, %v1664, 0.0
    %3308 = vadd.xlane.f32.xlu0 %v3307
    %v3309 = vpop.xlane.xlu0 %3308
    %v3310 = vsel %vm1671, %v1665, 0.0
    %3311 = vadd.xlane.f32.xlu0 %v3310
    %v3312 = vpop.xlane.xlu0 %3311
    %v3313 = vsel %vm1671, %v1666, 0.0
    %3314 = vadd.xlane.f32.xlu0 %v3313
    %v3315 = vpop.xlane.xlu0 %3314
    %v3316 = vsel %vm1671, %v1667, 0.0
    %3317 = vadd.xlane.f32.xlu0 %v3316
    %v3318 = vpop.xlane.xlu0 %3317
    %v3319 = vsel %vm1671, %v1668, 0.0
    %3320 = vadd.xlane.f32.xlu0 %v3319
    %v3321 = vpop.xlane.xlu0 %3320
    %v3322 = vsel %vm1671, %v1669, 0.0
    %3323 = vadd.xlane.f32.xlu0 %v3322
    %v3324 = vpop.xlane.xlu0 %3323
    %v3325 = vsel %vm1671, %v1670, 0.0
    %3326 = vadd.xlane.f32.xlu0 %v3325
    %v3327 = vpop.xlane.xlu0 %3326
    %v3328 = vmul.f32 %v1674, 0.020408163
    %v3329 = vmul.f32 %v1677, 0.020408163
    %v3330 = vmul.f32 %v1680, 0.020408163
    %v3331 = vmul.f32 %v1683, 0.020408163
    %v3332 = vmul.f32 %v1686, 0.020408163
    %v3333 = vmul.f32 %v1689, 0.020408163
    %v3334 = vmul.f32 %v1692, 0.020408163
    %v3335 = vmul.f32 %v1695, 0.020408163
    %v3336 = vmul.f32 %v1698, 0.020408163
    %v3337 = vmul.f32 %v1701, 0.020408163
    %v3338 = vmul.f32 %v1704, 0.020408163
    %v3339 = vmul.f32 %v1707, 0.020408163
    %v3340 = vmul.f32 %v1710, 0.020408163
    %v3341 = vmul.f32 %v1713, 0.020408163
    %v3342 = vmul.f32 %v1716, 0.020408163
    %v3343 = vmul.f32 %v1719, 0.020408163
    %v3344 = vmul.f32 %v1722, 0.020408163
    %v3345 = vmul.f32 %v1725, 0.020408163
    %v3346 = vmul.f32 %v1728, 0.020408163
    %v3347 = vmul.f32 %v1731, 0.020408163
    %v3348 = vmul.f32 %v1734, 0.020408163
    %v3349 = vmul.f32 %v1737, 0.020408163
    %v3350 = vmul.f32 %v1740, 0.020408163
    %v3351 = vmul.f32 %v1743, 0.020408163
    %v3352 = vmul.f32 %v1746, 0.020408163
    %v3353 = vmul.f32 %v1749, 0.020408163
    %v3354 = vmul.f32 %v1752, 0.020408163
    %v3355 = vmul.f32 %v1755, 0.020408163
    %v3356 = vmul.f32 %v1758, 0.020408163
    %v3357 = vmul.f32 %v1761, 0.020408163
    %v3358 = vmul.f32 %v1764, 0.020408163
    %v3359 = vmul.f32 %v1767, 0.020408163
    %v3360 = vmul.f32 %v1770, 0.020408163
    %v3361 = vmul.f32 %v1773, 0.020408163
    %v3362 = vmul.f32 %v1776, 0.020408163
    %v3363 = vmul.f32 %v1779, 0.020408163
    %v3364 = vmul.f32 %v1782, 0.020408163
    %v3365 = vmul.f32 %v1785, 0.020408163
    %v3366 = vmul.f32 %v1788, 0.020408163
    %v3367 = vmul.f32 %v1791, 0.020408163
    %v3368 = vmul.f32 %v1794, 0.020408163
    %v3369 = vmul.f32 %v1797, 0.020408163
    %v3370 = vmul.f32 %v1800, 0.020408163
    %v3371 = vmul.f32 %v1803, 0.020408163
    %v3372 = vmul.f32 %v1806, 0.020408163
    %v3373 = vmul.f32 %v1809, 0.020408163
    %v3374 = vmul.f32 %v1812, 0.020408163
    %v3375 = vmul.f32 %v1815, 0.020408163
    %v3376 = vmul.f32 %v1818, 0.020408163
    %v3377 = vmul.f32 %v1821, 0.020408163
    %v3378 = vmul.f32 %v1824, 0.020408163
    %v3379 = vmul.f32 %v1827, 0.020408163
    %v3380 = vmul.f32 %v1830, 0.020408163
    %v3381 = vmul.f32 %v1833, 0.020408163
    %v3382 = vmul.f32 %v1836, 0.020408163
    %v3383 = vmul.f32 %v1839, 0.020408163
    %v3384 = vmul.f32 %v1842, 0.020408163
    %v3385 = vmul.f32 %v1845, 0.020408163
    %v3386 = vmul.f32 %v1848, 0.020408163
    %v3387 = vmul.f32 %v1851, 0.020408163
    %v3388 = vmul.f32 %v1854, 0.020408163
    %v3389 = vmul.f32 %v1857, 0.020408163
    %v3390 = vmul.f32 %v1860, 0.020408163
    %v3391 = vmul.f32 %v1863, 0.020408163
    %v3392 = vmul.f32 %v1866, 0.020408163
    %v3393 = vmul.f32 %v1869, 0.020408163
    %v3394 = vmul.f32 %v1872, 0.020408163
    %v3395 = vmul.f32 %v1875, 0.020408163
    %v3396 = vmul.f32 %v1878, 0.020408163
    %v3397 = vmul.f32 %v1881, 0.020408163
    %v3398 = vmul.f32 %v1884, 0.020408163
    %v3399 = vmul.f32 %v1887, 0.020408163
    %v3400 = vmul.f32 %v1890, 0.020408163
    %v3401 = vmul.f32 %v1893, 0.020408163
    %v3402 = vmul.f32 %v1896, 0.020408163
    %v3403 = vmul.f32 %v1899, 0.020408163
    %v3404 = vmul.f32 %v1902, 0.020408163
    %v3405 = vmul.f32 %v1905, 0.020408163
    %v3406 = vmul.f32 %v1908, 0.020408163
    %v3407 = vmul.f32 %v1911, 0.020408163
    %v3408 = vmul.f32 %v1914, 0.020408163
    %v3409 = vmul.f32 %v1917, 0.020408163
    %v3410 = vmul.f32 %v1920, 0.020408163
    %v3411 = vmul.f32 %v1923, 0.020408163
    %v3412 = vmul.f32 %v1926, 0.020408163
    %v3413 = vmul.f32 %v1929, 0.020408163
    %v3414 = vmul.f32 %v1932, 0.020408163
    %v3415 = vmul.f32 %v1935, 0.020408163
    %v3416 = vmul.f32 %v1938, 0.020408163
    %v3417 = vmul.f32 %v1941, 0.020408163
    %v3418 = vmul.f32 %v1944, 0.020408163
    %v3419 = vmul.f32 %v1947, 0.020408163
    %v3420 = vmul.f32 %v1950, 0.020408163
    %v3421 = vmul.f32 %v1953, 0.020408163
    %v3422 = vmul.f32 %v1956, 0.020408163
    %v3423 = vmul.f32 %v1959, 0.020408163
    %v3424 = vmul.f32 %v1962, 0.020408163
    %v3425 = vmul.f32 %v1965, 0.020408163
    %v3426 = vmul.f32 %v1968, 0.020408163
    %v3427 = vmul.f32 %v1971, 0.020408163
    %v3428 = vmul.f32 %v1974, 0.020408163
    %v3429 = vmul.f32 %v1977, 0.020408163
    %v3430 = vmul.f32 %v1980, 0.020408163
    %v3431 = vmul.f32 %v1983, 0.020408163
    %v3432 = vmul.f32 %v1986, 0.020408163
    %v3433 = vmul.f32 %v1989, 0.020408163
    %v3434 = vmul.f32 %v1992, 0.020408163
    %v3435 = vmul.f32 %v1995, 0.020408163
    %v3436 = vmul.f32 %v1998, 0.020408163
    %v3437 = vmul.f32 %v2001, 0.020408163
    %v3438 = vmul.f32 %v2004, 0.020408163
    %v3439 = vmul.f32 %v2007, 0.020408163
    %v3440 = vmul.f32 %v2010, 0.020408163
    %v3441 = vmul.f32 %v2013, 0.020408163
    %v3442 = vmul.f32 %v2016, 0.020408163
    %v3443 = vmul.f32 %v2019, 0.020408163
    %v3444 = vmul.f32 %v2022, 0.020408163
    %v3445 = vmul.f32 %v2025, 0.020408163
    %v3446 = vmul.f32 %v2028, 0.020408163
    %v3447 = vmul.f32 %v2031, 0.020408163
    %v3448 = vmul.f32 %v2034, 0.020408163
    %v3449 = vmul.f32 %v2037, 0.020408163
    %v3450 = vmul.f32 %v2040, 0.020408163
    %v3451 = vmul.f32 %v2043, 0.020408163
    %v3452 = vmul.f32 %v2046, 0.020408163
    %v3453 = vmul.f32 %v2049, 0.020408163
    %v3454 = vmul.f32 %v2052, 0.020408163
    %v3455 = vmul.f32 %v2055, 0.020408163
    %v3456 = vmul.f32 %v2058, 0.020408163
    %v3457 = vmul.f32 %v2061, 0.020408163
    %v3458 = vmul.f32 %v2064, 0.020408163
    %v3459 = vmul.f32 %v2067, 0.020408163
    %v3460 = vmul.f32 %v2070, 0.020408163
    %v3461 = vmul.f32 %v2073, 0.020408163
    %v3462 = vmul.f32 %v2076, 0.020408163
    %v3463 = vmul.f32 %v2079, 0.020408163
    %v3464 = vmul.f32 %v2082, 0.020408163
    %v3465 = vmul.f32 %v2085, 0.020408163
    %v3466 = vmul.f32 %v2088, 0.020408163
    %v3467 = vmul.f32 %v2091, 0.020408163
    %v3468 = vmul.f32 %v2094, 0.020408163
    %v3469 = vmul.f32 %v2097, 0.020408163
    %v3470 = vmul.f32 %v2100, 0.020408163
    %v3471 = vmul.f32 %v2103, 0.020408163
    %v3472 = vmul.f32 %v2106, 0.020408163
    %v3473 = vmul.f32 %v2109, 0.020408163
    %v3474 = vmul.f32 %v2112, 0.020408163
    %v3475 = vmul.f32 %v2115, 0.020408163
    %v3476 = vmul.f32 %v2118, 0.020408163
    %v3477 = vmul.f32 %v2121, 0.020408163
    %v3478 = vmul.f32 %v2124, 0.020408163
    %v3479 = vmul.f32 %v2127, 0.020408163
    %v3480 = vmul.f32 %v2130, 0.020408163
    %v3481 = vmul.f32 %v2133, 0.020408163
    %v3482 = vmul.f32 %v2136, 0.020408163
    %v3483 = vmul.f32 %v2139, 0.020408163
    %v3484 = vmul.f32 %v2142, 0.020408163
    %v3485 = vmul.f32 %v2145, 0.020408163
    %v3486 = vmul.f32 %v2148, 0.020408163
    %v3487 = vmul.f32 %v2151, 0.020408163
    %v3488 = vmul.f32 %v2154, 0.020408163
    %v3489 = vmul.f32 %v2157, 0.020408163
    %v3490 = vmul.f32 %v2160, 0.020408163
    %v3491 = vmul.f32 %v2163, 0.020408163
    %v3492 = vmul.f32 %v2166, 0.020408163
    %v3493 = vmul.f32 %v2169, 0.020408163
    %v3494 = vmul.f32 %v2172, 0.020408163
    %v3495 = vmul.f32 %v2175, 0.020408163
    %v3496 = vmul.f32 %v2178, 0.020408163
    %v3497 = vmul.f32 %v2181, 0.020408163
    %v3498 = vmul.f32 %v2184, 0.020408163
    %v3499 = vmul.f32 %v2187, 0.020408163
    %v3500 = vmul.f32 %v2190, 0.020408163
    %v3501 = vmul.f32 %v2193, 0.020408163
    %v3502 = vmul.f32 %v2196, 0.020408163
    %v3503 = vmul.f32 %v2199, 0.020408163
    %v3504 = vmul.f32 %v2202, 0.020408163
    %v3505 = vmul.f32 %v2205, 0.020408163
    %v3506 = vmul.f32 %v2208, 0.020408163
    %v3507 = vmul.f32 %v2211, 0.020408163
    %v3508 = vmul.f32 %v2214, 0.020408163
    %v3509 = vmul.f32 %v2217, 0.020408163
    %v3510 = vmul.f32 %v2220, 0.020408163
    %v3511 = vmul.f32 %v2223, 0.020408163
    %v3512 = vmul.f32 %v2226, 0.020408163
    %v3513 = vmul.f32 %v2229, 0.020408163
    %v3514 = vmul.f32 %v2232, 0.020408163
    %v3515 = vmul.f32 %v2235, 0.020408163
    %v3516 = vmul.f32 %v2238, 0.020408163
    %v3517 = vmul.f32 %v2241, 0.020408163
    %v3518 = vmul.f32 %v2244, 0.020408163
    %v3519 = vmul.f32 %v2247, 0.020408163
    %v3520 = vmul.f32 %v2250, 0.020408163
    %v3521 = vmul.f32 %v2253, 0.020408163
    %v3522 = vmul.f32 %v2256, 0.020408163
    %v3523 = vmul.f32 %v2259, 0.020408163
    %v3524 = vmul.f32 %v2262, 0.020408163
    %v3525 = vmul.f32 %v2265, 0.020408163
    %v3526 = vmul.f32 %v2268, 0.020408163
    %v3527 = vmul.f32 %v2271, 0.020408163
    %v3528 = vmul.f32 %v2274, 0.020408163
    %v3529 = vmul.f32 %v2277, 0.020408163
    %v3530 = vmul.f32 %v2280, 0.020408163
    %v3531 = vmul.f32 %v2283, 0.020408163
    %v3532 = vmul.f32 %v2286, 0.020408163
    %v3533 = vmul.f32 %v2289, 0.020408163
    %v3534 = vmul.f32 %v2292, 0.020408163
    %v3535 = vmul.f32 %v2295, 0.020408163
    %v3536 = vmul.f32 %v2298, 0.020408163
    %v3537 = vmul.f32 %v2301, 0.020408163
    %v3538 = vmul.f32 %v2304, 0.020408163
    %v3539 = vmul.f32 %v2307, 0.020408163
    %v3540 = vmul.f32 %v2310, 0.020408163
    %v3541 = vmul.f32 %v2313, 0.020408163
    %v3542 = vmul.f32 %v2316, 0.020408163
    %v3543 = vmul.f32 %v2319, 0.020408163
    %v3544 = vmul.f32 %v2322, 0.020408163
    %v3545 = vmul.f32 %v2325, 0.020408163
    %v3546 = vmul.f32 %v2328, 0.020408163
    %v3547 = vmul.f32 %v2331, 0.020408163
    %v3548 = vmul.f32 %v2334, 0.020408163
    %v3549 = vmul.f32 %v2337, 0.020408163
    %v3550 = vmul.f32 %v2340, 0.020408163
    %v3551 = vmul.f32 %v2343, 0.020408163
    %v3552 = vmul.f32 %v2346, 0.020408163
    %v3553 = vmul.f32 %v2349, 0.020408163
    %v3554 = vmul.f32 %v2352, 0.020408163
    %v3555 = vmul.f32 %v2355, 0.020408163
    %v3556 = vmul.f32 %v2358, 0.020408163
    %v3557 = vmul.f32 %v2361, 0.020408163
    %v3558 = vmul.f32 %v2364, 0.020408163
    %v3559 = vmul.f32 %v2367, 0.020408163
    %v3560 = vmul.f32 %v2370, 0.020408163
    %v3561 = vmul.f32 %v2373, 0.020408163
    %v3562 = vmul.f32 %v2376, 0.020408163
    %v3563 = vmul.f32 %v2379, 0.020408163
    %v3564 = vmul.f32 %v2382, 0.020408163
    %v3565 = vmul.f32 %v2385, 0.020408163
    %v3566 = vmul.f32 %v2388, 0.020408163
    %v3567 = vmul.f32 %v2391, 0.020408163
    %v3568 = vmul.f32 %v2394, 0.020408163
    %v3569 = vmul.f32 %v2397, 0.020408163
    %v3570 = vmul.f32 %v2400, 0.020408163
    %v3571 = vmul.f32 %v2403, 0.020408163
    %v3572 = vmul.f32 %v2406, 0.020408163
    %v3573 = vmul.f32 %v2409, 0.020408163
    %v3574 = vmul.f32 %v2412, 0.020408163
    %v3575 = vmul.f32 %v2415, 0.020408163
    %v3576 = vmul.f32 %v2418, 0.020408163
    %v3577 = vmul.f32 %v2421, 0.020408163
    %v3578 = vmul.f32 %v2424, 0.020408163
    %v3579 = vmul.f32 %v2427, 0.020408163
    %v3580 = vmul.f32 %v2430, 0.020408163
    %v3581 = vmul.f32 %v2433, 0.020408163
    %v3582 = vmul.f32 %v2436, 0.020408163
    %v3583 = vmul.f32 %v2439, 0.020408163
    %v3584 = vmul.f32 %v2442, 0.020408163
    %v3585 = vmul.f32 %v2445, 0.020408163
    %v3586 = vmul.f32 %v2448, 0.020408163
    %v3587 = vmul.f32 %v2451, 0.020408163
    %v3588 = vmul.f32 %v2454, 0.020408163
    %v3589 = vmul.f32 %v2457, 0.020408163
    %v3590 = vmul.f32 %v2460, 0.020408163
    %v3591 = vmul.f32 %v2463, 0.020408163
    %v3592 = vmul.f32 %v2466, 0.020408163
    %v3593 = vmul.f32 %v2469, 0.020408163
    %v3594 = vmul.f32 %v2472, 0.020408163
    %v3595 = vmul.f32 %v2475, 0.020408163
    %v3596 = vmul.f32 %v2478, 0.020408163
    %v3597 = vmul.f32 %v2481, 0.020408163
    %v3598 = vmul.f32 %v2484, 0.020408163
    %v3599 = vmul.f32 %v2487, 0.020408163
    %v3600 = vmul.f32 %v2490, 0.020408163
    %v3601 = vmul.f32 %v2493, 0.020408163
    %v3602 = vmul.f32 %v2496, 0.020408163
    %v3603 = vmul.f32 %v2499, 0.020408163
    %v3604 = vmul.f32 %v2502, 0.020408163
    %v3605 = vmul.f32 %v2505, 0.020408163
    %v3606 = vmul.f32 %v2508, 0.020408163
    %v3607 = vmul.f32 %v2511, 0.020408163
    %v3608 = vmul.f32 %v2514, 0.020408163
    %v3609 = vmul.f32 %v2517, 0.020408163
    %v3610 = vmul.f32 %v2520, 0.020408163
    %v3611 = vmul.f32 %v2523, 0.020408163
    %v3612 = vmul.f32 %v2526, 0.020408163
    %v3613 = vmul.f32 %v2529, 0.020408163
    %v3614 = vmul.f32 %v2532, 0.020408163
    %v3615 = vmul.f32 %v2535, 0.020408163
    %v3616 = vmul.f32 %v2538, 0.020408163
    %v3617 = vmul.f32 %v2541, 0.020408163
    %v3618 = vmul.f32 %v2544, 0.020408163
    %v3619 = vmul.f32 %v2547, 0.020408163
    %v3620 = vmul.f32 %v2550, 0.020408163
    %v3621 = vmul.f32 %v2553, 0.020408163
    %v3622 = vmul.f32 %v2556, 0.020408163
    %v3623 = vmul.f32 %v2559, 0.020408163
    %v3624 = vmul.f32 %v2562, 0.020408163
    %v3625 = vmul.f32 %v2565, 0.020408163
    %v3626 = vmul.f32 %v2568, 0.020408163
    %v3627 = vmul.f32 %v2571, 0.020408163
    %v3628 = vmul.f32 %v2574, 0.020408163
    %v3629 = vmul.f32 %v2577, 0.020408163
    %v3630 = vmul.f32 %v2580, 0.020408163
    %v3631 = vmul.f32 %v2583, 0.020408163
    %v3632 = vmul.f32 %v2586, 0.020408163
    %v3633 = vmul.f32 %v2589, 0.020408163
    %v3634 = vmul.f32 %v2592, 0.020408163
    %v3635 = vmul.f32 %v2595, 0.020408163
    %v3636 = vmul.f32 %v2598, 0.020408163
    %v3637 = vmul.f32 %v2601, 0.020408163
    %v3638 = vmul.f32 %v2604, 0.020408163
    %v3639 = vmul.f32 %v2607, 0.020408163
    %v3640 = vmul.f32 %v2610, 0.020408163
    %v3641 = vmul.f32 %v2613, 0.020408163
    %v3642 = vmul.f32 %v2616, 0.020408163
    %v3643 = vmul.f32 %v2619, 0.020408163
    %v3644 = vmul.f32 %v2622, 0.020408163
    %v3645 = vmul.f32 %v2625, 0.020408163
    %v3646 = vmul.f32 %v2628, 0.020408163
    %v3647 = vmul.f32 %v2631, 0.020408163
    %v3648 = vmul.f32 %v2634, 0.020408163
    %v3649 = vmul.f32 %v2637, 0.020408163
    %v3650 = vmul.f32 %v2640, 0.020408163
    %v3651 = vmul.f32 %v2643, 0.020408163
    %v3652 = vmul.f32 %v2646, 0.020408163
    %v3653 = vmul.f32 %v2649, 0.020408163
    %v3654 = vmul.f32 %v2652, 0.020408163
    %v3655 = vmul.f32 %v2655, 0.020408163
    %v3656 = vmul.f32 %v2658, 0.020408163
    %v3657 = vmul.f32 %v2661, 0.020408163
    %v3658 = vmul.f32 %v2664, 0.020408163
    %v3659 = vmul.f32 %v2667, 0.020408163
    %v3660 = vmul.f32 %v2670, 0.020408163
    %v3661 = vmul.f32 %v2673, 0.020408163
    %v3662 = vmul.f32 %v2676, 0.020408163
    %v3663 = vmul.f32 %v2679, 0.020408163
    %v3664 = vmul.f32 %v2682, 0.020408163
    %v3665 = vmul.f32 %v2685, 0.020408163
    %v3666 = vmul.f32 %v2688, 0.020408163
    %v3667 = vmul.f32 %v2691, 0.020408163
    %v3668 = vmul.f32 %v2694, 0.020408163
    %v3669 = vmul.f32 %v2697, 0.020408163
    %v3670 = vmul.f32 %v2700, 0.020408163
    %v3671 = vmul.f32 %v2703, 0.020408163
    %v3672 = vmul.f32 %v2706, 0.020408163
    %v3673 = vmul.f32 %v2709, 0.020408163
    %v3674 = vmul.f32 %v2712, 0.020408163
    %v3675 = vmul.f32 %v2715, 0.020408163
    %v3676 = vmul.f32 %v2718, 0.020408163
    %v3677 = vmul.f32 %v2721, 0.020408163
    %v3678 = vmul.f32 %v2724, 0.020408163
    %v3679 = vmul.f32 %v2727, 0.020408163
    %v3680 = vmul.f32 %v2730, 0.020408163
    %v3681 = vmul.f32 %v2733, 0.020408163
    %v3682 = vmul.f32 %v2736, 0.020408163
    %v3683 = vmul.f32 %v2739, 0.020408163
    %v3684 = vmul.f32 %v2742, 0.020408163
    %v3685 = vmul.f32 %v2745, 0.020408163
    %v3686 = vmul.f32 %v2748, 0.020408163
    %v3687 = vmul.f32 %v2751, 0.020408163
    %v3688 = vmul.f32 %v2754, 0.020408163
    %v3689 = vmul.f32 %v2757, 0.020408163
    %v3690 = vmul.f32 %v2760, 0.020408163
    %v3691 = vmul.f32 %v2763, 0.020408163
    %v3692 = vmul.f32 %v2766, 0.020408163
    %v3693 = vmul.f32 %v2769, 0.020408163
    %v3694 = vmul.f32 %v2772, 0.020408163
    %v3695 = vmul.f32 %v2775, 0.020408163
    %v3696 = vmul.f32 %v2778, 0.020408163
    %v3697 = vmul.f32 %v2781, 0.020408163
    %v3698 = vmul.f32 %v2784, 0.020408163
    %v3699 = vmul.f32 %v2787, 0.020408163
    %v3700 = vmul.f32 %v2790, 0.020408163
    %v3701 = vmul.f32 %v2793, 0.020408163
    %v3702 = vmul.f32 %v2796, 0.020408163
    %v3703 = vmul.f32 %v2799, 0.020408163
    %v3704 = vmul.f32 %v2802, 0.020408163
    %v3705 = vmul.f32 %v2805, 0.020408163
    %v3706 = vmul.f32 %v2808, 0.020408163
    %v3707 = vmul.f32 %v2811, 0.020408163
    %v3708 = vmul.f32 %v2814, 0.020408163
    %v3709 = vmul.f32 %v2817, 0.020408163
    %v3710 = vmul.f32 %v2820, 0.020408163
    %v3711 = vmul.f32 %v2823, 0.020408163
    %v3712 = vmul.f32 %v2826, 0.020408163
    %v3713 = vmul.f32 %v2829, 0.020408163
    %v3714 = vmul.f32 %v2832, 0.020408163
    %v3715 = vmul.f32 %v2835, 0.020408163
    %v3716 = vmul.f32 %v2838, 0.020408163
    %v3717 = vmul.f32 %v2841, 0.020408163
    %v3718 = vmul.f32 %v2844, 0.020408163
    %v3719 = vmul.f32 %v2847, 0.020408163
    %v3720 = vmul.f32 %v2850, 0.020408163
    %v3721 = vmul.f32 %v2853, 0.020408163
    %v3722 = vmul.f32 %v2856, 0.020408163
    %v3723 = vmul.f32 %v2859, 0.020408163
    %v3724 = vmul.f32 %v2862, 0.020408163
    %v3725 = vmul.f32 %v2865, 0.020408163
    %v3726 = vmul.f32 %v2868, 0.020408163
    %v3727 = vmul.f32 %v2871, 0.020408163
    %v3728 = vmul.f32 %v2874, 0.020408163
    %v3729 = vmul.f32 %v2877, 0.020408163
    %v3730 = vmul.f32 %v2880, 0.020408163
    %v3731 = vmul.f32 %v2883, 0.020408163
    %v3732 = vmul.f32 %v2886, 0.020408163
    %v3733 = vmul.f32 %v2889, 0.020408163
    %v3734 = vmul.f32 %v2892, 0.020408163
    %v3735 = vmul.f32 %v2895, 0.020408163
    %v3736 = vmul.f32 %v2898, 0.020408163
    %v3737 = vmul.f32 %v2901, 0.020408163
    %v3738 = vmul.f32 %v2904, 0.020408163
    %v3739 = vmul.f32 %v2907, 0.020408163
    %v3740 = vmul.f32 %v2910, 0.020408163
    %v3741 = vmul.f32 %v2913, 0.020408163
    %v3742 = vmul.f32 %v2916, 0.020408163
    %v3743 = vmul.f32 %v2919, 0.020408163
    %v3744 = vmul.f32 %v2922, 0.020408163
    %v3745 = vmul.f32 %v2925, 0.020408163
    %v3746 = vmul.f32 %v2928, 0.020408163
    %v3747 = vmul.f32 %v2931, 0.020408163
    %v3748 = vmul.f32 %v2934, 0.020408163
    %v3749 = vmul.f32 %v2937, 0.020408163
    %v3750 = vmul.f32 %v2940, 0.020408163
    %v3751 = vmul.f32 %v2943, 0.020408163
    %v3752 = vmul.f32 %v2946, 0.020408163
    %v3753 = vmul.f32 %v2949, 0.020408163
    %v3754 = vmul.f32 %v2952, 0.020408163
    %v3755 = vmul.f32 %v2955, 0.020408163
    %v3756 = vmul.f32 %v2958, 0.020408163
    %v3757 = vmul.f32 %v2961, 0.020408163
    %v3758 = vmul.f32 %v2964, 0.020408163
    %v3759 = vmul.f32 %v2967, 0.020408163
    %v3760 = vmul.f32 %v2970, 0.020408163
    %v3761 = vmul.f32 %v2973, 0.020408163
    %v3762 = vmul.f32 %v2976, 0.020408163
    %v3763 = vmul.f32 %v2979, 0.020408163
    %v3764 = vmul.f32 %v2982, 0.020408163
    %v3765 = vmul.f32 %v2985, 0.020408163
    %v3766 = vmul.f32 %v2988, 0.020408163
    %v3767 = vmul.f32 %v2991, 0.020408163
    %v3768 = vmul.f32 %v2994, 0.020408163
    %v3769 = vmul.f32 %v2997, 0.020408163
    %v3770 = vmul.f32 %v3000, 0.020408163
    %v3771 = vmul.f32 %v3003, 0.020408163
    %v3772 = vmul.f32 %v3006, 0.020408163
    %v3773 = vmul.f32 %v3009, 0.020408163
    %v3774 = vmul.f32 %v3012, 0.020408163
    %v3775 = vmul.f32 %v3015, 0.020408163
    %v3776 = vmul.f32 %v3018, 0.020408163
    %v3777 = vmul.f32 %v3021, 0.020408163
    %v3778 = vmul.f32 %v3024, 0.020408163
    %v3779 = vmul.f32 %v3027, 0.020408163
    %v3780 = vmul.f32 %v3030, 0.020408163
    %v3781 = vmul.f32 %v3033, 0.020408163
    %v3782 = vmul.f32 %v3036, 0.020408163
    %v3783 = vmul.f32 %v3039, 0.020408163
    %v3784 = vmul.f32 %v3042, 0.020408163
    %v3785 = vmul.f32 %v3045, 0.020408163
    %v3786 = vmul.f32 %v3048, 0.020408163
    %v3787 = vmul.f32 %v3051, 0.020408163
    %v3788 = vmul.f32 %v3054, 0.020408163
    %v3789 = vmul.f32 %v3057, 0.020408163
    %v3790 = vmul.f32 %v3060, 0.020408163
    %v3791 = vmul.f32 %v3063, 0.020408163
    %v3792 = vmul.f32 %v3066, 0.020408163
    %v3793 = vmul.f32 %v3069, 0.020408163
    %v3794 = vmul.f32 %v3072, 0.020408163
    %v3795 = vmul.f32 %v3075, 0.020408163
    %v3796 = vmul.f32 %v3078, 0.020408163
    %v3797 = vmul.f32 %v3081, 0.020408163
    %v3798 = vmul.f32 %v3084, 0.020408163
    %v3799 = vmul.f32 %v3087, 0.020408163
    %v3800 = vmul.f32 %v3090, 0.020408163
    %v3801 = vmul.f32 %v3093, 0.020408163
    %v3802 = vmul.f32 %v3096, 0.020408163
    %v3803 = vmul.f32 %v3099, 0.020408163
    %v3804 = vmul.f32 %v3102, 0.020408163
    %v3805 = vmul.f32 %v3105, 0.020408163
    %v3806 = vmul.f32 %v3108, 0.020408163
    %v3807 = vmul.f32 %v3111, 0.020408163
    %v3808 = vmul.f32 %v3114, 0.020408163
    %v3809 = vmul.f32 %v3117, 0.020408163
    %v3810 = vmul.f32 %v3120, 0.020408163
    %v3811 = vmul.f32 %v3123, 0.020408163
    %v3812 = vmul.f32 %v3126, 0.020408163
    %v3813 = vmul.f32 %v3129, 0.020408163
    %v3814 = vmul.f32 %v3132, 0.020408163
    %v3815 = vmul.f32 %v3135, 0.020408163
    %v3816 = vmul.f32 %v3138, 0.020408163
    %v3817 = vmul.f32 %v3141, 0.020408163
    %v3818 = vmul.f32 %v3144, 0.020408163
    %v3819 = vmul.f32 %v3147, 0.020408163
    %v3820 = vmul.f32 %v3150, 0.020408163
    %v3821 = vmul.f32 %v3153, 0.020408163
    %v3822 = vmul.f32 %v3156, 0.020408163
    %v3823 = vmul.f32 %v3159, 0.020408163
    %v3824 = vmul.f32 %v3162, 0.020408163
    %v3825 = vmul.f32 %v3165, 0.020408163
    %v3826 = vmul.f32 %v3168, 0.020408163
    %v3827 = vmul.f32 %v3171, 0.020408163
    %v3828 = vmul.f32 %v3174, 0.020408163
    %v3829 = vmul.f32 %v3177, 0.020408163
    %v3830 = vmul.f32 %v3180, 0.020408163
    %v3831 = vmul.f32 %v3183, 0.020408163
    %v3832 = vmul.f32 %v3186, 0.020408163
    %v3833 = vmul.f32 %v3189, 0.020408163
    %v3834 = vmul.f32 %v3192, 0.020408163
    %v3835 = vmul.f32 %v3195, 0.020408163
    %v3836 = vmul.f32 %v3198, 0.020408163
    %v3837 = vmul.f32 %v3201, 0.020408163
    %v3838 = vmul.f32 %v3204, 0.020408163
    %v3839 = vmul.f32 %v3207, 0.020408163
    %v3840 = vmul.f32 %v3210, 0.020408163
    %v3841 = vmul.f32 %v3213, 0.020408163
    %v3842 = vmul.f32 %v3216, 0.020408163
    %v3843 = vmul.f32 %v3219, 0.020408163
    %v3844 = vmul.f32 %v3222, 0.020408163
    %v3845 = vmul.f32 %v3225, 0.020408163
    %v3846 = vmul.f32 %v3228, 0.020408163
    %v3847 = vmul.f32 %v3231, 0.020408163
    %v3848 = vmul.f32 %v3234, 0.020408163
    %v3849 = vmul.f32 %v3237, 0.020408163
    %v3850 = vmul.f32 %v3240, 0.020408163
    %v3851 = vmul.f32 %v3243, 0.020408163
    %v3852 = vmul.f32 %v3246, 0.020408163
    %v3853 = vmul.f32 %v3249, 0.020408163
    %v3854 = vmul.f32 %v3252, 0.020408163
    %v3855 = vmul.f32 %v3255, 0.020408163
    %v3856 = vmul.f32 %v3258, 0.020408163
    %v3857 = vmul.f32 %v3261, 0.020408163
    %v3858 = vmul.f32 %v3264, 0.020408163
    %v3859 = vmul.f32 %v3267, 0.020408163
    %v3860 = vmul.f32 %v3270, 0.020408163
    %v3861 = vmul.f32 %v3273, 0.020408163
    %v3862 = vmul.f32 %v3276, 0.020408163
    %v3863 = vmul.f32 %v3279, 0.020408163
    %v3864 = vmul.f32 %v3282, 0.020408163
    %v3865 = vmul.f32 %v3285, 0.020408163
    %v3866 = vmul.f32 %v3288, 0.020408163
    %v3867 = vmul.f32 %v3291, 0.020408163
    %v3868 = vmul.f32 %v3294, 0.020408163
    %v3869 = vmul.f32 %v3297, 0.020408163
    %v3870 = vmul.f32 %v3300, 0.020408163
    %v3871 = vmul.f32 %v3303, 0.020408163
    %v3872 = vmul.f32 %v3306, 0.020408163
    %v3873 = vmul.f32 %v3309, 0.020408163
    %v3874 = vmul.f32 %v3312, 0.020408163
    %v3875 = vmul.f32 %v3315, 0.020408163
    %v3876 = vmul.f32 %v3318, 0.020408163
    %v3877 = vmul.f32 %v3321, 0.020408163
    %v3878 = vmul.f32 %v3324, 0.020408163
    %v3879 = vmul.f32 %v3327, 0.020408163
    %v3880 = vld [vmem:[%s1] sm:$0xff]
    %v3881 = vld [vmem:[%s1 + $0x8] sm:$0xff]
    %v3882 = vld [vmem:[%s1 + $0x10] sm:$0xff]
    %v3883 = vld [vmem:[%s1 + $0x18] sm:$0xff]
    %v3884 = vld [vmem:[%s1 + $0x20] sm:$0xff]
    %v3885 = vld [vmem:[%s1 + $0x28] sm:$0xff]
    %v3886 = vld [vmem:[%s1 + $0x30] sm:$0xff]
    %v3887 = vld [vmem:[%s1 + $0x38] sm:$0xff]
    %v3888 = vld [vmem:[%s1 + $0x40] sm:$0xff]
    %v3889 = vld [vmem:[%s1 + $0x48] sm:$0xff]
    %v3890 = vld [vmem:[%s1 + $0x50] sm:$0xff]
    %v3891 = vld [vmem:[%s1 + $0x58] sm:$0xff]
    %v3892 = vld [vmem:[%s1 + $0x60] sm:$0xff]
    %v3893 = vld [vmem:[%s1 + $0x68] sm:$0xff]
    %v3894 = vld [vmem:[%s1 + $0x70] sm:$0xff]
    %v3895 = vld [vmem:[%s1 + $0x78] sm:$0xff]
    %v3896 = vld [vmem:[%s1 + $0x80] sm:$0xff]
    %v3897 = vld [vmem:[%s1 + $0x88] sm:$0xff]
    %v3898 = vld [vmem:[%s1 + $0x90] sm:$0xff]
    %v3899 = vld [vmem:[%s1 + $0x98] sm:$0xff]
    %v3900 = vld [vmem:[%s1 + $0xa0] sm:$0xff]
    %v3901 = vld [vmem:[%s1 + $0xa8] sm:$0xff]
    %v3902 = vld [vmem:[%s1 + $0xb0] sm:$0xff]
    %v3903 = vld [vmem:[%s1 + $0xb8] sm:$0xff]
    %v3904 = vld [vmem:[%s1 + $0xc0] sm:$0xff]
    %v3905 = vld [vmem:[%s1 + $0xc8] sm:$0xff]
    %v3906 = vld [vmem:[%s1 + $0xd0] sm:$0xff]
    %v3907 = vld [vmem:[%s1 + $0xd8] sm:$0xff]
    %v3908 = vld [vmem:[%s1 + $0xe0] sm:$0xff]
    %v3909 = vld [vmem:[%s1 + $0xe8] sm:$0xff]
    %v3910 = vld [vmem:[%s1 + $0xf0] sm:$0xff]
    %v3911 = vld [vmem:[%s1 + $0xf8] sm:$0xff]
    %v3912 = vld [vmem:[%s1 + $0x100] sm:$0xff]
    %v3913 = vld [vmem:[%s1 + $0x108] sm:$0xff]
    %v3914 = vld [vmem:[%s1 + $0x110] sm:$0xff]
    %v3915 = vld [vmem:[%s1 + $0x118] sm:$0xff]
    %v3916 = vld [vmem:[%s1 + $0x120] sm:$0xff]
    %v3917 = vld [vmem:[%s1 + $0x128] sm:$0xff]
    %v3918 = vld [vmem:[%s1 + $0x130] sm:$0xff]
    %v3919 = vld [vmem:[%s1 + $0x138] sm:$0xff]
    %v3920 = vld [vmem:[%s1 + $0x140] sm:$0xff]
    %v3921 = vld [vmem:[%s1 + $0x148] sm:$0xff]
    %v3922 = vld [vmem:[%s1 + $0x150] sm:$0xff]
    %v3923 = vld [vmem:[%s1 + $0x158] sm:$0xff]
    %v3924 = vld [vmem:[%s1 + $0x160] sm:$0xff]
    %v3925 = vld [vmem:[%s1 + $0x168] sm:$0xff]
    %v3926 = vld [vmem:[%s1 + $0x170] sm:$0xff]
    %v3927 = vld [vmem:[%s1 + $0x178] sm:$0xff]
    %v3928 = vld [vmem:[%s1 + $0x180] sm:$0xff]
    %v3929 = vld [vmem:[%s1 + $0x188] sm:$0xff]
    %v3930 = vld [vmem:[%s1 + $0x190] sm:$0xff]
    %v3931 = vld [vmem:[%s1 + $0x198] sm:$0xff]
    %v3932 = vld [vmem:[%s1 + $0x1a0] sm:$0xff]
    %v3933 = vld [vmem:[%s1 + $0x1a8] sm:$0xff]
    %v3934 = vld [vmem:[%s1 + $0x1b0] sm:$0xff]
    %v3935 = vld [vmem:[%s1 + $0x1b8] sm:$0xff]
    %v3936 = vld [vmem:[%s1 + $0x1c0] sm:$0xff]
    %v3937 = vld [vmem:[%s1 + $0x1c8] sm:$0xff]
    %v3938 = vld [vmem:[%s1 + $0x1d0] sm:$0xff]
    %v3939 = vld [vmem:[%s1 + $0x1d8] sm:$0xff]
    %v3940 = vld [vmem:[%s1 + $0x1e0] sm:$0xff]
    %v3941 = vld [vmem:[%s1 + $0x1e8] sm:$0xff]
    %v3942 = vld [vmem:[%s1 + $0x1f0] sm:$0xff]
    %v3943 = vld [vmem:[%s1 + $0x1f8] sm:$0xff]
    %v3944 = vld [vmem:[%s1 + $0x200] sm:$0xff]
    %v3945 = vld [vmem:[%s1 + $0x208] sm:$0xff]
    %v3946 = vld [vmem:[%s1 + $0x210] sm:$0xff]
    %v3947 = vld [vmem:[%s1 + $0x218] sm:$0xff]
    %v3948 = vld [vmem:[%s1 + $0x220] sm:$0xff]
    %v3949 = vld [vmem:[%s1 + $0x228] sm:$0xff]
    %v3950 = vld [vmem:[%s1 + $0x230] sm:$0xff]
    %v3951 = vld [vmem:[%s1 + $0x238] sm:$0xff]
    %v3952 = vld [vmem:[%s1 + $0x240] sm:$0xff]
    %v3953 = vld [vmem:[%s1 + $0x248] sm:$0xff]
    %v3954 = vld [vmem:[%s1 + $0x250] sm:$0xff]
    %v3955 = vld [vmem:[%s1 + $0x258] sm:$0xff]
    %v3956 = vld [vmem:[%s1 + $0x260] sm:$0xff]
    %v3957 = vld [vmem:[%s1 + $0x268] sm:$0xff]
    %v3958 = vld [vmem:[%s1 + $0x270] sm:$0xff]
    %v3959 = vld [vmem:[%s1 + $0x278] sm:$0xff]
    %v3960 = vld [vmem:[%s1 + $0x280] sm:$0xff]
    %v3961 = vld [vmem:[%s1 + $0x288] sm:$0xff]
    %v3962 = vld [vmem:[%s1 + $0x290] sm:$0xff]
    %v3963 = vld [vmem:[%s1 + $0x298] sm:$0xff]
    %v3964 = vld [vmem:[%s1 + $0x2a0] sm:$0xff]
    %v3965 = vld [vmem:[%s1 + $0x2a8] sm:$0xff]
    %v3966 = vld [vmem:[%s1 + $0x2b0] sm:$0xff]
    %v3967 = vld [vmem:[%s1 + $0x2b8] sm:$0xff]
    %v3968 = vld [vmem:[%s1 + $0x2c0] sm:$0xff]
    %v3969 = vld [vmem:[%s1 + $0x2c8] sm:$0xff]
    %v3970 = vld [vmem:[%s1 + $0x2d0] sm:$0xff]
    %v3971 = vld [vmem:[%s1 + $0x2d8] sm:$0xff]
    %v3972 = vld [vmem:[%s1 + $0x2e0] sm:$0xff]
    %v3973 = vld [vmem:[%s1 + $0x2e8] sm:$0xff]
    %v3974 = vld [vmem:[%s1 + $0x2f0] sm:$0xff]
    %v3975 = vld [vmem:[%s1 + $0x2f8] sm:$0xff]
    %v3976 = vld [vmem:[%s1 + $0x300] sm:$0xff]
    %v3977 = vld [vmem:[%s1 + $0x308] sm:$0xff]
    %v3978 = vld [vmem:[%s1 + $0x310] sm:$0xff]
    %v3979 = vld [vmem:[%s1 + $0x318] sm:$0xff]
    %v3980 = vld [vmem:[%s1 + $0x320] sm:$0xff]
    %v3981 = vld [vmem:[%s1 + $0x328] sm:$0xff]
    %v3982 = vld [vmem:[%s1 + $0x330] sm:$0xff]
    %v3983 = vld [vmem:[%s1 + $0x338] sm:$0xff]
    %v3984 = vld [vmem:[%s1 + $0x340] sm:$0xff]
    %v3985 = vld [vmem:[%s1 + $0x348] sm:$0xff]
    %v3986 = vld [vmem:[%s1 + $0x350] sm:$0xff]
    %v3987 = vld [vmem:[%s1 + $0x358] sm:$0xff]
    %v3988 = vld [vmem:[%s1 + $0x360] sm:$0xff]
    %v3989 = vld [vmem:[%s1 + $0x368] sm:$0xff]
    %v3990 = vld [vmem:[%s1 + $0x370] sm:$0xff]
    %v3991 = vld [vmem:[%s1 + $0x378] sm:$0xff]
    %v3992 = vld [vmem:[%s1 + $0x380] sm:$0xff]
    %v3993 = vld [vmem:[%s1 + $0x388] sm:$0xff]
    %v3994 = vld [vmem:[%s1 + $0x390] sm:$0xff]
    %v3995 = vld [vmem:[%s1 + $0x398] sm:$0xff]
    %v3996 = vld [vmem:[%s1 + $0x3a0] sm:$0xff]
    %v3997 = vld [vmem:[%s1 + $0x3a8] sm:$0xff]
    %v3998 = vld [vmem:[%s1 + $0x3b0] sm:$0xff]
    %v3999 = vld [vmem:[%s1 + $0x3b8] sm:$0xff]
    %v4000 = vld [vmem:[%s1 + $0x3c0] sm:$0xff]
    %v4001 = vld [vmem:[%s1 + $0x3c8] sm:$0xff]
    %v4002 = vld [vmem:[%s1 + $0x3d0] sm:$0xff]
    %v4003 = vld [vmem:[%s1 + $0x3d8] sm:$0xff]
    %v4004 = vld [vmem:[%s1 + $0x3e0] sm:$0xff]
    %v4005 = vld [vmem:[%s1 + $0x3e8] sm:$0xff]
    %v4006 = vld [vmem:[%s1 + $0x3f0] sm:$0xff]
    %v4007 = vld [vmem:[%s1 + $0x3f8] sm:$0xff]
    %v4008 = vld [vmem:[%s1 + $0x400] sm:$0xff]
    %v4009 = vld [vmem:[%s1 + $0x408] sm:$0xff]
    %v4010 = vld [vmem:[%s1 + $0x410] sm:$0xff]
    %v4011 = vld [vmem:[%s1 + $0x418] sm:$0xff]
    %v4012 = vld [vmem:[%s1 + $0x420] sm:$0xff]
    %v4013 = vld [vmem:[%s1 + $0x428] sm:$0xff]
    %v4014 = vld [vmem:[%s1 + $0x430] sm:$0xff]
    %v4015 = vld [vmem:[%s1 + $0x438] sm:$0xff]
    %v4016 = vld [vmem:[%s1 + $0x440] sm:$0xff]
    %v4017 = vld [vmem:[%s1 + $0x448] sm:$0xff]
    %v4018 = vld [vmem:[%s1 + $0x450] sm:$0xff]
    %v4019 = vld [vmem:[%s1 + $0x458] sm:$0xff]
    %v4020 = vld [vmem:[%s1 + $0x460] sm:$0xff]
    %v4021 = vld [vmem:[%s1 + $0x468] sm:$0xff]
    %v4022 = vld [vmem:[%s1 + $0x470] sm:$0xff]
    %v4023 = vld [vmem:[%s1 + $0x478] sm:$0xff]
    %v4024 = vld [vmem:[%s1 + $0x480] sm:$0xff]
    %v4025 = vld [vmem:[%s1 + $0x488] sm:$0xff]
    %v4026 = vld [vmem:[%s1 + $0x490] sm:$0xff]
    %v4027 = vld [vmem:[%s1 + $0x498] sm:$0xff]
    %v4028 = vld [vmem:[%s1 + $0x4a0] sm:$0xff]
    %v4029 = vld [vmem:[%s1 + $0x4a8] sm:$0xff]
    %v4030 = vld [vmem:[%s1 + $0x4b0] sm:$0xff]
    %v4031 = vld [vmem:[%s1 + $0x4b8] sm:$0xff]
    %v4032 = vld [vmem:[%s1 + $0x4c0] sm:$0xff]
    %v4033 = vld [vmem:[%s1 + $0x4c8] sm:$0xff]
    %v4034 = vld [vmem:[%s1 + $0x4d0] sm:$0xff]
    %v4035 = vld [vmem:[%s1 + $0x4d8] sm:$0xff]
    %v4036 = vld [vmem:[%s1 + $0x4e0] sm:$0xff]
    %v4037 = vld [vmem:[%s1 + $0x4e8] sm:$0xff]
    %v4038 = vld [vmem:[%s1 + $0x4f0] sm:$0xff]
    %v4039 = vld [vmem:[%s1 + $0x4f8] sm:$0xff]
    %v4040 = vld [vmem:[%s1 + $0x500] sm:$0xff]
    %v4041 = vld [vmem:[%s1 + $0x508] sm:$0xff]
    %v4042 = vld [vmem:[%s1 + $0x510] sm:$0xff]
    %v4043 = vld [vmem:[%s1 + $0x518] sm:$0xff]
    %v4044 = vld [vmem:[%s1 + $0x520] sm:$0xff]
    %v4045 = vld [vmem:[%s1 + $0x528] sm:$0xff]
    %v4046 = vld [vmem:[%s1 + $0x530] sm:$0xff]
    %v4047 = vld [vmem:[%s1 + $0x538] sm:$0xff]
    %v4048 = vld [vmem:[%s1 + $0x540] sm:$0xff]
    %v4049 = vld [vmem:[%s1 + $0x548] sm:$0xff]
    %v4050 = vld [vmem:[%s1 + $0x550] sm:$0xff]
    %v4051 = vld [vmem:[%s1 + $0x558] sm:$0xff]
    %v4052 = vld [vmem:[%s1 + $0x560] sm:$0xff]
    %v4053 = vld [vmem:[%s1 + $0x568] sm:$0xff]
    %v4054 = vld [vmem:[%s1 + $0x570] sm:$0xff]
    %v4055 = vld [vmem:[%s1 + $0x578] sm:$0xff]
    %v4056 = vld [vmem:[%s1 + $0x580] sm:$0xff]
    %v4057 = vld [vmem:[%s1 + $0x588] sm:$0xff]
    %v4058 = vld [vmem:[%s1 + $0x590] sm:$0xff]
    %v4059 = vld [vmem:[%s1 + $0x598] sm:$0xff]
    %v4060 = vld [vmem:[%s1 + $0x5a0] sm:$0xff]
    %v4061 = vld [vmem:[%s1 + $0x5a8] sm:$0xff]
    %v4062 = vld [vmem:[%s1 + $0x5b0] sm:$0xff]
    %v4063 = vld [vmem:[%s1 + $0x5b8] sm:$0xff]
    %v4064 = vld [vmem:[%s1 + $0x5c0] sm:$0xff]
    %v4065 = vld [vmem:[%s1 + $0x5c8] sm:$0xff]
    %v4066 = vld [vmem:[%s1 + $0x5d0] sm:$0xff]
    %v4067 = vld [vmem:[%s1 + $0x5d8] sm:$0xff]
    %v4068 = vld [vmem:[%s1 + $0x5e0] sm:$0xff]
    %v4069 = vld [vmem:[%s1 + $0x5e8] sm:$0xff]
    %v4070 = vld [vmem:[%s1 + $0x5f0] sm:$0xff]
    %v4071 = vld [vmem:[%s1 + $0x5f8] sm:$0xff]
    %v4072 = vld [vmem:[%s1 + $0x600] sm:$0xff]
    %v4073 = vld [vmem:[%s1 + $0x608] sm:$0xff]
    %v4074 = vld [vmem:[%s1 + $0x610] sm:$0xff]
    %v4075 = vld [vmem:[%s1 + $0x618] sm:$0xff]
    %v4076 = vld [vmem:[%s1 + $0x620] sm:$0xff]
    %v4077 = vld [vmem:[%s1 + $0x628] sm:$0xff]
    %v4078 = vld [vmem:[%s1 + $0x630] sm:$0xff]
    %v4079 = vld [vmem:[%s1 + $0x638] sm:$0xff]
    %v4080 = vld [vmem:[%s1 + $0x640] sm:$0xff]
    %v4081 = vld [vmem:[%s1 + $0x648] sm:$0xff]
    %v4082 = vld [vmem:[%s1 + $0x650] sm:$0xff]
    %v4083 = vld [vmem:[%s1 + $0x658] sm:$0xff]
    %v4084 = vld [vmem:[%s1 + $0x660] sm:$0xff]
    %v4085 = vld [vmem:[%s1 + $0x668] sm:$0xff]
    %v4086 = vld [vmem:[%s1 + $0x670] sm:$0xff]
    %v4087 = vld [vmem:[%s1 + $0x678] sm:$0xff]
    %v4088 = vld [vmem:[%s1 + $0x680] sm:$0xff]
    %v4089 = vld [vmem:[%s1 + $0x688] sm:$0xff]
    %v4090 = vld [vmem:[%s1 + $0x690] sm:$0xff]
    %v4091 = vld [vmem:[%s1 + $0x698] sm:$0xff]
    %v4092 = vld [vmem:[%s1 + $0x6a0] sm:$0xff]
    %v4093 = vld [vmem:[%s1 + $0x6a8] sm:$0xff]
    %v4094 = vld [vmem:[%s1 + $0x6b0] sm:$0xff]
    %v4095 = vld [vmem:[%s1 + $0x6b8] sm:$0xff]
    %v4096 = vld [vmem:[%s1 + $0x6c0] sm:$0xff]
    %v4097 = vld [vmem:[%s1 + $0x6c8] sm:$0xff]
    %v4098 = vld [vmem:[%s1 + $0x6d0] sm:$0xff]
    %v4099 = vld [vmem:[%s1 + $0x6d8] sm:$0xff]
    %v4100 = vld [vmem:[%s1 + $0x6e0] sm:$0xff]
    %v4101 = vld [vmem:[%s1 + $0x6e8] sm:$0xff]
    %v4102 = vld [vmem:[%s1 + $0x6f0] sm:$0xff]
    %v4103 = vld [vmem:[%s1 + $0x6f8] sm:$0xff]
    %v4104 = vld [vmem:[%s1 + $0x700] sm:$0xff]
    %v4105 = vld [vmem:[%s1 + $0x708] sm:$0xff]
    %v4106 = vld [vmem:[%s1 + $0x710] sm:$0xff]
    %v4107 = vld [vmem:[%s1 + $0x718] sm:$0xff]
    %v4108 = vld [vmem:[%s1 + $0x720] sm:$0xff]
    %v4109 = vld [vmem:[%s1 + $0x728] sm:$0xff]
    %v4110 = vld [vmem:[%s1 + $0x730] sm:$0xff]
    %v4111 = vld [vmem:[%s1 + $0x738] sm:$0xff]
    %v4112 = vld [vmem:[%s1 + $0x740] sm:$0xff]
    %v4113 = vld [vmem:[%s1 + $0x748] sm:$0xff]
    %v4114 = vld [vmem:[%s1 + $0x750] sm:$0xff]
    %v4115 = vld [vmem:[%s1 + $0x758] sm:$0xff]
    %v4116 = vld [vmem:[%s1 + $0x760] sm:$0xff]
    %v4117 = vld [vmem:[%s1 + $0x768] sm:$0xff]
    %v4118 = vld [vmem:[%s1 + $0x770] sm:$0xff]
    %v4119 = vld [vmem:[%s1 + $0x778] sm:$0xff]
    %v4120 = vld [vmem:[%s1 + $0x780] sm:$0xff]
    %v4121 = vld [vmem:[%s1 + $0x788] sm:$0xff]
    %v4122 = vld [vmem:[%s1 + $0x790] sm:$0xff]
    %v4123 = vld [vmem:[%s1 + $0x798] sm:$0xff]
    %v4124 = vld [vmem:[%s1 + $0x7a0] sm:$0xff]
    %v4125 = vld [vmem:[%s1 + $0x7a8] sm:$0xff]
    %v4126 = vld [vmem:[%s1 + $0x7b0] sm:$0xff]
    %v4127 = vld [vmem:[%s1 + $0x7b8] sm:$0xff]
    %v4128 = vld [vmem:[%s1 + $0x7c0] sm:$0xff]
    %v4129 = vld [vmem:[%s1 + $0x7c8] sm:$0xff]
    %v4130 = vld [vmem:[%s1 + $0x7d0] sm:$0xff]
    %v4131 = vld [vmem:[%s1 + $0x7d8] sm:$0xff]
    %v4132 = vld [vmem:[%s1 + $0x7e0] sm:$0xff]
    %v4133 = vld [vmem:[%s1 + $0x7e8] sm:$0xff]
    %v4134 = vld [vmem:[%s1 + $0x7f0] sm:$0xff]
    %v4135 = vld [vmem:[%s1 + $0x7f8] sm:$0xff]
    %v4136 = vld [vmem:[%s1 + $0x800] sm:$0xff]
    %v4137 = vld [vmem:[%s1 + $0x808] sm:$0xff]
    %v4138 = vld [vmem:[%s1 + $0x810] sm:$0xff]
    %v4139 = vld [vmem:[%s1 + $0x818] sm:$0xff]
    %v4140 = vld [vmem:[%s1 + $0x820] sm:$0xff]
    %v4141 = vld [vmem:[%s1 + $0x828] sm:$0xff]
    %v4142 = vld [vmem:[%s1 + $0x830] sm:$0xff]
    %v4143 = vld [vmem:[%s1 + $0x838] sm:$0xff]
    %v4144 = vld [vmem:[%s1 + $0x840] sm:$0xff]
    %v4145 = vld [vmem:[%s1 + $0x848] sm:$0xff]
    %v4146 = vld [vmem:[%s1 + $0x850] sm:$0xff]
    %v4147 = vld [vmem:[%s1 + $0x858] sm:$0xff]
    %v4148 = vld [vmem:[%s1 + $0x860] sm:$0xff]
    %v4149 = vld [vmem:[%s1 + $0x868] sm:$0xff]
    %v4150 = vld [vmem:[%s1 + $0x870] sm:$0xff]
    %v4151 = vld [vmem:[%s1 + $0x878] sm:$0xff]
    %v4152 = vld [vmem:[%s1 + $0x880] sm:$0xff]
    %v4153 = vld [vmem:[%s1 + $0x888] sm:$0xff]
    %v4154 = vld [vmem:[%s1 + $0x890] sm:$0xff]
    %v4155 = vld [vmem:[%s1 + $0x898] sm:$0xff]
    %v4156 = vld [vmem:[%s2] sm:$0x1]
    %v4158 = vperm.slane %v4156, 0
    %v4712 = vlaneseq
    %v4713 = vand.u32 %v4712, 127
    %v4714 = vperm.slane %v3328, %v4713
    %v4715 = vadd.s32 %v4713, 4294967288
    %v4716 = vperm.slane %v3329, %v4715
    %vm4717 = vcmask 130112
    %v4718 = vsel %vm4717, %v4716, %v4714
    %v4719 = vadd.s32 %v4713, 4294967280
    %v4720 = vperm.slane %v3330, %v4719
    %vm4721 = vcmask 195712
    %v4722 = vsel %vm4721, %v4720, %v4718
    %v4723 = vadd.s32 %v4713, 4294967272
    %v4724 = vperm.slane %v3331, %v4723
    %vm4725 = vcmask 261312
    %v4726 = vsel %vm4725, %v4724, %v4722
    %v4727 = vadd.s32 %v4713, 4294967264
    %v4728 = vperm.slane %v3332, %v4727
    %vm4729 = vcmask 326912
    %v4730 = vsel %vm4729, %v4728, %v4726
    %v4731 = vadd.s32 %v4713, 4294967256
    %v4732 = vperm.slane %v3333, %v4731
    %vm4733 = vcmask 392512
    %v4734 = vsel %vm4733, %v4732, %v4730
    %v4735 = vadd.s32 %v4713, 4294967248
    %v4736 = vperm.slane %v3334, %v4735
    %vm4737 = vcmask 458112
    %v4738 = vsel %vm4737, %v4736, %v4734
    %v4739 = vadd.s32 %v4713, 4294967240
    %v4740 = vperm.slane %v3335, %v4739
    %vm4741 = vcmask 523712
    %v4742 = vsel %vm4741, %v4740, %v4738
    %v4743 = vadd.s32 %v4713, 4294967232
    %v4744 = vperm.slane %v3336, %v4743
    %vm4745 = vcmask 589312
    %v4746 = vsel %vm4745, %v4744, %v4742
    %v4747 = vadd.s32 %v4713, 4294967224
    %v4748 = vperm.slane %v3337, %v4747
    %vm4749 = vcmask 654912
    %v4750 = vsel %vm4749, %v4748, %v4746
    %v4751 = vadd.s32 %v4713, 4294967216
    %v4752 = vperm.slane %v3338, %v4751
    %vm4753 = vcmask 720512
    %v4754 = vsel %vm4753, %v4752, %v4750
    %v4755 = vadd.s32 %v4713, 4294967208
    %v4756 = vperm.slane %v3339, %v4755
    %vm4757 = vcmask 786112
    %v4758 = vsel %vm4757, %v4756, %v4754
    %v4759 = vadd.s32 %v4713, 4294967200
    %v4760 = vperm.slane %v3340, %v4759
    %vm4761 = vcmask 851712
    %v4762 = vsel %vm4761, %v4760, %v4758
    %v4763 = vadd.s32 %v4713, 4294967192
    %v4764 = vperm.slane %v3341, %v4763
    %vm4765 = vcmask 917312
    %v4766 = vsel %vm4765, %v4764, %v4762
    %v4767 = vadd.s32 %v4713, 4294967184
    %v4768 = vperm.slane %v3342, %v4767
    %vm4769 = vcmask 982912
    %v4770 = vsel %vm4769, %v4768, %v4766
    %v4771 = vadd.s32 %v4713, 4294967176
    %v4772 = vperm.slane %v3343, %v4771
    %vm4773 = vcmask 1048512
    %v4774 = vsel %vm4773, %v4772, %v4770
    %v4775 = vperm.slane %v3344, %v4713
    %v4776 = vperm.slane %v3345, %v4715
    %v4777 = vsel %vm4717, %v4776, %v4775
    %v4778 = vperm.slane %v3346, %v4719
    %v4779 = vsel %vm4721, %v4778, %v4777
    %v4780 = vperm.slane %v3347, %v4723
    %v4781 = vsel %vm4725, %v4780, %v4779
    %v4782 = vperm.slane %v3348, %v4727
    %v4783 = vsel %vm4729, %v4782, %v4781
    %v4784 = vperm.slane %v3349, %v4731
    %v4785 = vsel %vm4733, %v4784, %v4783
    %v4786 = vperm.slane %v3350, %v4735
    %v4787 = vsel %vm4737, %v4786, %v4785
    %v4788 = vperm.slane %v3351, %v4739
    %v4789 = vsel %vm4741, %v4788, %v4787
    %v4790 = vperm.slane %v3352, %v4743
    %v4791 = vsel %vm4745, %v4790, %v4789
    %v4792 = vperm.slane %v3353, %v4747
    %v4793 = vsel %vm4749, %v4792, %v4791
    %v4794 = vperm.slane %v3354, %v4751
    %v4795 = vsel %vm4753, %v4794, %v4793
    %v4796 = vperm.slane %v3355, %v4755
    %v4797 = vsel %vm4757, %v4796, %v4795
    %v4798 = vperm.slane %v3356, %v4759
    %v4799 = vsel %vm4761, %v4798, %v4797
    %v4800 = vperm.slane %v3357, %v4763
    %v4801 = vsel %vm4765, %v4800, %v4799
    %v4802 = vperm.slane %v3358, %v4767
    %v4803 = vsel %vm4769, %v4802, %v4801
    %v4804 = vperm.slane %v3359, %v4771
    %v4805 = vsel %vm4773, %v4804, %v4803
    %v4806 = vperm.slane %v3360, %v4713
    %v4807 = vperm.slane %v3361, %v4715
    %v4808 = vsel %vm4717, %v4807, %v4806
    %v4809 = vperm.slane %v3362, %v4719
    %v4810 = vsel %vm4721, %v4809, %v4808
    %v4811 = vperm.slane %v3363, %v4723
    %v4812 = vsel %vm4725, %v4811, %v4810
    %v4813 = vperm.slane %v3364, %v4727
    %v4814 = vsel %vm4729, %v4813, %v4812
    %v4815 = vperm.slane %v3365, %v4731
    %v4816 = vsel %vm4733, %v4815, %v4814
    %v4817 = vperm.slane %v3366, %v4735
    %v4818 = vsel %vm4737, %v4817, %v4816
    %v4819 = vperm.slane %v3367, %v4739
    %v4820 = vsel %vm4741, %v4819, %v4818
    %v4821 = vperm.slane %v3368, %v4743
    %v4822 = vsel %vm4745, %v4821, %v4820
    %v4823 = vperm.slane %v3369, %v4747
    %v4824 = vsel %vm4749, %v4823, %v4822
    %v4825 = vperm.slane %v3370, %v4751
    %v4826 = vsel %vm4753, %v4825, %v4824
    %v4827 = vperm.slane %v3371, %v4755
    %v4828 = vsel %vm4757, %v4827, %v4826
    %v4829 = vperm.slane %v3372, %v4759
    %v4830 = vsel %vm4761, %v4829, %v4828
    %v4831 = vperm.slane %v3373, %v4763
    %v4832 = vsel %vm4765, %v4831, %v4830
    %v4833 = vperm.slane %v3374, %v4767
    %v4834 = vsel %vm4769, %v4833, %v4832
    %v4835 = vperm.slane %v3375, %v4771
    %v4836 = vsel %vm4773, %v4835, %v4834
    %v4837 = vperm.slane %v3376, %v4713
    %v4838 = vperm.slane %v3377, %v4715
    %v4839 = vsel %vm4717, %v4838, %v4837
    %v4840 = vperm.slane %v3378, %v4719
    %v4841 = vsel %vm4721, %v4840, %v4839
    %v4842 = vperm.slane %v3379, %v4723
    %v4843 = vsel %vm4725, %v4842, %v4841
    %v4844 = vperm.slane %v3380, %v4727
    %v4845 = vsel %vm4729, %v4844, %v4843
    %v4846 = vperm.slane %v3381, %v4731
    %v4847 = vsel %vm4733, %v4846, %v4845
    %v4848 = vperm.slane %v3382, %v4735
    %v4849 = vsel %vm4737, %v4848, %v4847
    %v4850 = vperm.slane %v3383, %v4739
    %v4851 = vsel %vm4741, %v4850, %v4849
    %v4852 = vperm.slane %v3384, %v4743
    %v4853 = vsel %vm4745, %v4852, %v4851
    %v4854 = vperm.slane %v3385, %v4747
    %v4855 = vsel %vm4749, %v4854, %v4853
    %v4856 = vperm.slane %v3386, %v4751
    %v4857 = vsel %vm4753, %v4856, %v4855
    %v4858 = vperm.slane %v3387, %v4755
    %v4859 = vsel %vm4757, %v4858, %v4857
    %v4860 = vperm.slane %v3388, %v4759
    %v4861 = vsel %vm4761, %v4860, %v4859
    %v4862 = vperm.slane %v3389, %v4763
    %v4863 = vsel %vm4765, %v4862, %v4861
    %v4864 = vperm.slane %v3390, %v4767
    %v4865 = vsel %vm4769, %v4864, %v4863
    %v4866 = vperm.slane %v3391, %v4771
    %v4867 = vsel %vm4773, %v4866, %v4865
    %v4868 = vperm.slane %v3392, %v4713
    %v4869 = vperm.slane %v3393, %v4715
    %v4870 = vsel %vm4717, %v4869, %v4868
    %v4871 = vperm.slane %v3394, %v4719
    %v4872 = vsel %vm4721, %v4871, %v4870
    %v4873 = vperm.slane %v3395, %v4723
    %v4874 = vsel %vm4725, %v4873, %v4872
    %v4875 = vperm.slane %v3396, %v4727
    %v4876 = vsel %vm4729, %v4875, %v4874
    %v4877 = vperm.slane %v3397, %v4731
    %v4878 = vsel %vm4733, %v4877, %v4876
    %v4879 = vperm.slane %v3398, %v4735
    %v4880 = vsel %vm4737, %v4879, %v4878
    %v4881 = vperm.slane %v3399, %v4739
    %v4882 = vsel %vm4741, %v4881, %v4880
    %v4883 = vperm.slane %v3400, %v4743
    %v4884 = vsel %vm4745, %v4883, %v4882
    %v4885 = vperm.slane %v3401, %v4747
    %v4886 = vsel %vm4749, %v4885, %v4884
    %v4887 = vperm.slane %v3402, %v4751
    %v4888 = vsel %vm4753, %v4887, %v4886
    %v4889 = vperm.slane %v3403, %v4755
    %v4890 = vsel %vm4757, %v4889, %v4888
    %v4891 = vperm.slane %v3404, %v4759
    %v4892 = vsel %vm4761, %v4891, %v4890
    %v4893 = vperm.slane %v3405, %v4763
    %v4894 = vsel %vm4765, %v4893, %v4892
    %v4895 = vperm.slane %v3406, %v4767
    %v4896 = vsel %vm4769, %v4895, %v4894
    %v4897 = vperm.slane %v3407, %v4771
    %v4898 = vsel %vm4773, %v4897, %v4896
    %v4899 = vperm.slane %v3408, %v4713
    %v4900 = vperm.slane %v3409, %v4715
    %v4901 = vsel %vm4717, %v4900, %v4899
    %v4902 = vperm.slane %v3410, %v4719
    %v4903 = vsel %vm4721, %v4902, %v4901
    %v4904 = vperm.slane %v3411, %v4723
    %v4905 = vsel %vm4725, %v4904, %v4903
    %v4906 = vperm.slane %v3412, %v4727
    %v4907 = vsel %vm4729, %v4906, %v4905
    %v4908 = vperm.slane %v3413, %v4731
    %v4909 = vsel %vm4733, %v4908, %v4907
    %v4910 = vperm.slane %v3414, %v4735
    %v4911 = vsel %vm4737, %v4910, %v4909
    %v4912 = vperm.slane %v3415, %v4739
    %v4913 = vsel %vm4741, %v4912, %v4911
    %v4914 = vperm.slane %v3416, %v4743
    %v4915 = vsel %vm4745, %v4914, %v4913
    %v4916 = vperm.slane %v3417, %v4747
    %v4917 = vsel %vm4749, %v4916, %v4915
    %v4918 = vperm.slane %v3418, %v4751
    %v4919 = vsel %vm4753, %v4918, %v4917
    %v4920 = vperm.slane %v3419, %v4755
    %v4921 = vsel %vm4757, %v4920, %v4919
    %v4922 = vperm.slane %v3420, %v4759
    %v4923 = vsel %vm4761, %v4922, %v4921
    %v4924 = vperm.slane %v3421, %v4763
    %v4925 = vsel %vm4765, %v4924, %v4923
    %v4926 = vperm.slane %v3422, %v4767
    %v4927 = vsel %vm4769, %v4926, %v4925
    %v4928 = vperm.slane %v3423, %v4771
    %v4929 = vsel %vm4773, %v4928, %v4927
    %v4930 = vperm.slane %v3424, %v4713
    %v4931 = vperm.slane %v3425, %v4715
    %v4932 = vsel %vm4717, %v4931, %v4930
    %v4933 = vperm.slane %v3426, %v4719
    %v4934 = vsel %vm4721, %v4933, %v4932
    %v4935 = vperm.slane %v3427, %v4723
    %v4936 = vsel %vm4725, %v4935, %v4934
    %v4937 = vperm.slane %v3428, %v4727
    %v4938 = vsel %vm4729, %v4937, %v4936
    %v4939 = vperm.slane %v3429, %v4731
    %v4940 = vsel %vm4733, %v4939, %v4938
    %v4941 = vperm.slane %v3430, %v4735
    %v4942 = vsel %vm4737, %v4941, %v4940
    %v4943 = vperm.slane %v3431, %v4739
    %v4944 = vsel %vm4741, %v4943, %v4942
    %v4945 = vperm.slane %v3432, %v4743
    %v4946 = vsel %vm4745, %v4945, %v4944
    %v4947 = vperm.slane %v3433, %v4747
    %v4948 = vsel %vm4749, %v4947, %v4946
    %v4949 = vperm.slane %v3434, %v4751
    %v4950 = vsel %vm4753, %v4949, %v4948
    %v4951 = vperm.slane %v3435, %v4755
    %v4952 = vsel %vm4757, %v4951, %v4950
    %v4953 = vperm.slane %v3436, %v4759
    %v4954 = vsel %vm4761, %v4953, %v4952
    %v4955 = vperm.slane %v3437, %v4763
    %v4956 = vsel %vm4765, %v4955, %v4954
    %v4957 = vperm.slane %v3438, %v4767
    %v4958 = vsel %vm4769, %v4957, %v4956
    %v4959 = vperm.slane %v3439, %v4771
    %v4960 = vsel %vm4773, %v4959, %v4958
    %v4961 = vperm.slane %v3440, %v4713
    %v4962 = vperm.slane %v3441, %v4715
    %v4963 = vsel %vm4717, %v4962, %v4961
    %v4964 = vperm.slane %v3442, %v4719
    %v4965 = vsel %vm4721, %v4964, %v4963
    %v4966 = vperm.slane %v3443, %v4723
    %v4967 = vsel %vm4725, %v4966, %v4965
    %v4968 = vperm.slane %v3444, %v4727
    %v4969 = vsel %vm4729, %v4968, %v4967
    %v4970 = vperm.slane %v3445, %v4731
    %v4971 = vsel %vm4733, %v4970, %v4969
    %v4972 = vperm.slane %v3446, %v4735
    %v4973 = vsel %vm4737, %v4972, %v4971
    %v4974 = vperm.slane %v3447, %v4739
    %v4975 = vsel %vm4741, %v4974, %v4973
    %v4976 = vperm.slane %v3448, %v4743
    %v4977 = vsel %vm4745, %v4976, %v4975
    %v4978 = vperm.slane %v3449, %v4747
    %v4979 = vsel %vm4749, %v4978, %v4977
    %v4980 = vperm.slane %v3450, %v4751
    %v4981 = vsel %vm4753, %v4980, %v4979
    %v4982 = vperm.slane %v3451, %v4755
    %v4983 = vsel %vm4757, %v4982, %v4981
    %v4984 = vperm.slane %v3452, %v4759
    %v4985 = vsel %vm4761, %v4984, %v4983
    %v4986 = vperm.slane %v3453, %v4763
    %v4987 = vsel %vm4765, %v4986, %v4985
    %v4988 = vperm.slane %v3454, %v4767
    %v4989 = vsel %vm4769, %v4988, %v4987
    %v4990 = vperm.slane %v3455, %v4771
    %v4991 = vsel %vm4773, %v4990, %v4989
    %v4992 = vperm.slane %v3456, %v4713
    %v4993 = vperm.slane %v3457, %v4715
    %v4994 = vsel %vm4717, %v4993, %v4992
    %v4995 = vperm.slane %v3458, %v4719
    %v4996 = vsel %vm4721, %v4995, %v4994
    %v4997 = vperm.slane %v3459, %v4723
    %v4998 = vsel %vm4725, %v4997, %v4996
    %v4999 = vperm.slane %v3460, %v4727
    %v5000 = vsel %vm4729, %v4999, %v4998
    %v5001 = vperm.slane %v3461, %v4731
    %v5002 = vsel %vm4733, %v5001, %v5000
    %v5003 = vperm.slane %v3462, %v4735
    %v5004 = vsel %vm4737, %v5003, %v5002
    %v5005 = vperm.slane %v3463, %v4739
    %v5006 = vsel %vm4741, %v5005, %v5004
    %v5007 = vperm.slane %v3464, %v4743
    %v5008 = vsel %vm4745, %v5007, %v5006
    %v5009 = vperm.slane %v3465, %v4747
    %v5010 = vsel %vm4749, %v5009, %v5008
    %v5011 = vperm.slane %v3466, %v4751
    %v5012 = vsel %vm4753, %v5011, %v5010
    %v5013 = vperm.slane %v3467, %v4755
    %v5014 = vsel %vm4757, %v5013, %v5012
    %v5015 = vperm.slane %v3468, %v4759
    %v5016 = vsel %vm4761, %v5015, %v5014
    %v5017 = vperm.slane %v3469, %v4763
    %v5018 = vsel %vm4765, %v5017, %v5016
    %v5019 = vperm.slane %v3470, %v4767
    %v5020 = vsel %vm4769, %v5019, %v5018
    %v5021 = vperm.slane %v3471, %v4771
    %v5022 = vsel %vm4773, %v5021, %v5020
    %v5023 = vperm.slane %v3472, %v4713
    %v5024 = vperm.slane %v3473, %v4715
    %v5025 = vsel %vm4717, %v5024, %v5023
    %v5026 = vperm.slane %v3474, %v4719
    %v5027 = vsel %vm4721, %v5026, %v5025
    %v5028 = vperm.slane %v3475, %v4723
    %v5029 = vsel %vm4725, %v5028, %v5027
    %v5030 = vperm.slane %v3476, %v4727
    %v5031 = vsel %vm4729, %v5030, %v5029
    %v5032 = vperm.slane %v3477, %v4731
    %v5033 = vsel %vm4733, %v5032, %v5031
    %v5034 = vperm.slane %v3478, %v4735
    %v5035 = vsel %vm4737, %v5034, %v5033
    %v5036 = vperm.slane %v3479, %v4739
    %v5037 = vsel %vm4741, %v5036, %v5035
    %v5038 = vperm.slane %v3480, %v4743
    %v5039 = vsel %vm4745, %v5038, %v5037
    %v5040 = vperm.slane %v3481, %v4747
    %v5041 = vsel %vm4749, %v5040, %v5039
    %v5042 = vperm.slane %v3482, %v4751
    %v5043 = vsel %vm4753, %v5042, %v5041
    %v5044 = vperm.slane %v3483, %v4755
    %v5045 = vsel %vm4757, %v5044, %v5043
    %v5046 = vperm.slane %v3484, %v4759
    %v5047 = vsel %vm4761, %v5046, %v5045
    %v5048 = vperm.slane %v3485, %v4763
    %v5049 = vsel %vm4765, %v5048, %v5047
    %v5050 = vperm.slane %v3486, %v4767
    %v5051 = vsel %vm4769, %v5050, %v5049
    %v5052 = vperm.slane %v3487, %v4771
    %v5053 = vsel %vm4773, %v5052, %v5051
    %v5054 = vperm.slane %v3488, %v4713
    %v5055 = vperm.slane %v3489, %v4715
    %v5056 = vsel %vm4717, %v5055, %v5054
    %v5057 = vperm.slane %v3490, %v4719
    %v5058 = vsel %vm4721, %v5057, %v5056
    %v5059 = vperm.slane %v3491, %v4723
    %v5060 = vsel %vm4725, %v5059, %v5058
    %v5061 = vperm.slane %v3492, %v4727
    %v5062 = vsel %vm4729, %v5061, %v5060
    %v5063 = vperm.slane %v3493, %v4731
    %v5064 = vsel %vm4733, %v5063, %v5062
    %v5065 = vperm.slane %v3494, %v4735
    %v5066 = vsel %vm4737, %v5065, %v5064
    %v5067 = vperm.slane %v3495, %v4739
    %v5068 = vsel %vm4741, %v5067, %v5066
    %v5069 = vperm.slane %v3496, %v4743
    %v5070 = vsel %vm4745, %v5069, %v5068
    %v5071 = vperm.slane %v3497, %v4747
    %v5072 = vsel %vm4749, %v5071, %v5070
    %v5073 = vperm.slane %v3498, %v4751
    %v5074 = vsel %vm4753, %v5073, %v5072
    %v5075 = vperm.slane %v3499, %v4755
    %v5076 = vsel %vm4757, %v5075, %v5074
    %v5077 = vperm.slane %v3500, %v4759
    %v5078 = vsel %vm4761, %v5077, %v5076
    %v5079 = vperm.slane %v3501, %v4763
    %v5080 = vsel %vm4765, %v5079, %v5078
    %v5081 = vperm.slane %v3502, %v4767
    %v5082 = vsel %vm4769, %v5081, %v5080
    %v5083 = vperm.slane %v3503, %v4771
    %v5084 = vsel %vm4773, %v5083, %v5082
    %v5085 = vperm.slane %v3504, %v4713
    %v5086 = vperm.slane %v3505, %v4715
    %v5087 = vsel %vm4717, %v5086, %v5085
    %v5088 = vperm.slane %v3506, %v4719
    %v5089 = vsel %vm4721, %v5088, %v5087
    %v5090 = vperm.slane %v3507, %v4723
    %v5091 = vsel %vm4725, %v5090, %v5089
    %v5092 = vperm.slane %v3508, %v4727
    %v5093 = vsel %vm4729, %v5092, %v5091
    %v5094 = vperm.slane %v3509, %v4731
    %v5095 = vsel %vm4733, %v5094, %v5093
    %v5096 = vperm.slane %v3510, %v4735
    %v5097 = vsel %vm4737, %v5096, %v5095
    %v5098 = vperm.slane %v3511, %v4739
    %v5099 = vsel %vm4741, %v5098, %v5097
    %v5100 = vperm.slane %v3512, %v4743
    %v5101 = vsel %vm4745, %v5100, %v5099
    %v5102 = vperm.slane %v3513, %v4747
    %v5103 = vsel %vm4749, %v5102, %v5101
    %v5104 = vperm.slane %v3514, %v4751
    %v5105 = vsel %vm4753, %v5104, %v5103
    %v5106 = vperm.slane %v3515, %v4755
    %v5107 = vsel %vm4757, %v5106, %v5105
    %v5108 = vperm.slane %v3516, %v4759
    %v5109 = vsel %vm4761, %v5108, %v5107
    %v5110 = vperm.slane %v3517, %v4763
    %v5111 = vsel %vm4765, %v5110, %v5109
    %v5112 = vperm.slane %v3518, %v4767
    %v5113 = vsel %vm4769, %v5112, %v5111
    %v5114 = vperm.slane %v3519, %v4771
    %v5115 = vsel %vm4773, %v5114, %v5113
    %v5116 = vperm.slane %v3520, %v4713
    %v5117 = vperm.slane %v3521, %v4715
    %v5118 = vsel %vm4717, %v5117, %v5116
    %v5119 = vperm.slane %v3522, %v4719
    %v5120 = vsel %vm4721, %v5119, %v5118
    %v5121 = vperm.slane %v3523, %v4723
    %v5122 = vsel %vm4725, %v5121, %v5120
    %v5123 = vperm.slane %v3524, %v4727
    %v5124 = vsel %vm4729, %v5123, %v5122
    %v5125 = vperm.slane %v3525, %v4731
    %v5126 = vsel %vm4733, %v5125, %v5124
    %v5127 = vperm.slane %v3526, %v4735
    %v5128 = vsel %vm4737, %v5127, %v5126
    %v5129 = vperm.slane %v3527, %v4739
    %v5130 = vsel %vm4741, %v5129, %v5128
    %v5131 = vperm.slane %v3528, %v4743
    %v5132 = vsel %vm4745, %v5131, %v5130
    %v5133 = vperm.slane %v3529, %v4747
    %v5134 = vsel %vm4749, %v5133, %v5132
    %v5135 = vperm.slane %v3530, %v4751
    %v5136 = vsel %vm4753, %v5135, %v5134
    %v5137 = vperm.slane %v3531, %v4755
    %v5138 = vsel %vm4757, %v5137, %v5136
    %v5139 = vperm.slane %v3532, %v4759
    %v5140 = vsel %vm4761, %v5139, %v5138
    %v5141 = vperm.slane %v3533, %v4763
    %v5142 = vsel %vm4765, %v5141, %v5140
    %v5143 = vperm.slane %v3534, %v4767
    %v5144 = vsel %vm4769, %v5143, %v5142
    %v5145 = vperm.slane %v3535, %v4771
    %v5146 = vsel %vm4773, %v5145, %v5144
    %v5147 = vperm.slane %v3536, %v4713
    %v5148 = vperm.slane %v3537, %v4715
    %v5149 = vsel %vm4717, %v5148, %v5147
    %v5150 = vperm.slane %v3538, %v4719
    %v5151 = vsel %vm4721, %v5150, %v5149
    %v5152 = vperm.slane %v3539, %v4723
    %v5153 = vsel %vm4725, %v5152, %v5151
    %v5154 = vperm.slane %v3540, %v4727
    %v5155 = vsel %vm4729, %v5154, %v5153
    %v5156 = vperm.slane %v3541, %v4731
    %v5157 = vsel %vm4733, %v5156, %v5155
    %v5158 = vperm.slane %v3542, %v4735
    %v5159 = vsel %vm4737, %v5158, %v5157
    %v5160 = vperm.slane %v3543, %v4739
    %v5161 = vsel %vm4741, %v5160, %v5159
    %v5162 = vperm.slane %v3544, %v4743
    %v5163 = vsel %vm4745, %v5162, %v5161
    %v5164 = vperm.slane %v3545, %v4747
    %v5165 = vsel %vm4749, %v5164, %v5163
    %v5166 = vperm.slane %v3546, %v4751
    %v5167 = vsel %vm4753, %v5166, %v5165
    %v5168 = vperm.slane %v3547, %v4755
    %v5169 = vsel %vm4757, %v5168, %v5167
    %v5170 = vperm.slane %v3548, %v4759
    %v5171 = vsel %vm4761, %v5170, %v5169
    %v5172 = vperm.slane %v3549, %v4763
    %v5173 = vsel %vm4765, %v5172, %v5171
    %v5174 = vperm.slane %v3550, %v4767
    %v5175 = vsel %vm4769, %v5174, %v5173
    %v5176 = vperm.slane %v3551, %v4771
    %v5177 = vsel %vm4773, %v5176, %v5175
    %v5178 = vperm.slane %v3552, %v4713
    %v5179 = vperm.slane %v3553, %v4715
    %v5180 = vsel %vm4717, %v5179, %v5178
    %v5181 = vperm.slane %v3554, %v4719
    %v5182 = vsel %vm4721, %v5181, %v5180
    %v5183 = vperm.slane %v3555, %v4723
    %v5184 = vsel %vm4725, %v5183, %v5182
    %v5185 = vperm.slane %v3556, %v4727
    %v5186 = vsel %vm4729, %v5185, %v5184
    %v5187 = vperm.slane %v3557, %v4731
    %v5188 = vsel %vm4733, %v5187, %v5186
    %v5189 = vperm.slane %v3558, %v4735
    %v5190 = vsel %vm4737, %v5189, %v5188
    %v5191 = vperm.slane %v3559, %v4739
    %v5192 = vsel %vm4741, %v5191, %v5190
    %v5193 = vperm.slane %v3560, %v4743
    %v5194 = vsel %vm4745, %v5193, %v5192
    %v5195 = vperm.slane %v3561, %v4747
    %v5196 = vsel %vm4749, %v5195, %v5194
    %v5197 = vperm.slane %v3562, %v4751
    %v5198 = vsel %vm4753, %v5197, %v5196
    %v5199 = vperm.slane %v3563, %v4755
    %v5200 = vsel %vm4757, %v5199, %v5198
    %v5201 = vperm.slane %v3564, %v4759
    %v5202 = vsel %vm4761, %v5201, %v5200
    %v5203 = vperm.slane %v3565, %v4763
    %v5204 = vsel %vm4765, %v5203, %v5202
    %v5205 = vperm.slane %v3566, %v4767
    %v5206 = vsel %vm4769, %v5205, %v5204
    %v5207 = vperm.slane %v3567, %v4771
    %v5208 = vsel %vm4773, %v5207, %v5206
    %v5209 = vperm.slane %v3568, %v4713
    %v5210 = vperm.slane %v3569, %v4715
    %v5211 = vsel %vm4717, %v5210, %v5209
    %v5212 = vperm.slane %v3570, %v4719
    %v5213 = vsel %vm4721, %v5212, %v5211
    %v5214 = vperm.slane %v3571, %v4723
    %v5215 = vsel %vm4725, %v5214, %v5213
    %v5216 = vperm.slane %v3572, %v4727
    %v5217 = vsel %vm4729, %v5216, %v5215
    %v5218 = vperm.slane %v3573, %v4731
    %v5219 = vsel %vm4733, %v5218, %v5217
    %v5220 = vperm.slane %v3574, %v4735
    %v5221 = vsel %vm4737, %v5220, %v5219
    %v5222 = vperm.slane %v3575, %v4739
    %v5223 = vsel %vm4741, %v5222, %v5221
    %v5224 = vperm.slane %v3576, %v4743
    %v5225 = vsel %vm4745, %v5224, %v5223
    %v5226 = vperm.slane %v3577, %v4747
    %v5227 = vsel %vm4749, %v5226, %v5225
    %v5228 = vperm.slane %v3578, %v4751
    %v5229 = vsel %vm4753, %v5228, %v5227
    %v5230 = vperm.slane %v3579, %v4755
    %v5231 = vsel %vm4757, %v5230, %v5229
    %v5232 = vperm.slane %v3580, %v4759
    %v5233 = vsel %vm4761, %v5232, %v5231
    %v5234 = vperm.slane %v3581, %v4763
    %v5235 = vsel %vm4765, %v5234, %v5233
    %v5236 = vperm.slane %v3582, %v4767
    %v5237 = vsel %vm4769, %v5236, %v5235
    %v5238 = vperm.slane %v3583, %v4771
    %v5239 = vsel %vm4773, %v5238, %v5237
    %v5240 = vperm.slane %v3584, %v4713
    %v5241 = vperm.slane %v3585, %v4715
    %v5242 = vsel %vm4717, %v5241, %v5240
    %v5243 = vperm.slane %v3586, %v4719
    %v5244 = vsel %vm4721, %v5243, %v5242
    %v5245 = vperm.slane %v3587, %v4723
    %v5246 = vsel %vm4725, %v5245, %v5244
    %v5247 = vperm.slane %v3588, %v4727
    %v5248 = vsel %vm4729, %v5247, %v5246
    %v5249 = vperm.slane %v3589, %v4731
    %v5250 = vsel %vm4733, %v5249, %v5248
    %v5251 = vperm.slane %v3590, %v4735
    %v5252 = vsel %vm4737, %v5251, %v5250
    %v5253 = vperm.slane %v3591, %v4739
    %v5254 = vsel %vm4741, %v5253, %v5252
    %v5255 = vperm.slane %v3592, %v4743
    %v5256 = vsel %vm4745, %v5255, %v5254
    %v5257 = vperm.slane %v3593, %v4747
    %v5258 = vsel %vm4749, %v5257, %v5256
    %v5259 = vperm.slane %v3594, %v4751
    %v5260 = vsel %vm4753, %v5259, %v5258
    %v5261 = vperm.slane %v3595, %v4755
    %v5262 = vsel %vm4757, %v5261, %v5260
    %v5263 = vperm.slane %v3596, %v4759
    %v5264 = vsel %vm4761, %v5263, %v5262
    %v5265 = vperm.slane %v3597, %v4763
    %v5266 = vsel %vm4765, %v5265, %v5264
    %v5267 = vperm.slane %v3598, %v4767
    %v5268 = vsel %vm4769, %v5267, %v5266
    %v5269 = vperm.slane %v3599, %v4771
    %v5270 = vsel %vm4773, %v5269, %v5268
    %v5271 = vperm.slane %v3600, %v4713
    %v5272 = vperm.slane %v3601, %v4715
    %v5273 = vsel %vm4717, %v5272, %v5271
    %v5274 = vperm.slane %v3602, %v4719
    %v5275 = vsel %vm4721, %v5274, %v5273
    %v5276 = vperm.slane %v3603, %v4723
    %v5277 = vsel %vm4725, %v5276, %v5275
    %v5278 = vperm.slane %v3604, %v4713
    %v5279 = vperm.slane %v3605, %v4715
    %v5280 = vsel %vm4717, %v5279, %v5278
    %v5281 = vperm.slane %v3606, %v4719
    %v5282 = vsel %vm4721, %v5281, %v5280
    %v5283 = vperm.slane %v3607, %v4723
    %v5284 = vsel %vm4725, %v5283, %v5282
    %v5285 = vperm.slane %v3608, %v4727
    %v5286 = vsel %vm4729, %v5285, %v5284
    %v5287 = vperm.slane %v3609, %v4731
    %v5288 = vsel %vm4733, %v5287, %v5286
    %v5289 = vperm.slane %v3610, %v4735
    %v5290 = vsel %vm4737, %v5289, %v5288
    %v5291 = vperm.slane %v3611, %v4739
    %v5292 = vsel %vm4741, %v5291, %v5290
    %v5293 = vperm.slane %v3612, %v4743
    %v5294 = vsel %vm4745, %v5293, %v5292
    %v5295 = vperm.slane %v3613, %v4747
    %v5296 = vsel %vm4749, %v5295, %v5294
    %v5297 = vperm.slane %v3614, %v4751
    %v5298 = vsel %vm4753, %v5297, %v5296
    %v5299 = vperm.slane %v3615, %v4755
    %v5300 = vsel %vm4757, %v5299, %v5298
    %v5301 = vperm.slane %v3616, %v4759
    %v5302 = vsel %vm4761, %v5301, %v5300
    %v5303 = vperm.slane %v3617, %v4763
    %v5304 = vsel %vm4765, %v5303, %v5302
    %v5305 = vperm.slane %v3618, %v4767
    %v5306 = vsel %vm4769, %v5305, %v5304
    %v5307 = vperm.slane %v3619, %v4771
    %v5308 = vsel %vm4773, %v5307, %v5306
    %v5309 = vperm.slane %v3620, %v4713
    %v5310 = vperm.slane %v3621, %v4715
    %v5311 = vsel %vm4717, %v5310, %v5309
    %v5312 = vperm.slane %v3622, %v4719
    %v5313 = vsel %vm4721, %v5312, %v5311
    %v5314 = vperm.slane %v3623, %v4723
    %v5315 = vsel %vm4725, %v5314, %v5313
    %v5316 = vperm.slane %v3624, %v4727
    %v5317 = vsel %vm4729, %v5316, %v5315
    %v5318 = vperm.slane %v3625, %v4731
    %v5319 = vsel %vm4733, %v5318, %v5317
    %v5320 = vperm.slane %v3626, %v4735
    %v5321 = vsel %vm4737, %v5320, %v5319
    %v5322 = vperm.slane %v3627, %v4739
    %v5323 = vsel %vm4741, %v5322, %v5321
    %v5324 = vperm.slane %v3628, %v4743
    %v5325 = vsel %vm4745, %v5324, %v5323
    %v5326 = vperm.slane %v3629, %v4747
    %v5327 = vsel %vm4749, %v5326, %v5325
    %v5328 = vperm.slane %v3630, %v4751
    %v5329 = vsel %vm4753, %v5328, %v5327
    %v5330 = vperm.slane %v3631, %v4755
    %v5331 = vsel %vm4757, %v5330, %v5329
    %v5332 = vperm.slane %v3632, %v4759
    %v5333 = vsel %vm4761, %v5332, %v5331
    %v5334 = vperm.slane %v3633, %v4763
    %v5335 = vsel %vm4765, %v5334, %v5333
    %v5336 = vperm.slane %v3634, %v4767
    %v5337 = vsel %vm4769, %v5336, %v5335
    %v5338 = vperm.slane %v3635, %v4771
    %v5339 = vsel %vm4773, %v5338, %v5337
    %v5340 = vperm.slane %v3636, %v4713
    %v5341 = vperm.slane %v3637, %v4715
    %v5342 = vsel %vm4717, %v5341, %v5340
    %v5343 = vperm.slane %v3638, %v4719
    %v5344 = vsel %vm4721, %v5343, %v5342
    %v5345 = vperm.slane %v3639, %v4723
    %v5346 = vsel %vm4725, %v5345, %v5344
    %v5347 = vperm.slane %v3640, %v4727
    %v5348 = vsel %vm4729, %v5347, %v5346
    %v5349 = vperm.slane %v3641, %v4731
    %v5350 = vsel %vm4733, %v5349, %v5348
    %v5351 = vperm.slane %v3642, %v4735
    %v5352 = vsel %vm4737, %v5351, %v5350
    %v5353 = vperm.slane %v3643, %v4739
    %v5354 = vsel %vm4741, %v5353, %v5352
    %v5355 = vperm.slane %v3644, %v4743
    %v5356 = vsel %vm4745, %v5355, %v5354
    %v5357 = vperm.slane %v3645, %v4747
    %v5358 = vsel %vm4749, %v5357, %v5356
    %v5359 = vperm.slane %v3646, %v4751
    %v5360 = vsel %vm4753, %v5359, %v5358
    %v5361 = vperm.slane %v3647, %v4755
    %v5362 = vsel %vm4757, %v5361, %v5360
    %v5363 = vperm.slane %v3648, %v4759
    %v5364 = vsel %vm4761, %v5363, %v5362
    %v5365 = vperm.slane %v3649, %v4763
    %v5366 = vsel %vm4765, %v5365, %v5364
    %v5367 = vperm.slane %v3650, %v4767
    %v5368 = vsel %vm4769, %v5367, %v5366
    %v5369 = vperm.slane %v3651, %v4771
    %v5370 = vsel %vm4773, %v5369, %v5368
    %v5371 = vperm.slane %v3652, %v4713
    %v5372 = vperm.slane %v3653, %v4715
    %v5373 = vsel %vm4717, %v5372, %v5371
    %v5374 = vperm.slane %v3654, %v4719
    %v5375 = vsel %vm4721, %v5374, %v5373
    %v5376 = vperm.slane %v3655, %v4723
    %v5377 = vsel %vm4725, %v5376, %v5375
    %v5378 = vperm.slane %v3656, %v4727
    %v5379 = vsel %vm4729, %v5378, %v5377
    %v5380 = vperm.slane %v3657, %v4731
    %v5381 = vsel %vm4733, %v5380, %v5379
    %v5382 = vperm.slane %v3658, %v4735
    %v5383 = vsel %vm4737, %v5382, %v5381
    %v5384 = vperm.slane %v3659, %v4739
    %v5385 = vsel %vm4741, %v5384, %v5383
    %v5386 = vperm.slane %v3660, %v4743
    %v5387 = vsel %vm4745, %v5386, %v5385
    %v5388 = vperm.slane %v3661, %v4747
    %v5389 = vsel %vm4749, %v5388, %v5387
    %v5390 = vperm.slane %v3662, %v4751
    %v5391 = vsel %vm4753, %v5390, %v5389
    %v5392 = vperm.slane %v3663, %v4755
    %v5393 = vsel %vm4757, %v5392, %v5391
    %v5394 = vperm.slane %v3664, %v4759
    %v5395 = vsel %vm4761, %v5394, %v5393
    %v5396 = vperm.slane %v3665, %v4763
    %v5397 = vsel %vm4765, %v5396, %v5395
    %v5398 = vperm.slane %v3666, %v4767
    %v5399 = vsel %vm4769, %v5398, %v5397
    %v5400 = vperm.slane %v3667, %v4771
    %v5401 = vsel %vm4773, %v5400, %v5399
    %v5402 = vperm.slane %v3668, %v4713
    %v5403 = vperm.slane %v3669, %v4715
    %v5404 = vsel %vm4717, %v5403, %v5402
    %v5405 = vperm.slane %v3670, %v4719
    %v5406 = vsel %vm4721, %v5405, %v5404
    %v5407 = vperm.slane %v3671, %v4723
    %v5408 = vsel %vm4725, %v5407, %v5406
    %v5409 = vperm.slane %v3672, %v4727
    %v5410 = vsel %vm4729, %v5409, %v5408
    %v5411 = vperm.slane %v3673, %v4731
    %v5412 = vsel %vm4733, %v5411, %v5410
    %v5413 = vperm.slane %v3674, %v4735
    %v5414 = vsel %vm4737, %v5413, %v5412
    %v5415 = vperm.slane %v3675, %v4739
    %v5416 = vsel %vm4741, %v5415, %v5414
    %v5417 = vperm.slane %v3676, %v4743
    %v5418 = vsel %vm4745, %v5417, %v5416
    %v5419 = vperm.slane %v3677, %v4747
    %v5420 = vsel %vm4749, %v5419, %v5418
    %v5421 = vperm.slane %v3678, %v4751
    %v5422 = vsel %vm4753, %v5421, %v5420
    %v5423 = vperm.slane %v3679, %v4755
    %v5424 = vsel %vm4757, %v5423, %v5422
    %v5425 = vperm.slane %v3680, %v4759
    %v5426 = vsel %vm4761, %v5425, %v5424
    %v5427 = vperm.slane %v3681, %v4763
    %v5428 = vsel %vm4765, %v5427, %v5426
    %v5429 = vperm.slane %v3682, %v4767
    %v5430 = vsel %vm4769, %v5429, %v5428
    %v5431 = vperm.slane %v3683, %v4771
    %v5432 = vsel %vm4773, %v5431, %v5430
    %v5433 = vperm.slane %v3684, %v4713
    %v5434 = vperm.slane %v3685, %v4715
    %v5435 = vsel %vm4717, %v5434, %v5433
    %v5436 = vperm.slane %v3686, %v4719
    %v5437 = vsel %vm4721, %v5436, %v5435
    %v5438 = vperm.slane %v3687, %v4723
    %v5439 = vsel %vm4725, %v5438, %v5437
    %v5440 = vperm.slane %v3688, %v4727
    %v5441 = vsel %vm4729, %v5440, %v5439
    %v5442 = vperm.slane %v3689, %v4731
    %v5443 = vsel %vm4733, %v5442, %v5441
    %v5444 = vperm.slane %v3690, %v4735
    %v5445 = vsel %vm4737, %v5444, %v5443
    %v5446 = vperm.slane %v3691, %v4739
    %v5447 = vsel %vm4741, %v5446, %v5445
    %v5448 = vperm.slane %v3692, %v4743
    %v5449 = vsel %vm4745, %v5448, %v5447
    %v5450 = vperm.slane %v3693, %v4747
    %v5451 = vsel %vm4749, %v5450, %v5449
    %v5452 = vperm.slane %v3694, %v4751
    %v5453 = vsel %vm4753, %v5452, %v5451
    %v5454 = vperm.slane %v3695, %v4755
    %v5455 = vsel %vm4757, %v5454, %v5453
    %v5456 = vperm.slane %v3696, %v4759
    %v5457 = vsel %vm4761, %v5456, %v5455
    %v5458 = vperm.slane %v3697, %v4763
    %v5459 = vsel %vm4765, %v5458, %v5457
    %v5460 = vperm.slane %v3698, %v4767
    %v5461 = vsel %vm4769, %v5460, %v5459
    %v5462 = vperm.slane %v3699, %v4771
    %v5463 = vsel %vm4773, %v5462, %v5461
    %v5464 = vperm.slane %v3700, %v4713
    %v5465 = vperm.slane %v3701, %v4715
    %v5466 = vsel %vm4717, %v5465, %v5464
    %v5467 = vperm.slane %v3702, %v4719
    %v5468 = vsel %vm4721, %v5467, %v5466
    %v5469 = vperm.slane %v3703, %v4723
    %v5470 = vsel %vm4725, %v5469, %v5468
    %v5471 = vperm.slane %v3704, %v4727
    %v5472 = vsel %vm4729, %v5471, %v5470
    %v5473 = vperm.slane %v3705, %v4731
    %v5474 = vsel %vm4733, %v5473, %v5472
    %v5475 = vperm.slane %v3706, %v4735
    %v5476 = vsel %vm4737, %v5475, %v5474
    %v5477 = vperm.slane %v3707, %v4739
    %v5478 = vsel %vm4741, %v5477, %v5476
    %v5479 = vperm.slane %v3708, %v4743
    %v5480 = vsel %vm4745, %v5479, %v5478
    %v5481 = vperm.slane %v3709, %v4747
    %v5482 = vsel %vm4749, %v5481, %v5480
    %v5483 = vperm.slane %v3710, %v4751
    %v5484 = vsel %vm4753, %v5483, %v5482
    %v5485 = vperm.slane %v3711, %v4755
    %v5486 = vsel %vm4757, %v5485, %v5484
    %v5487 = vperm.slane %v3712, %v4759
    %v5488 = vsel %vm4761, %v5487, %v5486
    %v5489 = vperm.slane %v3713, %v4763
    %v5490 = vsel %vm4765, %v5489, %v5488
    %v5491 = vperm.slane %v3714, %v4767
    %v5492 = vsel %vm4769, %v5491, %v5490
    %v5493 = vperm.slane %v3715, %v4771
    %v5494 = vsel %vm4773, %v5493, %v5492
    %v5495 = vperm.slane %v3716, %v4713
    %v5496 = vperm.slane %v3717, %v4715
    %v5497 = vsel %vm4717, %v5496, %v5495
    %v5498 = vperm.slane %v3718, %v4719
    %v5499 = vsel %vm4721, %v5498, %v5497
    %v5500 = vperm.slane %v3719, %v4723
    %v5501 = vsel %vm4725, %v5500, %v5499
    %v5502 = vperm.slane %v3720, %v4727
    %v5503 = vsel %vm4729, %v5502, %v5501
    %v5504 = vperm.slane %v3721, %v4731
    %v5505 = vsel %vm4733, %v5504, %v5503
    %v5506 = vperm.slane %v3722, %v4735
    %v5507 = vsel %vm4737, %v5506, %v5505
    %v5508 = vperm.slane %v3723, %v4739
    %v5509 = vsel %vm4741, %v5508, %v5507
    %v5510 = vperm.slane %v3724, %v4743
    %v5511 = vsel %vm4745, %v5510, %v5509
    %v5512 = vperm.slane %v3725, %v4747
    %v5513 = vsel %vm4749, %v5512, %v5511
    %v5514 = vperm.slane %v3726, %v4751
    %v5515 = vsel %vm4753, %v5514, %v5513
    %v5516 = vperm.slane %v3727, %v4755
    %v5517 = vsel %vm4757, %v5516, %v5515
    %v5518 = vperm.slane %v3728, %v4759
    %v5519 = vsel %vm4761, %v5518, %v5517
    %v5520 = vperm.slane %v3729, %v4763
    %v5521 = vsel %vm4765, %v5520, %v5519
    %v5522 = vperm.slane %v3730, %v4767
    %v5523 = vsel %vm4769, %v5522, %v5521
    %v5524 = vperm.slane %v3731, %v4771
    %v5525 = vsel %vm4773, %v5524, %v5523
    %v5526 = vperm.slane %v3732, %v4713
    %v5527 = vperm.slane %v3733, %v4715
    %v5528 = vsel %vm4717, %v5527, %v5526
    %v5529 = vperm.slane %v3734, %v4719
    %v5530 = vsel %vm4721, %v5529, %v5528
    %v5531 = vperm.slane %v3735, %v4723
    %v5532 = vsel %vm4725, %v5531, %v5530
    %v5533 = vperm.slane %v3736, %v4727
    %v5534 = vsel %vm4729, %v5533, %v5532
    %v5535 = vperm.slane %v3737, %v4731
    %v5536 = vsel %vm4733, %v5535, %v5534
    %v5537 = vperm.slane %v3738, %v4735
    %v5538 = vsel %vm4737, %v5537, %v5536
    %v5539 = vperm.slane %v3739, %v4739
    %v5540 = vsel %vm4741, %v5539, %v5538
    %v5541 = vperm.slane %v3740, %v4743
    %v5542 = vsel %vm4745, %v5541, %v5540
    %v5543 = vperm.slane %v3741, %v4747
    %v5544 = vsel %vm4749, %v5543, %v5542
    %v5545 = vperm.slane %v3742, %v4751
    %v5546 = vsel %vm4753, %v5545, %v5544
    %v5547 = vperm.slane %v3743, %v4755
    %v5548 = vsel %vm4757, %v5547, %v5546
    %v5549 = vperm.slane %v3744, %v4759
    %v5550 = vsel %vm4761, %v5549, %v5548
    %v5551 = vperm.slane %v3745, %v4763
    %v5552 = vsel %vm4765, %v5551, %v5550
    %v5553 = vperm.slane %v3746, %v4767
    %v5554 = vsel %vm4769, %v5553, %v5552
    %v5555 = vperm.slane %v3747, %v4771
    %v5556 = vsel %vm4773, %v5555, %v5554
    %v5557 = vperm.slane %v3748, %v4713
    %v5558 = vperm.slane %v3749, %v4715
    %v5559 = vsel %vm4717, %v5558, %v5557
    %v5560 = vperm.slane %v3750, %v4719
    %v5561 = vsel %vm4721, %v5560, %v5559
    %v5562 = vperm.slane %v3751, %v4723
    %v5563 = vsel %vm4725, %v5562, %v5561
    %v5564 = vperm.slane %v3752, %v4727
    %v5565 = vsel %vm4729, %v5564, %v5563
    %v5566 = vperm.slane %v3753, %v4731
    %v5567 = vsel %vm4733, %v5566, %v5565
    %v5568 = vperm.slane %v3754, %v4735
    %v5569 = vsel %vm4737, %v5568, %v5567
    %v5570 = vperm.slane %v3755, %v4739
    %v5571 = vsel %vm4741, %v5570, %v5569
    %v5572 = vperm.slane %v3756, %v4743
    %v5573 = vsel %vm4745, %v5572, %v5571
    %v5574 = vperm.slane %v3757, %v4747
    %v5575 = vsel %vm4749, %v5574, %v5573
    %v5576 = vperm.slane %v3758, %v4751
    %v5577 = vsel %vm4753, %v5576, %v5575
    %v5578 = vperm.slane %v3759, %v4755
    %v5579 = vsel %vm4757, %v5578, %v5577
    %v5580 = vperm.slane %v3760, %v4759
    %v5581 = vsel %vm4761, %v5580, %v5579
    %v5582 = vperm.slane %v3761, %v4763
    %v5583 = vsel %vm4765, %v5582, %v5581
    %v5584 = vperm.slane %v3762, %v4767
    %v5585 = vsel %vm4769, %v5584, %v5583
    %v5586 = vperm.slane %v3763, %v4771
    %v5587 = vsel %vm4773, %v5586, %v5585
    %v5588 = vperm.slane %v3764, %v4713
    %v5589 = vperm.slane %v3765, %v4715
    %v5590 = vsel %vm4717, %v5589, %v5588
    %v5591 = vperm.slane %v3766, %v4719
    %v5592 = vsel %vm4721, %v5591, %v5590
    %v5593 = vperm.slane %v3767, %v4723
    %v5594 = vsel %vm4725, %v5593, %v5592
    %v5595 = vperm.slane %v3768, %v4727
    %v5596 = vsel %vm4729, %v5595, %v5594
    %v5597 = vperm.slane %v3769, %v4731
    %v5598 = vsel %vm4733, %v5597, %v5596
    %v5599 = vperm.slane %v3770, %v4735
    %v5600 = vsel %vm4737, %v5599, %v5598
    %v5601 = vperm.slane %v3771, %v4739
    %v5602 = vsel %vm4741, %v5601, %v5600
    %v5603 = vperm.slane %v3772, %v4743
    %v5604 = vsel %vm4745, %v5603, %v5602
    %v5605 = vperm.slane %v3773, %v4747
    %v5606 = vsel %vm4749, %v5605, %v5604
    %v5607 = vperm.slane %v3774, %v4751
    %v5608 = vsel %vm4753, %v5607, %v5606
    %v5609 = vperm.slane %v3775, %v4755
    %v5610 = vsel %vm4757, %v5609, %v5608
    %v5611 = vperm.slane %v3776, %v4759
    %v5612 = vsel %vm4761, %v5611, %v5610
    %v5613 = vperm.slane %v3777, %v4763
    %v5614 = vsel %vm4765, %v5613, %v5612
    %v5615 = vperm.slane %v3778, %v4767
    %v5616 = vsel %vm4769, %v5615, %v5614
    %v5617 = vperm.slane %v3779, %v4771
    %v5618 = vsel %vm4773, %v5617, %v5616
    %v5619 = vperm.slane %v3780, %v4713
    %v5620 = vperm.slane %v3781, %v4715
    %v5621 = vsel %vm4717, %v5620, %v5619
    %v5622 = vperm.slane %v3782, %v4719
    %v5623 = vsel %vm4721, %v5622, %v5621
    %v5624 = vperm.slane %v3783, %v4723
    %v5625 = vsel %vm4725, %v5624, %v5623
    %v5626 = vperm.slane %v3784, %v4727
    %v5627 = vsel %vm4729, %v5626, %v5625
    %v5628 = vperm.slane %v3785, %v4731
    %v5629 = vsel %vm4733, %v5628, %v5627
    %v5630 = vperm.slane %v3786, %v4735
    %v5631 = vsel %vm4737, %v5630, %v5629
    %v5632 = vperm.slane %v3787, %v4739
    %v5633 = vsel %vm4741, %v5632, %v5631
    %v5634 = vperm.slane %v3788, %v4743
    %v5635 = vsel %vm4745, %v5634, %v5633
    %v5636 = vperm.slane %v3789, %v4747
    %v5637 = vsel %vm4749, %v5636, %v5635
    %v5638 = vperm.slane %v3790, %v4751
    %v5639 = vsel %vm4753, %v5638, %v5637
    %v5640 = vperm.slane %v3791, %v4755
    %v5641 = vsel %vm4757, %v5640, %v5639
    %v5642 = vperm.slane %v3792, %v4759
    %v5643 = vsel %vm4761, %v5642, %v5641
    %v5644 = vperm.slane %v3793, %v4763
    %v5645 = vsel %vm4765, %v5644, %v5643
    %v5646 = vperm.slane %v3794, %v4767
    %v5647 = vsel %vm4769, %v5646, %v5645
    %v5648 = vperm.slane %v3795, %v4771
    %v5649 = vsel %vm4773, %v5648, %v5647
    %v5650 = vperm.slane %v3796, %v4713
    %v5651 = vperm.slane %v3797, %v4715
    %v5652 = vsel %vm4717, %v5651, %v5650
    %v5653 = vperm.slane %v3798, %v4719
    %v5654 = vsel %vm4721, %v5653, %v5652
    %v5655 = vperm.slane %v3799, %v4723
    %v5656 = vsel %vm4725, %v5655, %v5654
    %v5657 = vperm.slane %v3800, %v4727
    %v5658 = vsel %vm4729, %v5657, %v5656
    %v5659 = vperm.slane %v3801, %v4731
    %v5660 = vsel %vm4733, %v5659, %v5658
    %v5661 = vperm.slane %v3802, %v4735
    %v5662 = vsel %vm4737, %v5661, %v5660
    %v5663 = vperm.slane %v3803, %v4739
    %v5664 = vsel %vm4741, %v5663, %v5662
    %v5665 = vperm.slane %v3804, %v4743
    %v5666 = vsel %vm4745, %v5665, %v5664
    %v5667 = vperm.slane %v3805, %v4747
    %v5668 = vsel %vm4749, %v5667, %v5666
    %v5669 = vperm.slane %v3806, %v4751
    %v5670 = vsel %vm4753, %v5669, %v5668
    %v5671 = vperm.slane %v3807, %v4755
    %v5672 = vsel %vm4757, %v5671, %v5670
    %v5673 = vperm.slane %v3808, %v4759
    %v5674 = vsel %vm4761, %v5673, %v5672
    %v5675 = vperm.slane %v3809, %v4763
    %v5676 = vsel %vm4765, %v5675, %v5674
    %v5677 = vperm.slane %v3810, %v4767
    %v5678 = vsel %vm4769, %v5677, %v5676
    %v5679 = vperm.slane %v3811, %v4771
    %v5680 = vsel %vm4773, %v5679, %v5678
    %v5681 = vperm.slane %v3812, %v4713
    %v5682 = vperm.slane %v3813, %v4715
    %v5683 = vsel %vm4717, %v5682, %v5681
    %v5684 = vperm.slane %v3814, %v4719
    %v5685 = vsel %vm4721, %v5684, %v5683
    %v5686 = vperm.slane %v3815, %v4723
    %v5687 = vsel %vm4725, %v5686, %v5685
    %v5688 = vperm.slane %v3816, %v4727
    %v5689 = vsel %vm4729, %v5688, %v5687
    %v5690 = vperm.slane %v3817, %v4731
    %v5691 = vsel %vm4733, %v5690, %v5689
    %v5692 = vperm.slane %v3818, %v4735
    %v5693 = vsel %vm4737, %v5692, %v5691
    %v5694 = vperm.slane %v3819, %v4739
    %v5695 = vsel %vm4741, %v5694, %v5693
    %v5696 = vperm.slane %v3820, %v4743
    %v5697 = vsel %vm4745, %v5696, %v5695
    %v5698 = vperm.slane %v3821, %v4747
    %v5699 = vsel %vm4749, %v5698, %v5697
    %v5700 = vperm.slane %v3822, %v4751
    %v5701 = vsel %vm4753, %v5700, %v5699
    %v5702 = vperm.slane %v3823, %v4755
    %v5703 = vsel %vm4757, %v5702, %v5701
    %v5704 = vperm.slane %v3824, %v4759
    %v5705 = vsel %vm4761, %v5704, %v5703
    %v5706 = vperm.slane %v3825, %v4763
    %v5707 = vsel %vm4765, %v5706, %v5705
    %v5708 = vperm.slane %v3826, %v4767
    %v5709 = vsel %vm4769, %v5708, %v5707
    %v5710 = vperm.slane %v3827, %v4771
    %v5711 = vsel %vm4773, %v5710, %v5709
    %v5712 = vperm.slane %v3828, %v4713
    %v5713 = vperm.slane %v3829, %v4715
    %v5714 = vsel %vm4717, %v5713, %v5712
    %v5715 = vperm.slane %v3830, %v4719
    %v5716 = vsel %vm4721, %v5715, %v5714
    %v5717 = vperm.slane %v3831, %v4723
    %v5718 = vsel %vm4725, %v5717, %v5716
    %v5719 = vperm.slane %v3832, %v4727
    %v5720 = vsel %vm4729, %v5719, %v5718
    %v5721 = vperm.slane %v3833, %v4731
    %v5722 = vsel %vm4733, %v5721, %v5720
    %v5723 = vperm.slane %v3834, %v4735
    %v5724 = vsel %vm4737, %v5723, %v5722
    %v5725 = vperm.slane %v3835, %v4739
    %v5726 = vsel %vm4741, %v5725, %v5724
    %v5727 = vperm.slane %v3836, %v4743
    %v5728 = vsel %vm4745, %v5727, %v5726
    %v5729 = vperm.slane %v3837, %v4747
    %v5730 = vsel %vm4749, %v5729, %v5728
    %v5731 = vperm.slane %v3838, %v4751
    %v5732 = vsel %vm4753, %v5731, %v5730
    %v5733 = vperm.slane %v3839, %v4755
    %v5734 = vsel %vm4757, %v5733, %v5732
    %v5735 = vperm.slane %v3840, %v4759
    %v5736 = vsel %vm4761, %v5735, %v5734
    %v5737 = vperm.slane %v3841, %v4763
    %v5738 = vsel %vm4765, %v5737, %v5736
    %v5739 = vperm.slane %v3842, %v4767
    %v5740 = vsel %vm4769, %v5739, %v5738
    %v5741 = vperm.slane %v3843, %v4771
    %v5742 = vsel %vm4773, %v5741, %v5740
    %v5743 = vperm.slane %v3844, %v4713
    %v5744 = vperm.slane %v3845, %v4715
    %v5745 = vsel %vm4717, %v5744, %v5743
    %v5746 = vperm.slane %v3846, %v4719
    %v5747 = vsel %vm4721, %v5746, %v5745
    %v5748 = vperm.slane %v3847, %v4723
    %v5749 = vsel %vm4725, %v5748, %v5747
    %v5750 = vperm.slane %v3848, %v4727
    %v5751 = vsel %vm4729, %v5750, %v5749
    %v5752 = vperm.slane %v3849, %v4731
    %v5753 = vsel %vm4733, %v5752, %v5751
    %v5754 = vperm.slane %v3850, %v4735
    %v5755 = vsel %vm4737, %v5754, %v5753
    %v5756 = vperm.slane %v3851, %v4739
    %v5757 = vsel %vm4741, %v5756, %v5755
    %v5758 = vperm.slane %v3852, %v4743
    %v5759 = vsel %vm4745, %v5758, %v5757
    %v5760 = vperm.slane %v3853, %v4747
    %v5761 = vsel %vm4749, %v5760, %v5759
    %v5762 = vperm.slane %v3854, %v4751
    %v5763 = vsel %vm4753, %v5762, %v5761
    %v5764 = vperm.slane %v3855, %v4755
    %v5765 = vsel %vm4757, %v5764, %v5763
    %v5766 = vperm.slane %v3856, %v4759
    %v5767 = vsel %vm4761, %v5766, %v5765
    %v5768 = vperm.slane %v3857, %v4763
    %v5769 = vsel %vm4765, %v5768, %v5767
    %v5770 = vperm.slane %v3858, %v4767
    %v5771 = vsel %vm4769, %v5770, %v5769
    %v5772 = vperm.slane %v3859, %v4771
    %v5773 = vsel %vm4773, %v5772, %v5771
    %v5774 = vperm.slane %v3860, %v4713
    %v5775 = vperm.slane %v3861, %v4715
    %v5776 = vsel %vm4717, %v5775, %v5774
    %v5777 = vperm.slane %v3862, %v4719
    %v5778 = vsel %vm4721, %v5777, %v5776
    %v5779 = vperm.slane %v3863, %v4723
    %v5780 = vsel %vm4725, %v5779, %v5778
    %v5781 = vperm.slane %v3864, %v4727
    %v5782 = vsel %vm4729, %v5781, %v5780
    %v5783 = vperm.slane %v3865, %v4731
    %v5784 = vsel %vm4733, %v5783, %v5782
    %v5785 = vperm.slane %v3866, %v4735
    %v5786 = vsel %vm4737, %v5785, %v5784
    %v5787 = vperm.slane %v3867, %v4739
    %v5788 = vsel %vm4741, %v5787, %v5786
    %v5789 = vperm.slane %v3868, %v4743
    %v5790 = vsel %vm4745, %v5789, %v5788
    %v5791 = vperm.slane %v3869, %v4747
    %v5792 = vsel %vm4749, %v5791, %v5790
    %v5793 = vperm.slane %v3870, %v4751
    %v5794 = vsel %vm4753, %v5793, %v5792
    %v5795 = vperm.slane %v3871, %v4755
    %v5796 = vsel %vm4757, %v5795, %v5794
    %v5797 = vperm.slane %v3872, %v4759
    %v5798 = vsel %vm4761, %v5797, %v5796
    %v5799 = vperm.slane %v3873, %v4763
    %v5800 = vsel %vm4765, %v5799, %v5798
    %v5801 = vperm.slane %v3874, %v4767
    %v5802 = vsel %vm4769, %v5801, %v5800
    %v5803 = vperm.slane %v3875, %v4771
    %v5804 = vsel %vm4773, %v5803, %v5802
    %v5805 = vperm.slane %v3876, %v4713
    %v5806 = vperm.slane %v3877, %v4715
    %v5807 = vsel %vm4717, %v5806, %v5805
    %v5808 = vperm.slane %v3878, %v4719
    %v5809 = vsel %vm4721, %v5808, %v5807
    %v5810 = vperm.slane %v3879, %v4723
    %v5811 = vsel %vm4725, %v5810, %v5809
    %vm5812 = vcmask 1041409
    %v5813 = vsel %vm5812, %v5308, %v4774
    %v5814 = vsel %vm5812, %v5339, %v4805
    %v5815 = vsel %vm5812, %v5370, %v4836
    %v5816 = vsel %vm5812, %v5401, %v4867
    %v5817 = vsel %vm5812, %v5432, %v4898
    %v5818 = vsel %vm5812, %v5463, %v4929
    %v5819 = vsel %vm5812, %v5494, %v4960
    %v5820 = vsel %vm5812, %v5525, %v4991
    %v5821 = vsel %vm5812, %v5556, %v5022
    %v5822 = vsel %vm5812, %v5587, %v5053
    %v5823 = vsel %vm5812, %v5618, %v5084
    %v5824 = vsel %vm5812, %v5649, %v5115
    %v5825 = vsel %vm5812, %v5680, %v5146
    %v5826 = vsel %vm5812, %v5711, %v5177
    %v5827 = vsel %vm5812, %v5742, %v5208
    %v5828 = vsel %vm5812, %v5773, %v5239
    %v5829 = vsel %vm5812, %v5804, %v5270
    %v5830 = vsel %vm5812, %v5811, %v5277
    %vm5848 = vcmask 261120
    %v5849 = vsel %vm5848, %v5830, 0
    %5851 = vmatpush.msra.mxu0 %v3895
    %5852 = vmatpush.msra.mxu0 %v3894
    %5853 = vmatpush.msra.mxu0 %v3893
    %5854 = vmatpush.msra.mxu0 %v3892
    %5855 = vmatpush.msra.mxu0 %v3891
    %5856 = vmatpush.msra.mxu0 %v3890
    %5857 = vmatpush.msra.mxu0 %v3889
    %5858 = vmatpush.msra.mxu0 %v3888
    %5859 = vmatpush.msra.mxu0 %v3887
    %5860 = vmatpush.msra.mxu0 %v3886
    %5861 = vmatpush.msra.mxu0 %v3885
    %5862 = vmatpush.msra.mxu0 %v3884
    %5863 = vmatpush.msra.mxu0 %v3883
    %5864 = vmatpush.msra.mxu0 %v3882
    %5865 = vmatpush.msra.mxu0 %v3881
    %5866 = vmatpush.msra.mxu0 %v3880
    %5867 = vmatmul.f32.gmra.mxu0 %v5813
    %v5868 = vpop.f32.mrf.mxu0
    %v5869 = vadd.f32 %v4158, %v5868
    %5870 = vdwg.mxu0
    %5871 = vmatpush.msra.mxu0 %v3911
    %5872 = vmatpush.msra.mxu0 %v3910
    %5873 = vmatpush.msra.mxu0 %v3909
    %5874 = vmatpush.msra.mxu0 %v3908
    %5875 = vmatpush.msra.mxu0 %v3907
    %5876 = vmatpush.msra.mxu0 %v3906
    %5877 = vmatpush.msra.mxu0 %v3905
    %5878 = vmatpush.msra.mxu0 %v3904
    %5879 = vmatpush.msra.mxu0 %v3903
    %5880 = vmatpush.msra.mxu0 %v3902
    %5881 = vmatpush.msra.mxu0 %v3901
    %5882 = vmatpush.msra.mxu0 %v3900
    %5883 = vmatpush.msra.mxu0 %v3899
    %5884 = vmatpush.msra.mxu0 %v3898
    %5885 = vmatpush.msra.mxu0 %v3897
    %5886 = vmatpush.msra.mxu0 %v3896
    %5887 = vmatmul.f32.gmra.mxu0 %v5814
    %v5888 = vpop.f32.mrf.mxu0
    %v5889 = vadd.f32 %v5869, %v5888
    %5890 = vdwg.mxu0
    %5891 = vmatpush.msra.mxu0 %v3927
    %5892 = vmatpush.msra.mxu0 %v3926
    %5893 = vmatpush.msra.mxu0 %v3925
    %5894 = vmatpush.msra.mxu0 %v3924
    %5895 = vmatpush.msra.mxu0 %v3923
    %5896 = vmatpush.msra.mxu0 %v3922
    %5897 = vmatpush.msra.mxu0 %v3921
    %5898 = vmatpush.msra.mxu0 %v3920
    %5899 = vmatpush.msra.mxu0 %v3919
    %5900 = vmatpush.msra.mxu0 %v3918
    %5901 = vmatpush.msra.mxu0 %v3917
    %5902 = vmatpush.msra.mxu0 %v3916
    %5903 = vmatpush.msra.mxu0 %v3915
    %5904 = vmatpush.msra.mxu0 %v3914
    %5905 = vmatpush.msra.mxu0 %v3913
    %5906 = vmatpush.msra.mxu0 %v3912
    %5907 = vmatmul.f32.gmra.mxu0 %v5815
    %v5908 = vpop.f32.mrf.mxu0
    %v5909 = vadd.f32 %v5889, %v5908
    %5910 = vdwg.mxu0
    %5911 = vmatpush.msra.mxu0 %v3943
    %5912 = vmatpush.msra.mxu0 %v3942
    %5913 = vmatpush.msra.mxu0 %v3941
    %5914 = vmatpush.msra.mxu0 %v3940
    %5915 = vmatpush.msra.mxu0 %v3939
    %5916 = vmatpush.msra.mxu0 %v3938
    %5917 = vmatpush.msra.mxu0 %v3937
    %5918 = vmatpush.msra.mxu0 %v3936
    %5919 = vmatpush.msra.mxu0 %v3935
    %5920 = vmatpush.msra.mxu0 %v3934
    %5921 = vmatpush.msra.mxu0 %v3933
    %5922 = vmatpush.msra.mxu0 %v3932
    %5923 = vmatpush.msra.mxu0 %v3931
    %5924 = vmatpush.msra.mxu0 %v3930
    %5925 = vmatpush.msra.mxu0 %v3929
    %5926 = vmatpush.msra.mxu0 %v3928
    %5927 = vmatmul.f32.gmra.mxu0 %v5816
    %v5928 = vpop.f32.mrf.mxu0
    %v5929 = vadd.f32 %v5909, %v5928
    %5930 = vdwg.mxu0
    %5931 = vmatpush.msra.mxu0 %v3959
    %5932 = vmatpush.msra.mxu0 %v3958
    %5933 = vmatpush.msra.mxu0 %v3957
    %5934 = vmatpush.msra.mxu0 %v3956
    %5935 = vmatpush.msra.mxu0 %v3955
    %5936 = vmatpush.msra.mxu0 %v3954
    %5937 = vmatpush.msra.mxu0 %v3953
    %5938 = vmatpush.msra.mxu0 %v3952
    %5939 = vmatpush.msra.mxu0 %v3951
    %5940 = vmatpush.msra.mxu0 %v3950
    %5941 = vmatpush.msra.mxu0 %v3949
    %5942 = vmatpush.msra.mxu0 %v3948
    %5943 = vmatpush.msra.mxu0 %v3947
    %5944 = vmatpush.msra.mxu0 %v3946
    %5945 = vmatpush.msra.mxu0 %v3945
    %5946 = vmatpush.msra.mxu0 %v3944
    %5947 = vmatmul.f32.gmra.mxu0 %v5817
    %v5948 = vpop.f32.mrf.mxu0
    %v5949 = vadd.f32 %v5929, %v5948
    %5950 = vdwg.mxu0
    %5951 = vmatpush.msra.mxu0 %v3975
    %5952 = vmatpush.msra.mxu0 %v3974
    %5953 = vmatpush.msra.mxu0 %v3973
    %5954 = vmatpush.msra.mxu0 %v3972
    %5955 = vmatpush.msra.mxu0 %v3971
    %5956 = vmatpush.msra.mxu0 %v3970
    %5957 = vmatpush.msra.mxu0 %v3969
    %5958 = vmatpush.msra.mxu0 %v3968
    %5959 = vmatpush.msra.mxu0 %v3967
    %5960 = vmatpush.msra.mxu0 %v3966
    %5961 = vmatpush.msra.mxu0 %v3965
    %5962 = vmatpush.msra.mxu0 %v3964
    %5963 = vmatpush.msra.mxu0 %v3963
    %5964 = vmatpush.msra.mxu0 %v3962
    %5965 = vmatpush.msra.mxu0 %v3961
    %5966 = vmatpush.msra.mxu0 %v3960
    %5967 = vmatmul.f32.gmra.mxu0 %v5818
    %v5968 = vpop.f32.mrf.mxu0
    %v5969 = vadd.f32 %v5949, %v5968
    %5970 = vdwg.mxu0
    %5971 = vmatpush.msra.mxu0 %v3991
    %5972 = vmatpush.msra.mxu0 %v3990
    %5973 = vmatpush.msra.mxu0 %v3989
    %5974 = vmatpush.msra.mxu0 %v3988
    %5975 = vmatpush.msra.mxu0 %v3987
    %5976 = vmatpush.msra.mxu0 %v3986
    %5977 = vmatpush.msra.mxu0 %v3985
    %5978 = vmatpush.msra.mxu0 %v3984
    %5979 = vmatpush.msra.mxu0 %v3983
    %5980 = vmatpush.msra.mxu0 %v3982
    %5981 = vmatpush.msra.mxu0 %v3981
    %5982 = vmatpush.msra.mxu0 %v3980
    %5983 = vmatpush.msra.mxu0 %v3979
    %5984 = vmatpush.msra.mxu0 %v3978
    %5985 = vmatpush.msra.mxu0 %v3977
    %5986 = vmatpush.msra.mxu0 %v3976
    %5987 = vmatmul.f32.gmra.mxu0 %v5819
    %v5988 = vpop.f32.mrf.mxu0
    %v5989 = vadd.f32 %v5969, %v5988
    %5990 = vdwg.mxu0
    %5991 = vmatpush.msra.mxu0 %v4007
    %5992 = vmatpush.msra.mxu0 %v4006
    %5993 = vmatpush.msra.mxu0 %v4005
    %5994 = vmatpush.msra.mxu0 %v4004
    %5995 = vmatpush.msra.mxu0 %v4003
    %5996 = vmatpush.msra.mxu0 %v4002
    %5997 = vmatpush.msra.mxu0 %v4001
    %5998 = vmatpush.msra.mxu0 %v4000
    %5999 = vmatpush.msra.mxu0 %v3999
    %6000 = vmatpush.msra.mxu0 %v3998
    %6001 = vmatpush.msra.mxu0 %v3997
    %6002 = vmatpush.msra.mxu0 %v3996
    %6003 = vmatpush.msra.mxu0 %v3995
    %6004 = vmatpush.msra.mxu0 %v3994
    %6005 = vmatpush.msra.mxu0 %v3993
    %6006 = vmatpush.msra.mxu0 %v3992
    %6007 = vmatmul.f32.gmra.mxu0 %v5820
    %v6008 = vpop.f32.mrf.mxu0
    %v6009 = vadd.f32 %v5989, %v6008
    %6010 = vdwg.mxu0
    %6011 = vmatpush.msra.mxu0 %v4023
    %6012 = vmatpush.msra.mxu0 %v4022
    %6013 = vmatpush.msra.mxu0 %v4021
    %6014 = vmatpush.msra.mxu0 %v4020
    %6015 = vmatpush.msra.mxu0 %v4019
    %6016 = vmatpush.msra.mxu0 %v4018
    %6017 = vmatpush.msra.mxu0 %v4017
    %6018 = vmatpush.msra.mxu0 %v4016
    %6019 = vmatpush.msra.mxu0 %v4015
    %6020 = vmatpush.msra.mxu0 %v4014
    %6021 = vmatpush.msra.mxu0 %v4013
    %6022 = vmatpush.msra.mxu0 %v4012
    %6023 = vmatpush.msra.mxu0 %v4011
    %6024 = vmatpush.msra.mxu0 %v4010
    %6025 = vmatpush.msra.mxu0 %v4009
    %6026 = vmatpush.msra.mxu0 %v4008
    %6027 = vmatmul.f32.gmra.mxu0 %v5821
    %v6028 = vpop.f32.mrf.mxu0
    %v6029 = vadd.f32 %v6009, %v6028
    %6030 = vdwg.mxu0
    %6031 = vmatpush.msra.mxu0 %v4039
    %6032 = vmatpush.msra.mxu0 %v4038
    %6033 = vmatpush.msra.mxu0 %v4037
    %6034 = vmatpush.msra.mxu0 %v4036
    %6035 = vmatpush.msra.mxu0 %v4035
    %6036 = vmatpush.msra.mxu0 %v4034
    %6037 = vmatpush.msra.mxu0 %v4033
    %6038 = vmatpush.msra.mxu0 %v4032
    %6039 = vmatpush.msra.mxu0 %v4031
    %6040 = vmatpush.msra.mxu0 %v4030
    %6041 = vmatpush.msra.mxu0 %v4029
    %6042 = vmatpush.msra.mxu0 %v4028
    %6043 = vmatpush.msra.mxu0 %v4027
    %6044 = vmatpush.msra.mxu0 %v4026
    %6045 = vmatpush.msra.mxu0 %v4025
    %6046 = vmatpush.msra.mxu0 %v4024
    %6047 = vmatmul.f32.gmra.mxu0 %v5822
    %v6048 = vpop.f32.mrf.mxu0
    %v6049 = vadd.f32 %v6029, %v6048
    %6050 = vdwg.mxu0
    %6051 = vmatpush.msra.mxu0 %v4055
    %6052 = vmatpush.msra.mxu0 %v4054
    %6053 = vmatpush.msra.mxu0 %v4053
    %6054 = vmatpush.msra.mxu0 %v4052
    %6055 = vmatpush.msra.mxu0 %v4051
    %6056 = vmatpush.msra.mxu0 %v4050
    %6057 = vmatpush.msra.mxu0 %v4049
    %6058 = vmatpush.msra.mxu0 %v4048
    %6059 = vmatpush.msra.mxu0 %v4047
    %6060 = vmatpush.msra.mxu0 %v4046
    %6061 = vmatpush.msra.mxu0 %v4045
    %6062 = vmatpush.msra.mxu0 %v4044
    %6063 = vmatpush.msra.mxu0 %v4043
    %6064 = vmatpush.msra.mxu0 %v4042
    %6065 = vmatpush.msra.mxu0 %v4041
    %6066 = vmatpush.msra.mxu0 %v4040
    %6067 = vmatmul.f32.gmra.mxu0 %v5823
    %v6068 = vpop.f32.mrf.mxu0
    %v6069 = vadd.f32 %v6049, %v6068
    %6070 = vdwg.mxu0
    %6071 = vmatpush.msra.mxu0 %v4071
    %6072 = vmatpush.msra.mxu0 %v4070
    %6073 = vmatpush.msra.mxu0 %v4069
    %6074 = vmatpush.msra.mxu0 %v4068
    %6075 = vmatpush.msra.mxu0 %v4067
    %6076 = vmatpush.msra.mxu0 %v4066
    %6077 = vmatpush.msra.mxu0 %v4065
    %6078 = vmatpush.msra.mxu0 %v4064
    %6079 = vmatpush.msra.mxu0 %v4063
    %6080 = vmatpush.msra.mxu0 %v4062
    %6081 = vmatpush.msra.mxu0 %v4061
    %6082 = vmatpush.msra.mxu0 %v4060
    %6083 = vmatpush.msra.mxu0 %v4059
    %6084 = vmatpush.msra.mxu0 %v4058
    %6085 = vmatpush.msra.mxu0 %v4057
    %6086 = vmatpush.msra.mxu0 %v4056
    %6087 = vmatmul.f32.gmra.mxu0 %v5824
    %v6088 = vpop.f32.mrf.mxu0
    %v6089 = vadd.f32 %v6069, %v6088
    %6090 = vdwg.mxu0
    %6091 = vmatpush.msra.mxu0 %v4087
    %6092 = vmatpush.msra.mxu0 %v4086
    %6093 = vmatpush.msra.mxu0 %v4085
    %6094 = vmatpush.msra.mxu0 %v4084
    %6095 = vmatpush.msra.mxu0 %v4083
    %6096 = vmatpush.msra.mxu0 %v4082
    %6097 = vmatpush.msra.mxu0 %v4081
    %6098 = vmatpush.msra.mxu0 %v4080
    %6099 = vmatpush.msra.mxu0 %v4079
    %6100 = vmatpush.msra.mxu0 %v4078
    %6101 = vmatpush.msra.mxu0 %v4077
    %6102 = vmatpush.msra.mxu0 %v4076
    %6103 = vmatpush.msra.mxu0 %v4075
    %6104 = vmatpush.msra.mxu0 %v4074
    %6105 = vmatpush.msra.mxu0 %v4073
    %6106 = vmatpush.msra.mxu0 %v4072
    %6107 = vmatmul.f32.gmra.mxu0 %v5825
    %v6108 = vpop.f32.mrf.mxu0
    %v6109 = vadd.f32 %v6089, %v6108
    %6110 = vdwg.mxu0
    %6111 = vmatpush.msra.mxu0 %v4103
    %6112 = vmatpush.msra.mxu0 %v4102
    %6113 = vmatpush.msra.mxu0 %v4101
    %6114 = vmatpush.msra.mxu0 %v4100
    %6115 = vmatpush.msra.mxu0 %v4099
    %6116 = vmatpush.msra.mxu0 %v4098
    %6117 = vmatpush.msra.mxu0 %v4097
    %6118 = vmatpush.msra.mxu0 %v4096
    %6119 = vmatpush.msra.mxu0 %v4095
    %6120 = vmatpush.msra.mxu0 %v4094
    %6121 = vmatpush.msra.mxu0 %v4093
    %6122 = vmatpush.msra.mxu0 %v4092
    %6123 = vmatpush.msra.mxu0 %v4091
    %6124 = vmatpush.msra.mxu0 %v4090
    %6125 = vmatpush.msra.mxu0 %v4089
    %6126 = vmatpush.msra.mxu0 %v4088
    %6127 = vmatmul.f32.gmra.mxu0 %v5826
    %v6128 = vpop.f32.mrf.mxu0
    %v6129 = vadd.f32 %v6109, %v6128
    %6130 = vdwg.mxu0
    %6131 = vmatpush.msra.mxu0 %v4119
    %6132 = vmatpush.msra.mxu0 %v4118
    %6133 = vmatpush.msra.mxu0 %v4117
    %6134 = vmatpush.msra.mxu0 %v4116
    %6135 = vmatpush.msra.mxu0 %v4115
    %6136 = vmatpush.msra.mxu0 %v4114
    %6137 = vmatpush.msra.mxu0 %v4113
    %6138 = vmatpush.msra.mxu0 %v4112
    %6139 = vmatpush.msra.mxu0 %v4111
    %6140 = vmatpush.msra.mxu0 %v4110
    %6141 = vmatpush.msra.mxu0 %v4109
    %6142 = vmatpush.msra.mxu0 %v4108
    %6143 = vmatpush.msra.mxu0 %v4107
    %6144 = vmatpush.msra.mxu0 %v4106
    %6145 = vmatpush.msra.mxu0 %v4105
    %6146 = vmatpush.msra.mxu0 %v4104
    %6147 = vmatmul.f32.gmra.mxu0 %v5827
    %v6148 = vpop.f32.mrf.mxu0
    %v6149 = vadd.f32 %v6129, %v6148
    %6150 = vdwg.mxu0
    %6151 = vmatpush.msra.mxu0 %v4135
    %6152 = vmatpush.msra.mxu0 %v4134
    %6153 = vmatpush.msra.mxu0 %v4133
    %6154 = vmatpush.msra.mxu0 %v4132
    %6155 = vmatpush.msra.mxu0 %v4131
    %6156 = vmatpush.msra.mxu0 %v4130
    %6157 = vmatpush.msra.mxu0 %v4129
    %6158 = vmatpush.msra.mxu0 %v4128
    %6159 = vmatpush.msra.mxu0 %v4127
    %6160 = vmatpush.msra.mxu0 %v4126
    %6161 = vmatpush.msra.mxu0 %v4125
    %6162 = vmatpush.msra.mxu0 %v4124
    %6163 = vmatpush.msra.mxu0 %v4123
    %6164 = vmatpush.msra.mxu0 %v4122
    %6165 = vmatpush.msra.mxu0 %v4121
    %6166 = vmatpush.msra.mxu0 %v4120
    %6167 = vmatmul.f32.gmra.mxu0 %v5828
    %v6168 = vpop.f32.mrf.mxu0
    %v6169 = vadd.f32 %v6149, %v6168
    %6170 = vdwg.mxu0
    %6171 = vmatpush.msra.mxu0 %v4151
    %6172 = vmatpush.msra.mxu0 %v4150
    %6173 = vmatpush.msra.mxu0 %v4149
    %6174 = vmatpush.msra.mxu0 %v4148
    %6175 = vmatpush.msra.mxu0 %v4147
    %6176 = vmatpush.msra.mxu0 %v4146
    %6177 = vmatpush.msra.mxu0 %v4145
    %6178 = vmatpush.msra.mxu0 %v4144
    %6179 = vmatpush.msra.mxu0 %v4143
    %6180 = vmatpush.msra.mxu0 %v4142
    %6181 = vmatpush.msra.mxu0 %v4141
    %6182 = vmatpush.msra.mxu0 %v4140
    %6183 = vmatpush.msra.mxu0 %v4139
    %6184 = vmatpush.msra.mxu0 %v4138
    %6185 = vmatpush.msra.mxu0 %v4137
    %6186 = vmatpush.msra.mxu0 %v4136
    %6187 = vmatmul.f32.gmra.mxu0 %v5829
    %v6188 = vpop.f32.mrf.mxu0
    %v6189 = vadd.f32 %v6169, %v6188
    %6190 = vdwg.mxu0
    %6191 = vmatpush.msra.mxu0 0.0
    %6192 = vmatpush.msra.mxu0 0.0
    %6193 = vmatpush.msra.mxu0 0.0
    %6194 = vmatpush.msra.mxu0 0.0
    %6195 = vmatpush.msra.mxu0 0.0
    %6196 = vmatpush.msra.mxu0 0.0
    %6197 = vmatpush.msra.mxu0 0.0
    %6198 = vmatpush.msra.mxu0 0.0
    %6199 = vmatpush.msra.mxu0 0.0
    %6200 = vmatpush.msra.mxu0 0.0
    %6201 = vmatpush.msra.mxu0 0.0
    %6202 = vmatpush.msra.mxu0 0.0
    %6203 = vmatpush.msra.mxu0 %v4155
    %6204 = vmatpush.msra.mxu0 %v4154
    %6205 = vmatpush.msra.mxu0 %v4153
    %6206 = vmatpush.msra.mxu0 %v4152
    %6207 = vmatmul.f32.gmra.mxu0 %v5849
    %v6208 = vpop.f32.mrf.mxu0
    %v6209 = vadd.f32 %v6189, %v6208
    %6210 = vdwg.mxu0
    %6211 = vst [vmem:[#allocation2] sm:$0x3] %v6209
    // Predicated region
    $region14: #{tpu_custom_call.1} parent=1 // pred_check
      _
    $region15: #{tpu_custom_call.1} parent=1 // pred_check_branch
      %6213 = sbr.rel (0) target = $region17
    $region16: #{tpu_custom_call.1} parent=1 // pred_region
      %6215 = vsyncadd [#allocation3], 0
      %s6217 = sshll.u32 [#allocation2], 4
      %s6218 = int_to_ptr.vmem [resolvable:$true] %s6217
      %s6219 = sshll.u32 %s3, 4
      %s6220 = int_to_ptr.hbm [resolvable:$true] %s6219
      %6222 = dma.vmem_to_hbm [thread:$0]  %s6218, 32, %s6220, [#allocation3]
    $region17: #{tpu_custom_call.1} parent=1 // pred_fallthru
      _
    // Predicated region
    $region18: #{tpu_custom_call.1} parent=1 // pred_check
      _
    $region19: #{tpu_custom_call.1} parent=1 // pred_check_branch
      %6224 = sbr.rel (0) target = $region21
    $region20: #{tpu_custom_call.1} parent=1 // pred_region
      %6226 = dma.done [#allocation3], 32
    $region21: #{tpu_custom_call.1} parent=1 // pred_fallthru
      _
    %6227 = vsyncpa [#allocation3], 1

</llo_original>
